<compile_context>
chip_gen: v6e
topology: v6e:2x2x1
jax: 0.10.0
libtpu: 0.0.40
codegen_flags: <defaults>
</compile_context>

<pallas_src>
import functools

import jax
import jax.numpy as jnp
from jax.experimental import pallas as pl
from jax.experimental.pallas import tpu as pltpu


def _round_up(x, m):
    return ((x + m - 1) // m) * m


_VMEM_LIMIT = 48 * 1024 * 1024  # safe on v5e/v6e (128 MiB) and v7x (64 MiB)


# ----------------------------------------------------------------------------
# Kernel 1: fused pointwise 2-layer MLP + grouped max-pool
#   grid = (group_tiles, g); group axis is the trailing "arbitrary" reduction,
#   pooled result accumulated (max) in a fp32 VMEM scratch and stored once.
# ----------------------------------------------------------------------------
def _fused_mlp_pool_kernel(x_ref, w1_ref, b1_ref, w2_ref, b2_ref, o_ref, acc_ref):
    j = pl.program_id(1)

    x = x_ref[0]  # (tg, cin_p) bf16
    h = jnp.dot(x, w1_ref[...], preferred_element_type=jnp.float32)
    h = jnp.maximum(h + b1_ref[...], 0.0).astype(jnp.bfloat16)
    y = jnp.dot(h, w2_ref[...], preferred_element_type=jnp.float32)
    y = jnp.maximum(y + b2_ref[...], 0.0)  # (tg, cout_p) fp32

    @pl.when(j == 0)
    def _():
        acc_ref[...] = y

    @pl.when(j > 0)
    def _():
        acc_ref[...] = jnp.maximum(acc_ref[...], y)

    @pl.when(j == pl.num_programs(1) - 1)
    def _():
        o_ref[...] = acc_ref[...].astype(o_ref.dtype)


def _choose_row_tile(ngroups, target_rows):
    tg = min(_round_up(ngroups, 8), max(8, (target_rows // 8) * 8))
    ng_pad = _round_up(ngroups, tg)
    return tg, ng_pad


def fused_pointwise_mlp_groupmax(xg, w1, b1, w2, b2, *, target_rows=1024):
    """xg: (g, ngroups, cin) features, grouped with the within-group offset as
    the leading axis.  Returns max over the group axis of relu-MLP(features):
    (ngroups, cout_p) in bfloat16."""
    g, ngroups, cin = xg.shape
    cin_p, hid_p = w1.shape
    cout_p = w2.shape[1]

    xg = xg.astype(jnp.bfloat16)
    if cin_p > cin:
        xg = jnp.pad(xg, ((0, 0), (0, 0), (0, cin_p - cin)))

    # Row tile: multiple of 8 (sublane), capped so activations + fp32
    # accumulator + resident weights fit comfortably in scoped VMEM on v7x.
    tg, ng_pad = _choose_row_tile(ngroups, target_rows)
    if ng_pad > ngroups:
        xg = jnp.pad(xg, ((0, 0), (0, ng_pad - ngroups), (0, 0)))

    grid = (ng_pad // tg, g)
    flops = 2 * g * ng_pad * (cin_p * hid_p + hid_p * cout_p)
    bytes_accessed = (g * ng_pad * cin_p + cin_p * hid_p + hid_p * cout_p) * 2 \
        + (hid_p + cout_p) * 4 + ng_pad * cout_p * 2

    out = pl.pallas_call(
        _fused_mlp_pool_kernel,
        out_shape=jax.ShapeDtypeStruct((ng_pad, cout_p), jnp.bfloat16),
        grid_spec=pltpu.PrefetchScalarGridSpec(
            num_scalar_prefetch=0,
            grid=grid,
            in_specs=[
                pl.BlockSpec((1, tg, cin_p), lambda i, j: (j, i, 0)),
                pl.BlockSpec((cin_p, hid_p), lambda i, j: (0, 0)),
                pl.BlockSpec((1, hid_p), lambda i, j: (0, 0)),
                pl.BlockSpec((hid_p, cout_p), lambda i, j: (0, 0)),
                pl.BlockSpec((1, cout_p), lambda i, j: (0, 0)),
            ],
            out_specs=pl.BlockSpec((tg, cout_p), lambda i, j: (i, 0)),
            scratch_shapes=[pltpu.VMEM((tg, cout_p), jnp.float32)],
        ),
        compiler_params=pltpu.CompilerParams(
            dimension_semantics=("parallel", "arbitrary"),
            vmem_limit_bytes=_VMEM_LIMIT,
        ),
        cost_estimate=pl.CostEstimate(
            flops=int(flops), transcendentals=0, bytes_accessed=int(bytes_accessed)),
    )(xg, w1, b1, w2, b2)
    return out[:ngroups]


# ----------------------------------------------------------------------------
# Kernel 2: fused classifier head
#   fc1 -> bn1(eval) -> relu -> fc2 -> bn2(eval) -> relu -> fc3 -> log_softmax
#   (dropout layers are identity in eval mode)
# ----------------------------------------------------------------------------
def _head_kernel(x_ref, w1_ref, b1_ref, s1_ref, t1_ref,
                 w2_ref, b2_ref, s2_ref, t2_ref,
                 w3_ref, b3_ref, o_ref):
    h = jnp.dot(x_ref[...], w1_ref[...], preferred_element_type=jnp.float32) + b1_ref[...]
    h = jnp.maximum(h * s1_ref[...] + t1_ref[...], 0.0).astype(jnp.bfloat16)   # bn1 + relu
    h = jnp.dot(h, w2_ref[...], preferred_element_type=jnp.float32) + b2_ref[...]
    h = jnp.maximum(h * s2_ref[...] + t2_ref[...], 0.0).astype(jnp.bfloat16)   # bn2 + relu
    logits = jnp.dot(h, w3_ref[...], preferred_element_type=jnp.float32) + b3_ref[...]
    mx = jnp.max(logits, axis=-1, keepdims=True)
    lse = jnp.log(jnp.sum(jnp.exp(logits - mx), axis=-1, keepdims=True)) + mx
    o_ref[...] = logits - lse                                                  # log_softmax


def classifier_head(x, w1, b1, s1, t1, w2, b2, s2, t2, w3, b3, num_class):
    B, d_in = x.shape
    d1, d2 = w1.shape[1], w2.shape[1]
    nc_p = _round_up(num_class, 128)

    # Lane-dense logits slab: pad columns of fc3 with zeros and give the padded
    # columns a very negative bias so they vanish under log_softmax (exact for
    # the real columns); slice back outside the kernel.
    w3p = jnp.zeros((d2, nc_p), jnp.float32).at[:, :num_class].set(w3).astype(jnp.bfloat16)
    b3p = jnp.full((1, nc_p), -1e9, jnp.float32).at[:, :num_class].set(b3)

    x = x.astype(jnp.bfloat16)
    tb = 256 if B >= 256 else _round_up(B, 8)
    B_pad = _round_up(B, tb)
    if B_pad > B:
        x = jnp.pad(x, ((0, B_pad - B), (0, 0)))

    w1b, w2b = w1.astype(jnp.bfloat16), w2.astype(jnp.bfloat16)

    full = lambda *shape: pl.BlockSpec(shape, lambda i: (0,) * len(shape))
    flops = 2 * B_pad * (d_in * d1 + d1 * d2 + d2 * nc_p)
    bytes_accessed = (B_pad * (d_in + 2 * nc_p)
                      + d_in * d1 + d1 * d2 + d2 * nc_p) * 2 + (d1 + d2) * 16

    out = pl.pallas_call(
        _head_kernel,
        out_shape=jax.ShapeDtypeStruct((B_pad, nc_p), jnp.float32),
        grid_spec=pltpu.PrefetchScalarGridSpec(
            num_scalar_prefetch=0,
            grid=(B_pad // tb,),
            in_specs=[
                pl.BlockSpec((tb, d_in), lambda i: (i, 0)),
                full(d_in, d1), full(1, d1), full(1, d1), full(1, d1),
                full(d1, d2), full(1, d2), full(1, d2), full(1, d2),
                full(d2, nc_p), full(1, nc_p),
            ],
            out_specs=pl.BlockSpec((tb, nc_p), lambda i: (i, 0)),
        ),
        compiler_params=pltpu.CompilerParams(
            dimension_semantics=("parallel",),
            vmem_limit_bytes=_VMEM_LIMIT,
        ),
        cost_estimate=pl.CostEstimate(
            flops=int(flops), transcendentals=int(B_pad * (nc_p + 1)),
            bytes_accessed=int(bytes_accessed)),
    )(x, w1b, b1, s1, t1, w2b, b2, s2, t2, w3p, b3p)
    return out[:B, :num_class]


# ----------------------------------------------------------------------------
# FPAC layer stand-in (glue around the fused Pallas kernel)
# ----------------------------------------------------------------------------
def _prep_fpac_params(w1, b1, w2, b2):
    cin, hid = w1.shape
    cout = w2.shape[1]
    cin_p = _round_up(max(cin, 8), 8)      # avoid K=3 matmul: pad channels
    hid_p = _round_up(hid, 128)            # MXU-width-friendly hidden dim
    cout_p = _round_up(cout, 128)
    w1p = jnp.zeros((cin_p, hid_p), jnp.float32).at[:cin, :hid].set(w1).astype(jnp.bfloat16)
    b1p = jnp.zeros((1, hid_p), jnp.float32).at[:, :hid].set(b1)
    w2p = jnp.zeros((hid_p, cout_p), jnp.float32).at[:hid, :cout].set(w2).astype(jnp.bfloat16)
    b2p = jnp.zeros((1, cout_p), jnp.float32).at[:, :cout].set(b2)
    return w1p, b1p, w2p, b2p, cout


def fpac_layer(xyz, feats, params, npoint):
    # TODO(synk): true FPAC (farthest-point sampling, ball-query grouping, the
    # frame-point weight-net m1) is not defined in the reference snippet; this
    # shape-faithful stand-in uses a fused pointwise MLP + grouped max pool and
    # strided point sub-sampling in place of FPS.
    B, N, cin = feats.shape
    w1p, b1p, w2p, b2p, cout = _prep_fpac_params(*params)

    if npoint is None:
        # One group per batch element: pool over all N points.
        g, np_out = N, 1
        xg = jnp.transpose(feats, (1, 0, 2))                       # (g, B, cin)
        s = jnp.mean(xyz, axis=1, keepdims=True)                   # (B, 1, 3)
    else:
        g, np_out = N // npoint, npoint
        xg = feats.reshape(B, npoint, g, cin)
        xg = jnp.transpose(xg, (2, 0, 1, 3)).reshape(g, B * npoint, cin)
        s = xyz[:, ::g, :]                                         # (B, npoint, 3)

    pooled = fused_pointwise_mlp_groupmax(xg, w1p, b1p, w2p, b2p)  # (ngroups, cout_p) bf16
    f = pooled[:, :cout].reshape(B, np_out, cout)
    return f, s


# ----------------------------------------------------------------------------
# Parameter construction (deterministic, synthetic)
# ----------------------------------------------------------------------------
def init_params(num_class):
    key = jax.random.PRNGKey(42)
    ks = iter(jax.random.split(key, 32))

    def lin(cin, cout, scale=0.05):
        w = scale * jax.random.normal(next(ks), (cin, cout), jnp.float32)
        b = jnp.zeros((1, cout), jnp.float32)
        return w, b

    params = {}
    # FPAC m2 widths from the module: [1,32,128], [1,64,256], [1,128,1024]
    for name, cin, hid, cout in [("fpac1", 3, 32, 128),
                                 ("fpac2", 128, 64, 256),
                                 ("fpac3", 256, 128, 1024)]:
        w1, b1 = lin(cin, hid)
        w2, b2 = lin(hid, cout)
        params[name] = (w1, b1, w2, b2)

    # Classifier head: fc1(1024,512)+bn1, fc2(512,256)+bn2, fc3(256,num_class)
    eps = 1e-5
    for name, cin, cout, has_bn in [("fc1", 1024, 512, True),
                                    ("fc2", 512, 256, True),
                                    ("fc3", 256, num_class, False)]:
        w, b = lin(cin, cout)
        entry = {"w": w, "b": b}
        if has_bn:
            gamma = jnp.ones((1, cout), jnp.float32)
            beta = jnp.zeros((1, cout), jnp.float32)
            mean = jnp.zeros((1, cout), jnp.float32)
            var = jnp.ones((1, cout), jnp.float32)
            scale = gamma / jnp.sqrt(var + eps)        # eval-mode BN folded
            bias = beta - mean * scale
            entry["bn_scale"], entry["bn_bias"] = scale, bias
        params[name] = entry
    return params


# ----------------------------------------------------------------------------
# Full forward pass (mirrors get_model.forward, eval mode)
# ----------------------------------------------------------------------------
@functools.partial(jax.jit, static_argnums=(2, 3))
def get_model_forward(xyz_in, params, npoint1, npoint2):
    B = xyz_in.shape[0]
    norm = xyz_in[:, 3:, :]                 # normal_channel=True
    xyz = xyz_in[:, :3, :]
    xyz = jnp.transpose(xyz, (0, 2, 1))     # (B, N, 3)
    norm = jnp.transpose(norm, (0, 2, 1))   # (B, N, 3)

    f1, s1 = fpac_layer(xyz, norm, params["fpac1"], npoint=npoint1)
    f2, s2 = fpac_layer(s1, f1, params["fpac2"], npoint=npoint2)
    f3, s3 = fpac_layer(s2, f2, params["fpac3"], npoint=None)

    x = f3.reshape(B, 1024)
    p1, p2, p3 = params["fc1"], params["fc2"], params["fc3"]
    logp = classifier_head(
        x,
        p1["w"], p1["b"], p1["bn_scale"], p1["bn_bias"],
        p2["w"], p2["b"], p2["bn_scale"], p2["bn_bias"],
        p3["w"], p3["b"],
        num_class=p3["w"].shape[1],
    )
    return logp, s3


if __name__ == "__main__":
    num_class = 10
    B, N = 2, 64               # small demo shapes; input is (B, 6, N) like PyTorch
    npoint1, npoint2 = 16, 8   # scaled-down analogues of npoint=512 / 128

    key = jax.random.PRNGKey(0)
    xyz_in = jax.random.normal(key, (B, 6, N), jnp.float32)

    params = init_params(num_class)

    logp, s3 = get_model_forward(xyz_in, params, npoint1, npoint2)
    jax.block_until_ready(logp)
    jax.block_until_ready(s3)

    assert logp.shape == (B, num_class)
    assert s3.shape == (B, 1, 3)
    # log_softmax rows should sum (in prob space) to ~1
    assert jnp.allclose(jnp.sum(jnp.exp(logp), axis=-1), 1.0, atol=1e-4)
    print("KERNEL_OK")
</pallas_src>

<mosaic_0001>
module attributes {stable_mosaic.version = 11 : i64} {
  func.func @_fused_mlp_pool_kernel(%arg0: i32, %arg1: i32, %arg2: memref<1x32x8xbf16, #tpu.memory_space<vmem>>, %arg3: memref<8x128xbf16, #tpu.memory_space<vmem>>, %arg4: memref<1x128xf32, #tpu.memory_space<vmem>>, %arg5: memref<128x128xbf16, #tpu.memory_space<vmem>>, %arg6: memref<1x128xf32, #tpu.memory_space<vmem>>, %arg7: memref<32x128xbf16, #tpu.memory_space<vmem>>, %arg8: memref<32x128xf32, #tpu.memory_space<vmem>>) attributes {dimension_semantics = [#tpu.dimension_semantics<parallel>, #tpu.dimension_semantics<arbitrary>], iteration_bounds = array<i64: 1, 4>, scalar_prefetch = 0 : i64, scratch_operands = 1 : i64, tpu.core_type = #tpu.core_type<tc>, window_params = [{transform_indices = @transform_0, window_bounds = array<i64: 1, 32, 8>}, {pipeline_mode = #tpu.pipeline_mode<synchronous>, transform_indices = @transform_1, window_bounds = array<i64: 8, 128>}, {pipeline_mode = #tpu.pipeline_mode<synchronous>, transform_indices = @transform_2, window_bounds = array<i64: 1, 128>}, {pipeline_mode = #tpu.pipeline_mode<synchronous>, transform_indices = @transform_3, window_bounds = array<i64: 128, 128>}, {pipeline_mode = #tpu.pipeline_mode<synchronous>, transform_indices = @transform_4, window_bounds = array<i64: 1, 128>}, {transform_indices = @transform_5, window_bounds = array<i64: 32, 128>}]} {
    %c0 = arith.constant 0 : index
    %c0_0 = arith.constant 0 : index
    %c0_1 = arith.constant 0 : index
    %0 = vector.load %arg2[%c0, %c0_0, %c0_1] : memref<1x32x8xbf16, #tpu.memory_space<vmem>>, vector<1x32x8xbf16>
    %1 = vector.shape_cast %0 : vector<1x32x8xbf16> to vector<32x8xbf16>
    %c0_2 = arith.constant 0 : index
    %c0_3 = arith.constant 0 : index
    %2 = vector.load %arg3[%c0_2, %c0_3] : memref<8x128xbf16, #tpu.memory_space<vmem>>, vector<8x128xbf16>
    %cst = arith.constant dense<0.000000e+00> : vector<32x128xf32>
    %3 = tpu.matmul %1, %2, %cst {dimension_numbers = #tpu.dot_dimension_numbers<[1], [0], [0], [1], [0, 0, 1, 1], [], []>} : vector<32x8xbf16>, vector<8x128xbf16>, vector<32x128xf32> -> vector<32x128xf32>
    %c0_4 = arith.constant 0 : index
    %c0_5 = arith.constant 0 : index
    %4 = vector.load %arg4[%c0_4, %c0_5] : memref<1x128xf32, #tpu.memory_space<vmem>>, vector<1x128xf32>
    %5 = vector.broadcast %4 : vector<1x128xf32> to vector<32x128xf32>
    %6 = arith.addf %3, %5 : vector<32x128xf32>
    %cst_6 = arith.constant 0.000000e+00 : f32
    %7 = vector.broadcast %cst_6 : f32 to vector<32x128xf32>
    %8 = arith.maximumf %6, %7 : vector<32x128xf32>
    %9 = arith.truncf %8 : vector<32x128xf32> to vector<32x128xbf16>
    %c0_7 = arith.constant 0 : index
    %c0_8 = arith.constant 0 : index
    %10 = vector.load %arg5[%c0_7, %c0_8] : memref<128x128xbf16, #tpu.memory_space<vmem>>, vector<128x128xbf16>
    %cst_9 = arith.constant dense<0.000000e+00> : vector<32x128xf32>
    %11 = tpu.matmul %9, %10, %cst_9 {dimension_numbers = #tpu.dot_dimension_numbers<[1], [0], [0], [1], [0, 0, 1, 1], [], []>} : vector<32x128xbf16>, vector<128x128xbf16>, vector<32x128xf32> -> vector<32x128xf32>
    %c0_10 = arith.constant 0 : index
    %c0_11 = arith.constant 0 : index
    %12 = vector.load %arg6[%c0_10, %c0_11] : memref<1x128xf32, #tpu.memory_space<vmem>>, vector<1x128xf32>
    %13 = vector.broadcast %12 : vector<1x128xf32> to vector<32x128xf32>
    %14 = arith.addf %11, %13 : vector<32x128xf32>
    %cst_12 = arith.constant 0.000000e+00 : f32
    %15 = vector.broadcast %cst_12 : f32 to vector<32x128xf32>
    %16 = arith.maximumf %14, %15 : vector<32x128xf32>
    %c0_i32 = arith.constant 0 : i32
    %17 = arith.cmpi eq, %arg1, %c0_i32 : i32
    %18 = arith.extui %17 : i1 to i32
    %c0_i32_13 = arith.constant 0 : i32
    %19 = arith.cmpi ne, %18, %c0_i32_13 : i32
    scf.if %19 {
      %c0_17 = arith.constant 0 : index
      %c0_18 = arith.constant 0 : index
      %26 = vector.load %arg8[%c0_17, %c0_18] : memref<32x128xf32, #tpu.memory_space<vmem>>, vector<32x128xf32>
      tpu.vector_store %arg8[%c0_17, %c0_18], %16 {strides = array<i32>} : memref<32x128xf32, #tpu.memory_space<vmem>>, vector<32x128xf32>,
    } else {
    }
    %c0_i32_14 = arith.constant 0 : i32
    %20 = arith.cmpi sgt, %arg1, %c0_i32_14 : i32
    %21 = arith.extui %20 : i1 to i32
    %c0_i32_15 = arith.constant 0 : i32
    %22 = arith.cmpi ne, %21, %c0_i32_15 : i32
    scf.if %22 {
      %c0_17 = arith.constant 0 : index
      %c0_18 = arith.constant 0 : index
      %26 = vector.load %arg8[%c0_17, %c0_18] : memref<32x128xf32, #tpu.memory_space<vmem>>, vector<32x128xf32>
      %27 = arith.maximumf %26, %16 : vector<32x128xf32>
      %c0_19 = arith.constant 0 : index
      %c0_20 = arith.constant 0 : index
      %28 = vector.load %arg8[%c0_19, %c0_20] : memref<32x128xf32, #tpu.memory_space<vmem>>, vector<32x128xf32>
      tpu.vector_store %arg8[%c0_19, %c0_20], %27 {strides = array<i32>} : memref<32x128xf32, #tpu.memory_space<vmem>>, vector<32x128xf32>,
    } else {
    }
    %c3_i32 = arith.constant 3 : i32
    %23 = arith.cmpi eq, %arg1, %c3_i32 : i32
    %24 = arith.extui %23 : i1 to i32
    %c0_i32_16 = arith.constant 0 : i32
    %25 = arith.cmpi ne, %24, %c0_i32_16 : i32
    scf.if %25 {
      %c0_17 = arith.constant 0 : index
      %c0_18 = arith.constant 0 : index
      %26 = vector.load %arg8[%c0_17, %c0_18] : memref<32x128xf32, #tpu.memory_space<vmem>>, vector<32x128xf32>
      %27 = arith.truncf %26 : vector<32x128xf32> to vector<32x128xbf16>
      %c0_19 = arith.constant 0 : index
      %c0_20 = arith.constant 0 : index
      %28 = vector.load %arg7[%c0_19, %c0_20] : memref<32x128xbf16, #tpu.memory_space<vmem>>, vector<32x128xbf16>
      tpu.vector_store %arg7[%c0_19, %c0_20], %27 {strides = array<i32>} : memref<32x128xbf16, #tpu.memory_space<vmem>>, vector<32x128xbf16>,
    } else {
    }
    return
  }
  func.func @transform_0(%arg0: i32, %arg1: i32) -> (i32, i32, i32) {
    %c0_i32 = arith.constant 0 : i32
    %c0_i32_0 = arith.constant 0 : i32
    return %arg1, %arg0, %c0_i32 : i32, i32, i32
  }
  func.func @transform_1(%arg0: i32, %arg1: i32) -> (i32, i32) {
    %c0_i32 = arith.constant 0 : i32
    %c0_i32_0 = arith.constant 0 : i32
    %c0_i32_1 = arith.constant 0 : i32
    return %c0_i32, %c0_i32_0 : i32, i32
  }
  func.func @transform_2(%arg0: i32, %arg1: i32) -> (i32, i32) {
    %c0_i32 = arith.constant 0 : i32
    %c0_i32_0 = arith.constant 0 : i32
    %c0_i32_1 = arith.constant 0 : i32
    return %c0_i32, %c0_i32_0 : i32, i32
  }
  func.func @transform_3(%arg0: i32, %arg1: i32) -> (i32, i32) {
    %c0_i32 = arith.constant 0 : i32
    %c0_i32_0 = arith.constant 0 : i32
    %c0_i32_1 = arith.constant 0 : i32
    return %c0_i32, %c0_i32_0 : i32, i32
  }
  func.func @transform_4(%arg0: i32, %arg1: i32) -> (i32, i32) {
    %c0_i32 = arith.constant 0 : i32
    %c0_i32_0 = arith.constant 0 : i32
    %c0_i32_1 = arith.constant 0 : i32
    return %c0_i32, %c0_i32_0 : i32, i32
  }
  func.func @transform_5(%arg0: i32, %arg1: i32) -> (i32, i32) {
    %c0_i32 = arith.constant 0 : i32
    %c0_i32_0 = arith.constant 0 : i32
    return %arg0, %c0_i32 : i32, i32
  }
}

module attributes {stable_mosaic.version = 11 : i64} {
  func.func @_fused_mlp_pool_kernel(%arg0: i32, %arg1: i32, %arg2: memref<1x16x128xbf16, #tpu.memory_space<vmem>>, %arg3: memref<128x128xbf16, #tpu.memory_space<vmem>>, %arg4: memref<1x128xf32, #tpu.memory_space<vmem>>, %arg5: memref<128x256xbf16, #tpu.memory_space<vmem>>, %arg6: memref<1x256xf32, #tpu.memory_space<vmem>>, %arg7: memref<16x256xbf16, #tpu.memory_space<vmem>>, %arg8: memref<16x256xf32, #tpu.memory_space<vmem>>) attributes {dimension_semantics = [#tpu.dimension_semantics<parallel>, #tpu.dimension_semantics<arbitrary>], iteration_bounds = array<i64: 1, 2>, scalar_prefetch = 0 : i64, scratch_operands = 1 : i64, tpu.core_type = #tpu.core_type<tc>, window_params = [{transform_indices = @transform_0, window_bounds = array<i64: 1, 16, 128>}, {pipeline_mode = #tpu.pipeline_mode<synchronous>, transform_indices = @transform_1, window_bounds = array<i64: 128, 128>}, {pipeline_mode = #tpu.pipeline_mode<synchronous>, transform_indices = @transform_2, window_bounds = array<i64: 1, 128>}, {pipeline_mode = #tpu.pipeline_mode<synchronous>, transform_indices = @transform_3, window_bounds = array<i64: 128, 256>}, {pipeline_mode = #tpu.pipeline_mode<synchronous>, transform_indices = @transform_4, window_bounds = array<i64: 1, 256>}, {transform_indices = @transform_5, window_bounds = array<i64: 16, 256>}]} {
    %c0 = arith.constant 0 : index
    %c0_0 = arith.constant 0 : index
    %c0_1 = arith.constant 0 : index
    %0 = vector.load %arg2[%c0, %c0_0, %c0_1] : memref<1x16x128xbf16, #tpu.memory_space<vmem>>, vector<1x16x128xbf16>
    %1 = vector.shape_cast %0 : vector<1x16x128xbf16> to vector<16x128xbf16>
    %c0_2 = arith.constant 0 : index
    %c0_3 = arith.constant 0 : index
    %2 = vector.load %arg3[%c0_2, %c0_3] : memref<128x128xbf16, #tpu.memory_space<vmem>>, vector<128x128xbf16>
    %cst = arith.constant dense<0.000000e+00> : vector<16x128xf32>
    %3 = tpu.matmul %1, %2, %cst {dimension_numbers = #tpu.dot_dimension_numbers<[1], [0], [0], [1], [0, 0, 1, 1], [], []>} : vector<16x128xbf16>, vector<128x128xbf16>, vector<16x128xf32> -> vector<16x128xf32>
    %c0_4 = arith.constant 0 : index
    %c0_5 = arith.constant 0 : index
    %4 = vector.load %arg4[%c0_4, %c0_5] : memref<1x128xf32, #tpu.memory_space<vmem>>, vector<1x128xf32>
    %5 = vector.broadcast %4 : vector<1x128xf32> to vector<16x128xf32>
    %6 = arith.addf %3, %5 : vector<16x128xf32>
    %cst_6 = arith.constant 0.000000e+00 : f32
    %7 = vector.broadcast %cst_6 : f32 to vector<16x128xf32>
    %8 = arith.maximumf %6, %7 : vector<16x128xf32>
    %9 = arith.truncf %8 : vector<16x128xf32> to vector<16x128xbf16>
    %c0_7 = arith.constant 0 : index
    %c0_8 = arith.constant 0 : index
    %10 = vector.load %arg5[%c0_7, %c0_8] : memref<128x256xbf16, #tpu.memory_space<vmem>>, vector<128x256xbf16>
    %cst_9 = arith.constant dense<0.000000e+00> : vector<16x256xf32>
    %11 = tpu.matmul %9, %10, %cst_9 {dimension_numbers = #tpu.dot_dimension_numbers<[1], [0], [0], [1], [0, 0, 1, 1], [], []>} : vector<16x128xbf16>, vector<128x256xbf16>, vector<16x256xf32> -> vector<16x256xf32>
    %c0_10 = arith.constant 0 : index
    %c0_11 = arith.constant 0 : index
    %12 = vector.load %arg6[%c0_10, %c0_11] : memref<1x256xf32, #tpu.memory_space<vmem>>, vector<1x256xf32>
    %13 = vector.broadcast %12 : vector<1x256xf32> to vector<16x256xf32>
    %14 = arith.addf %11, %13 : vector<16x256xf32>
    %cst_12 = arith.constant 0.000000e+00 : f32
    %15 = vector.broadcast %cst_12 : f32 to vector<16x256xf32>
    %16 = arith.maximumf %14, %15 : vector<16x256xf32>
    %c0_i32 = arith.constant 0 : i32
    %17 = arith.cmpi eq, %arg1, %c0_i32 : i32
    %18 = arith.extui %17 : i1 to i32
    %c0_i32_13 = arith.constant 0 : i32
    %19 = arith.cmpi ne, %18, %c0_i32_13 : i32
    scf.if %19 {
      %c0_17 = arith.constant 0 : index
      %c0_18 = arith.constant 0 : index
      %26 = vector.load %arg8[%c0_17, %c0_18] : memref<16x256xf32, #tpu.memory_space<vmem>>, vector<16x256xf32>
      tpu.vector_store %arg8[%c0_17, %c0_18], %16 {strides = array<i32>} : memref<16x256xf32, #tpu.memory_space<vmem>>, vector<16x256xf32>,
    } else {
    }
    %c0_i32_14 = arith.constant 0 : i32
    %20 = arith.cmpi sgt, %arg1, %c0_i32_14 : i32
    %21 = arith.extui %20 : i1 to i32
    %c0_i32_15 = arith.constant 0 : i32
    %22 = arith.cmpi ne, %21, %c0_i32_15 : i32
    scf.if %22 {
      %c0_17 = arith.constant 0 : index
      %c0_18 = arith.constant 0 : index
      %26 = vector.load %arg8[%c0_17, %c0_18] : memref<16x256xf32, #tpu.memory_space<vmem>>, vector<16x256xf32>
      %27 = arith.maximumf %26, %16 : vector<16x256xf32>
      %c0_19 = arith.constant 0 : index
      %c0_20 = arith.constant 0 : index
      %28 = vector.load %arg8[%c0_19, %c0_20] : memref<16x256xf32, #tpu.memory_space<vmem>>, vector<16x256xf32>
      tpu.vector_store %arg8[%c0_19, %c0_20], %27 {strides = array<i32>} : memref<16x256xf32, #tpu.memory_space<vmem>>, vector<16x256xf32>,
    } else {
    }
    %c1_i32 = arith.constant 1 : i32
    %23 = arith.cmpi eq, %arg1, %c1_i32 : i32
    %24 = arith.extui %23 : i1 to i32
    %c0_i32_16 = arith.constant 0 : i32
    %25 = arith.cmpi ne, %24, %c0_i32_16 : i32
    scf.if %25 {
      %c0_17 = arith.constant 0 : index
      %c0_18 = arith.constant 0 : index
      %26 = vector.load %arg8[%c0_17, %c0_18] : memref<16x256xf32, #tpu.memory_space<vmem>>, vector<16x256xf32>
      %27 = arith.truncf %26 : vector<16x256xf32> to vector<16x256xbf16>
      %c0_19 = arith.constant 0 : index
      %c0_20 = arith.constant 0 : index
      %28 = vector.load %arg7[%c0_19, %c0_20] : memref<16x256xbf16, #tpu.memory_space<vmem>>, vector<16x256xbf16>
      tpu.vector_store %arg7[%c0_19, %c0_20], %27 {strides = array<i32>} : memref<16x256xbf16, #tpu.memory_space<vmem>>, vector<16x256xbf16>,
    } else {
    }
    return
  }
  func.func @transform_0(%arg0: i32, %arg1: i32) -> (i32, i32, i32) {
    %c0_i32 = arith.constant 0 : i32
    %c0_i32_0 = arith.constant 0 : i32
    return %arg1, %arg0, %c0_i32 : i32, i32, i32
  }
  func.func @transform_1(%arg0: i32, %arg1: i32) -> (i32, i32) {
    %c0_i32 = arith.constant 0 : i32
    %c0_i32_0 = arith.constant 0 : i32
    %c0_i32_1 = arith.constant 0 : i32
    return %c0_i32, %c0_i32_0 : i32, i32
  }
  func.func @transform_2(%arg0: i32, %arg1: i32) -> (i32, i32) {
    %c0_i32 = arith.constant 0 : i32
    %c0_i32_0 = arith.constant 0 : i32
    %c0_i32_1 = arith.constant 0 : i32
    return %c0_i32, %c0_i32_0 : i32, i32
  }
  func.func @transform_3(%arg0: i32, %arg1: i32) -> (i32, i32) {
    %c0_i32 = arith.constant 0 : i32
    %c0_i32_0 = arith.constant 0 : i32
    %c0_i32_1 = arith.constant 0 : i32
    return %c0_i32, %c0_i32_0 : i32, i32
  }
  func.func @transform_4(%arg0: i32, %arg1: i32) -> (i32, i32) {
    %c0_i32 = arith.constant 0 : i32
    %c0_i32_0 = arith.constant 0 : i32
    %c0_i32_1 = arith.constant 0 : i32
    return %c0_i32, %c0_i32_0 : i32, i32
  }
  func.func @transform_5(%arg0: i32, %arg1: i32) -> (i32, i32) {
    %c0_i32 = arith.constant 0 : i32
    %c0_i32_0 = arith.constant 0 : i32
    return %arg0, %c0_i32 : i32, i32
  }
}

module attributes {stable_mosaic.version = 11 : i64} {
  func.func @_fused_mlp_pool_kernel(%arg0: i32, %arg1: i32, %arg2: memref<1x8x256xbf16, #tpu.memory_space<vmem>>, %arg3: memref<256x128xbf16, #tpu.memory_space<vmem>>, %arg4: memref<1x128xf32, #tpu.memory_space<vmem>>, %arg5: memref<128x1024xbf16, #tpu.memory_space<vmem>>, %arg6: memref<1x1024xf32, #tpu.memory_space<vmem>>, %arg7: memref<8x1024xbf16, #tpu.memory_space<vmem>>, %arg8: memref<8x1024xf32, #tpu.memory_space<vmem>>) attributes {dimension_semantics = [#tpu.dimension_semantics<parallel>, #tpu.dimension_semantics<arbitrary>], iteration_bounds = array<i64: 1, 8>, scalar_prefetch = 0 : i64, scratch_operands = 1 : i64, tpu.core_type = #tpu.core_type<tc>, window_params = [{transform_indices = @transform_0, window_bounds = array<i64: 1, 8, 256>}, {pipeline_mode = #tpu.pipeline_mode<synchronous>, transform_indices = @transform_1, window_bounds = array<i64: 256, 128>}, {pipeline_mode = #tpu.pipeline_mode<synchronous>, transform_indices = @transform_2, window_bounds = array<i64: 1, 128>}, {pipeline_mode = #tpu.pipeline_mode<synchronous>, transform_indices = @transform_3, window_bounds = array<i64: 128, 1024>}, {pipeline_mode = #tpu.pipeline_mode<synchronous>, transform_indices = @transform_4, window_bounds = array<i64: 1, 1024>}, {transform_indices = @transform_5, window_bounds = array<i64: 8, 1024>}]} {
    %c0 = arith.constant 0 : index
    %c0_0 = arith.constant 0 : index
    %c0_1 = arith.constant 0 : index
    %0 = vector.load %arg2[%c0, %c0_0, %c0_1] : memref<1x8x256xbf16, #tpu.memory_space<vmem>>, vector<1x8x256xbf16>
    %1 = vector.shape_cast %0 : vector<1x8x256xbf16> to vector<8x256xbf16>
    %c0_2 = arith.constant 0 : index
    %c0_3 = arith.constant 0 : index
    %2 = vector.load %arg3[%c0_2, %c0_3] : memref<256x128xbf16, #tpu.memory_space<vmem>>, vector<256x128xbf16>
    %cst = arith.constant dense<0.000000e+00> : vector<8x128xf32>
    %3 = tpu.matmul %1, %2, %cst {dimension_numbers = #tpu.dot_dimension_numbers<[1], [0], [0], [1], [0, 0, 1, 1], [], []>} : vector<8x256xbf16>, vector<256x128xbf16>, vector<8x128xf32> -> vector<8x128xf32>
    %c0_4 = arith.constant 0 : index
    %c0_5 = arith.constant 0 : index
    %4 = vector.load %arg4[%c0_4, %c0_5] : memref<1x128xf32, #tpu.memory_space<vmem>>, vector<1x128xf32>
    %5 = vector.broadcast %4 : vector<1x128xf32> to vector<8x128xf32>
    %6 = arith.addf %3, %5 : vector<8x128xf32>
    %cst_6 = arith.constant 0.000000e+00 : f32
    %7 = vector.broadcast %cst_6 : f32 to vector<8x128xf32>
    %8 = arith.maximumf %6, %7 : vector<8x128xf32>
    %9 = arith.truncf %8 : vector<8x128xf32> to vector<8x128xbf16>
    %c0_7 = arith.constant 0 : index
    %c0_8 = arith.constant 0 : index
    %10 = vector.load %arg5[%c0_7, %c0_8] : memref<128x1024xbf16, #tpu.memory_space<vmem>>, vector<128x1024xbf16>
    %cst_9 = arith.constant dense<0.000000e+00> : vector<8x1024xf32>
    %11 = tpu.matmul %9, %10, %cst_9 {dimension_numbers = #tpu.dot_dimension_numbers<[1], [0], [0], [1], [0, 0, 1, 1], [], []>} : vector<8x128xbf16>, vector<128x1024xbf16>, vector<8x1024xf32> -> vector<8x1024xf32>
    %c0_10 = arith.constant 0 : index
    %c0_11 = arith.constant 0 : index
    %12 = vector.load %arg6[%c0_10, %c0_11] : memref<1x1024xf32, #tpu.memory_space<vmem>>, vector<1x1024xf32>
    %13 = vector.broadcast %12 : vector<1x1024xf32> to vector<8x1024xf32>
    %14 = arith.addf %11, %13 : vector<8x1024xf32>
    %cst_12 = arith.constant 0.000000e+00 : f32
    %15 = vector.broadcast %cst_12 : f32 to vector<8x1024xf32>
    %16 = arith.maximumf %14, %15 : vector<8x1024xf32>
    %c0_i32 = arith.constant 0 : i32
    %17 = arith.cmpi eq, %arg1, %c0_i32 : i32
    %18 = arith.extui %17 : i1 to i32
    %c0_i32_13 = arith.constant 0 : i32
    %19 = arith.cmpi ne, %18, %c0_i32_13 : i32
    scf.if %19 {
      %c0_17 = arith.constant 0 : index
      %c0_18 = arith.constant 0 : index
      %26 = vector.load %arg8[%c0_17, %c0_18] : memref<8x1024xf32, #tpu.memory_space<vmem>>, vector<8x1024xf32>
      tpu.vector_store %arg8[%c0_17, %c0_18], %16 {strides = array<i32>} : memref<8x1024xf32, #tpu.memory_space<vmem>>, vector<8x1024xf32>,
    } else {
    }
    %c0_i32_14 = arith.constant 0 : i32
    %20 = arith.cmpi sgt, %arg1, %c0_i32_14 : i32
    %21 = arith.extui %20 : i1 to i32
    %c0_i32_15 = arith.constant 0 : i32
    %22 = arith.cmpi ne, %21, %c0_i32_15 : i32
    scf.if %22 {
      %c0_17 = arith.constant 0 : index
      %c0_18 = arith.constant 0 : index
      %26 = vector.load %arg8[%c0_17, %c0_18] : memref<8x1024xf32, #tpu.memory_space<vmem>>, vector<8x1024xf32>
      %27 = arith.maximumf %26, %16 : vector<8x1024xf32>
      %c0_19 = arith.constant 0 : index
      %c0_20 = arith.constant 0 : index
      %28 = vector.load %arg8[%c0_19, %c0_20] : memref<8x1024xf32, #tpu.memory_space<vmem>>, vector<8x1024xf32>
      tpu.vector_store %arg8[%c0_19, %c0_20], %27 {strides = array<i32>} : memref<8x1024xf32, #tpu.memory_space<vmem>>, vector<8x1024xf32>,
    } else {
    }
    %c7_i32 = arith.constant 7 : i32
    %23 = arith.cmpi eq, %arg1, %c7_i32 : i32
    %24 = arith.extui %23 : i1 to i32
    %c0_i32_16 = arith.constant 0 : i32
    %25 = arith.cmpi ne, %24, %c0_i32_16 : i32
    scf.if %25 {
      %c0_17 = arith.constant 0 : index
      %c0_18 = arith.constant 0 : index
      %26 = vector.load %arg8[%c0_17, %c0_18] : memref<8x1024xf32, #tpu.memory_space<vmem>>, vector<8x1024xf32>
      %27 = arith.truncf %26 : vector<8x1024xf32> to vector<8x1024xbf16>
      %c0_19 = arith.constant 0 : index
      %c0_20 = arith.constant 0 : index
      %28 = vector.load %arg7[%c0_19, %c0_20] : memref<8x1024xbf16, #tpu.memory_space<vmem>>, vector<8x1024xbf16>
      tpu.vector_store %arg7[%c0_19, %c0_20], %27 {strides = array<i32>} : memref<8x1024xbf16, #tpu.memory_space<vmem>>, vector<8x1024xbf16>,
    } else {
    }
    return
  }
  func.func @transform_0(%arg0: i32, %arg1: i32) -> (i32, i32, i32) {
    %c0_i32 = arith.constant 0 : i32
    %c0_i32_0 = arith.constant 0 : i32
    return %arg1, %arg0, %c0_i32 : i32, i32, i32
  }
  func.func @transform_1(%arg0: i32, %arg1: i32) -> (i32, i32) {
    %c0_i32 = arith.constant 0 : i32
    %c0_i32_0 = arith.constant 0 : i32
    %c0_i32_1 = arith.constant 0 : i32
    return %c0_i32, %c0_i32_0 : i32, i32
  }
  func.func @transform_2(%arg0: i32, %arg1: i32) -> (i32, i32) {
    %c0_i32 = arith.constant 0 : i32
    %c0_i32_0 = arith.constant 0 : i32
    %c0_i32_1 = arith.constant 0 : i32
    return %c0_i32, %c0_i32_0 : i32, i32
  }
  func.func @transform_3(%arg0: i32, %arg1: i32) -> (i32, i32) {
    %c0_i32 = arith.constant 0 : i32
    %c0_i32_0 = arith.constant 0 : i32
    %c0_i32_1 = arith.constant 0 : i32
    return %c0_i32, %c0_i32_0 : i32, i32
  }
  func.func @transform_4(%arg0: i32, %arg1: i32) -> (i32, i32) {
    %c0_i32 = arith.constant 0 : i32
    %c0_i32_0 = arith.constant 0 : i32
    %c0_i32_1 = arith.constant 0 : i32
    return %c0_i32, %c0_i32_0 : i32, i32
  }
  func.func @transform_5(%arg0: i32, %arg1: i32) -> (i32, i32) {
    %c0_i32 = arith.constant 0 : i32
    %c0_i32_0 = arith.constant 0 : i32
    return %arg0, %c0_i32 : i32, i32
  }
}

module attributes {stable_mosaic.version = 11 : i64} {
  func.func @_head_kernel(%arg0: i32, %arg1: memref<8x1024xbf16, #tpu.memory_space<vmem>>, %arg2: memref<1024x512xbf16, #tpu.memory_space<vmem>>, %arg3: memref<1x512xf32, #tpu.memory_space<vmem>>, %arg4: memref<1x512xf32, #tpu.memory_space<vmem>>, %arg5: memref<1x512xf32, #tpu.memory_space<vmem>>, %arg6: memref<512x256xbf16, #tpu.memory_space<vmem>>, %arg7: memref<1x256xf32, #tpu.memory_space<vmem>>, %arg8: memref<1x256xf32, #tpu.memory_space<vmem>>, %arg9: memref<1x256xf32, #tpu.memory_space<vmem>>, %arg10: memref<256x128xbf16, #tpu.memory_space<vmem>>, %arg11: memref<1x128xf32, #tpu.memory_space<vmem>>, %arg12: memref<8x128xf32, #tpu.memory_space<vmem>>) attributes {dimension_semantics = [#tpu.dimension_semantics<parallel>], iteration_bounds = array<i64: 1>, scalar_prefetch = 0 : i64, scratch_operands = 0 : i64, tpu.core_type = #tpu.core_type<tc>, window_params = [{transform_indices = @transform_0, window_bounds = array<i64: 8, 1024>}, {pipeline_mode = #tpu.pipeline_mode<synchronous>, transform_indices = @transform_1, window_bounds = array<i64: 1024, 512>}, {pipeline_mode = #tpu.pipeline_mode<synchronous>, transform_indices = @transform_2, window_bounds = array<i64: 1, 512>}, {pipeline_mode = #tpu.pipeline_mode<synchronous>, transform_indices = @transform_3, window_bounds = array<i64: 1, 512>}, {pipeline_mode = #tpu.pipeline_mode<synchronous>, transform_indices = @transform_4, window_bounds = array<i64: 1, 512>}, {pipeline_mode = #tpu.pipeline_mode<synchronous>, transform_indices = @transform_5, window_bounds = array<i64: 512, 256>}, {pipeline_mode = #tpu.pipeline_mode<synchronous>, transform_indices = @transform_6, window_bounds = array<i64: 1, 256>}, {pipeline_mode = #tpu.pipeline_mode<synchronous>, transform_indices = @transform_7, window_bounds = array<i64: 1, 256>}, {pipeline_mode = #tpu.pipeline_mode<synchronous>, transform_indices = @transform_8, window_bounds = array<i64: 1, 256>}, {pipeline_mode = #tpu.pipeline_mode<synchronous>, transform_indices = @transform_9, window_bounds = array<i64: 256, 128>}, {pipeline_mode = #tpu.pipeline_mode<synchronous>, transform_indices = @transform_10, window_bounds = array<i64: 1, 128>}, {transform_indices = @transform_11, window_bounds = array<i64: 8, 128>}]} {
    %c0 = arith.constant 0 : index
    %c0_0 = arith.constant 0 : index
    %0 = vector.load %arg1[%c0, %c0_0] : memref<8x1024xbf16, #tpu.memory_space<vmem>>, vector<8x1024xbf16>
    %c0_1 = arith.constant 0 : index
    %c0_2 = arith.constant 0 : index
    %1 = vector.load %arg2[%c0_1, %c0_2] : memref<1024x512xbf16, #tpu.memory_space<vmem>>, vector<1024x512xbf16>
    %cst = arith.constant dense<0.000000e+00> : vector<8x512xf32>
    %2 = tpu.matmul %0, %1, %cst {dimension_numbers = #tpu.dot_dimension_numbers<[1], [0], [0], [1], [0, 0, 1, 1], [], []>} : vector<8x1024xbf16>, vector<1024x512xbf16>, vector<8x512xf32> -> vector<8x512xf32>
    %c0_3 = arith.constant 0 : index
    %c0_4 = arith.constant 0 : index
    %3 = vector.load %arg3[%c0_3, %c0_4] : memref<1x512xf32, #tpu.memory_space<vmem>>, vector<1x512xf32>
    %4 = vector.broadcast %3 : vector<1x512xf32> to vector<8x512xf32>
    %5 = arith.addf %2, %4 : vector<8x512xf32>
    %c0_5 = arith.constant 0 : index
    %c0_6 = arith.constant 0 : index
    %6 = vector.load %arg4[%c0_5, %c0_6] : memref<1x512xf32, #tpu.memory_space<vmem>>, vector<1x512xf32>
    %7 = vector.broadcast %6 : vector<1x512xf32> to vector<8x512xf32>
    %8 = arith.mulf %5, %7 : vector<8x512xf32>
    %c0_7 = arith.constant 0 : index
    %c0_8 = arith.constant 0 : index
    %9 = vector.load %arg5[%c0_7, %c0_8] : memref<1x512xf32, #tpu.memory_space<vmem>>, vector<1x512xf32>
    %10 = vector.broadcast %9 : vector<1x512xf32> to vector<8x512xf32>
    %11 = arith.addf %8, %10 : vector<8x512xf32>
    %cst_9 = arith.constant 0.000000e+00 : f32
    %12 = vector.broadcast %cst_9 : f32 to vector<8x512xf32>
    %13 = arith.maximumf %11, %12 : vector<8x512xf32>
    %14 = arith.truncf %13 : vector<8x512xf32> to vector<8x512xbf16>
    %c0_10 = arith.constant 0 : index
    %c0_11 = arith.constant 0 : index
    %15 = vector.load %arg6[%c0_10, %c0_11] : memref<512x256xbf16, #tpu.memory_space<vmem>>, vector<512x256xbf16>
    %cst_12 = arith.constant dense<0.000000e+00> : vector<8x256xf32>
    %16 = tpu.matmul %14, %15, %cst_12 {dimension_numbers = #tpu.dot_dimension_numbers<[1], [0], [0], [1], [0, 0, 1, 1], [], []>} : vector<8x512xbf16>, vector<512x256xbf16>, vector<8x256xf32> -> vector<8x256xf32>
    %c0_13 = arith.constant 0 : index
    %c0_14 = arith.constant 0 : index
    %17 = vector.load %arg7[%c0_13, %c0_14] : memref<1x256xf32, #tpu.memory_space<vmem>>, vector<1x256xf32>
    %18 = vector.broadcast %17 : vector<1x256xf32> to vector<8x256xf32>
    %19 = arith.addf %16, %18 : vector<8x256xf32>
    %c0_15 = arith.constant 0 : index
    %c0_16 = arith.constant 0 : index
    %20 = vector.load %arg8[%c0_15, %c0_16] : memref<1x256xf32, #tpu.memory_space<vmem>>, vector<1x256xf32>
    %21 = vector.broadcast %20 : vector<1x256xf32> to vector<8x256xf32>
    %22 = arith.mulf %19, %21 : vector<8x256xf32>
    %c0_17 = arith.constant 0 : index
    %c0_18 = arith.constant 0 : index
    %23 = vector.load %arg9[%c0_17, %c0_18] : memref<1x256xf32, #tpu.memory_space<vmem>>, vector<1x256xf32>
    %24 = vector.broadcast %23 : vector<1x256xf32> to vector<8x256xf32>
    %25 = arith.addf %22, %24 : vector<8x256xf32>
    %cst_19 = arith.constant 0.000000e+00 : f32
    %26 = vector.broadcast %cst_19 : f32 to vector<8x256xf32>
    %27 = arith.maximumf %25, %26 : vector<8x256xf32>
    %28 = arith.truncf %27 : vector<8x256xf32> to vector<8x256xbf16>
    %c0_20 = arith.constant 0 : index
    %c0_21 = arith.constant 0 : index
    %29 = vector.load %arg10[%c0_20, %c0_21] : memref<256x128xbf16, #tpu.memory_space<vmem>>, vector<256x128xbf16>
    %cst_22 = arith.constant dense<0.000000e+00> : vector<8x128xf32>
    %30 = tpu.matmul %28, %29, %cst_22 {dimension_numbers = #tpu.dot_dimension_numbers<[1], [0], [0], [1], [0, 0, 1, 1], [], []>} : vector<8x256xbf16>, vector<256x128xbf16>, vector<8x128xf32> -> vector<8x128xf32>
    %c0_23 = arith.constant 0 : index
    %c0_24 = arith.constant 0 : index
    %31 = vector.load %arg11[%c0_23, %c0_24] : memref<1x128xf32, #tpu.memory_space<vmem>>, vector<1x128xf32>
    %32 = vector.broadcast %31 : vector<1x128xf32> to vector<8x128xf32>
    %33 = arith.addf %30, %32 : vector<8x128xf32>
    %cst_25 = arith.constant dense<0xFF800000> : vector<8xf32>
    %34 = vector.multi_reduction <maximumf>, %33, %cst_25 [1] : vector<8x128xf32> to vector<8xf32>
    %35 = vector.shape_cast %34 : vector<8xf32> to vector<8x1xf32>
    %36 = vector.broadcast %35 : vector<8x1xf32> to vector<8x128xf32>
    %37 = arith.subf %33, %36 : vector<8x128xf32>
    %38 = math.exp %37 : vector<8x128xf32>
    %cst_26 = arith.constant dense<0.000000e+00> : vector<8xf32>
    %39 = vector.multi_reduction <add>, %38, %cst_26 [1] : vector<8x128xf32> to vector<8xf32>
    %40 = vector.shape_cast %39 : vector<8xf32> to vector<8x1xf32>
    %41 = math.log %40 : vector<8x1xf32>
    %42 = arith.addf %41, %35 : vector<8x1xf32>
    %43 = vector.broadcast %42 : vector<8x1xf32> to vector<8x128xf32>
    %44 = arith.subf %33, %43 : vector<8x128xf32>
    %c0_27 = arith.constant 0 : index
    %c0_28 = arith.constant 0 : index
    %45 = vector.load %arg12[%c0_27, %c0_28] : memref<8x128xf32, #tpu.memory_space<vmem>>, vector<8x128xf32>
    tpu.vector_store %arg12[%c0_27, %c0_28], %44 {strides = array<i32>} : memref<8x128xf32, #tpu.memory_space<vmem>>, vector<8x128xf32>,
    return
  }
  func.func @transform_0(%arg0: i32) -> (i32, i32) {
    %c0_i32 = arith.constant 0 : i32
    %c0_i32_0 = arith.constant 0 : i32
    return %arg0, %c0_i32 : i32, i32
  }
  func.func @transform_1(%arg0: i32) -> (i32, i32) {
    %c0_i32 = arith.constant 0 : i32
    %c0_i32_0 = arith.constant 0 : i32
    %c0_i32_1 = arith.constant 0 : i32
    return %c0_i32, %c0_i32_0 : i32, i32
  }
  func.func @transform_2(%arg0: i32) -> (i32, i32) {
    %c0_i32 = arith.constant 0 : i32
    %c0_i32_0 = arith.constant 0 : i32
    %c0_i32_1 = arith.constant 0 : i32
    return %c0_i32, %c0_i32_0 : i32, i32
  }
  func.func @transform_3(%arg0: i32) -> (i32, i32) {
    %c0_i32 = arith.constant 0 : i32
    %c0_i32_0 = arith.constant 0 : i32
    %c0_i32_1 = arith.constant 0 : i32
    return %c0_i32, %c0_i32_0 : i32, i32
  }
  func.func @transform_4(%arg0: i32) -> (i32, i32) {
    %c0_i32 = arith.constant 0 : i32
    %c0_i32_0 = arith.constant 0 : i32
    %c0_i32_1 = arith.constant 0 : i32
    return %c0_i32, %c0_i32_0 : i32, i32
  }
  func.func @transform_5(%arg0: i32) -> (i32, i32) {
    %c0_i32 = arith.constant 0 : i32
    %c0_i32_0 = arith.constant 0 : i32
    %c0_i32_1 = arith.constant 0 : i32
    return %c0_i32, %c0_i32_0 : i32, i32
  }
  func.func @transform_6(%arg0: i32) -> (i32, i32) {
    %c0_i32 = arith.constant 0 : i32
    %c0_i32_0 = arith.constant 0 : i32
    %c0_i32_1 = arith.constant 0 : i32
    return %c0_i32, %c0_i32_0 : i32, i32
  }
  func.func @transform_7(%arg0: i32) -> (i32, i32) {
    %c0_i32 = arith.constant 0 : i32
    %c0_i32_0 = arith.constant 0 : i32
    %c0_i32_1 = arith.constant 0 : i32
    return %c0_i32, %c0_i32_0 : i32, i32
  }
  func.func @transform_8(%arg0: i32) -> (i32, i32) {
    %c0_i32 = arith.constant 0 : i32
    %c0_i32_0 = arith.constant 0 : i32
    %c0_i32_1 = arith.constant 0 : i32
    return %c0_i32, %c0_i32_0 : i32, i32
  }
  func.func @transform_9(%arg0: i32) -> (i32, i32) {
    %c0_i32 = arith.constant 0 : i32
    %c0_i32_0 = arith.constant 0 : i32
    %c0_i32_1 = arith.constant 0 : i32
    return %c0_i32, %c0_i32_0 : i32, i32
  }
  func.func @transform_10(%arg0: i32) -> (i32, i32) {
    %c0_i32 = arith.constant 0 : i32
    %c0_i32_0 = arith.constant 0 : i32
    %c0_i32_1 = arith.constant 0 : i32
    return %c0_i32, %c0_i32_0 : i32, i32
  }
  func.func @transform_11(%arg0: i32) -> (i32, i32) {
    %c0_i32 = arith.constant 0 : i32
    %c0_i32_0 = arith.constant 0 : i32
    return %arg0, %c0_i32 : i32, i32
  }
}

</mosaic_0001>

<llo_original>
// kernel: get_model_forward.5
$region0: #{get_model_forward.5}
  #allocation0 [shape = 'u32[]', space=smem, size = 0x4, offset = 0x4, fixed_abs, tag = 'smem constant byte address 0x4 - core index']
  #allocation1 [shape = 'u32[144,128]{1,0:T(1,128)}', space=vmem, size = 0x12000, scoped, tag = 'internal scratch']
  #allocation2 [shape = 'f32[16,256]{1,0:T(8,128)}', space=vmem, size = 0x4000, scoped, tag = 'scratch operand']
  %s0 = inlined_call_operand.vmem [shape: bf16[2,16,128], index: 0, kind: input, shape index: {}]
  %s1 = inlined_call_operand.vmem [shape: bf16[128,128], index: 1, kind: input, shape index: {}]
  %s2 = inlined_call_operand.vmem [shape: f32[1,128], index: 2, kind: input, shape index: {}]
  %s3 = inlined_call_operand.vmem [shape: bf16[128,256], index: 3, kind: input, shape index: {}]
  %s4 = inlined_call_operand.hbm [shape: f32[1,256], index: 4, kind: input, shape index: {}]
  %s5 = inlined_call_operand.vmem [shape: bf16[16,256], index: 5, kind: output, shape index: {}]
  %s6 = sld [smem:[#allocation0]]
  $region69: #{get_model_forward.5} parent=0
    _
  %s8 = ssub.s32 1, %s6
  %s9 = scalar_select 0, %s8, %s6
  $region1: #{get_model_forward.5} parent=0
    #allocation3 [shape = 'u8[1024]{0}', space=vmem, size = 0x400, scoped, tag = 'input window, operand 4, single buffered']
    #allocation4 [shape = 's32[2]{0}', space=sflag, size = 0x8, scoped, tag = 'scoped memory for get_model_forward.5']
    %10 = vsyncpa [#allocation4], 0
    loop: start=0, step=1, limit=4
    $region2: #{get_model_forward.5} parent=1 // loop_pre_header
      _
    $region3: #{get_model_forward.5} parent=1 // loop_header
      %s12 = sphi 0, %s16
      %p13 = scmp.ge.s32.totalorder %s12, 4
      %s19 = sphi 0, %s31
      %s20 = sphi 0, %s27
      %s21 = sphi 0, %s19
      %s22 = sphi 0, %s20
      %s23 = sphi 0, %s21
      %s24 = sphi 0, %s22
      %s36 = sphi 0, %s38
      %s39 = sphi 0, %s36
      %s40 = sphi 0, %s39
      %s56 = sphi 0, %s40
      %s60 = sphi 0, %s60
      %s62 = sphi 0, %s60
      %s63 = sphi 0, %s62
      %s77 = sphi 0, %s63
      %s81 = sphi 0, %s81
      %s83 = sphi 0, %s81
      %s84 = sphi 0, %s83
      %s98 = sphi 0, %s84
      %s102 = sphi 0, %s102
      %s104 = sphi 0, %s102
      %s105 = sphi 0, %s104
      %s119 = sphi 0, %s105
      %s123 = sphi 0, %s123
      %s125 = sphi 0, %s123
      %s126 = sphi 0, %s125
      %s140 = sphi 0, %s126
      %s146 = sphi 0, %s148
      %s149 = sphi 0, %s146
      %s150 = sphi 0, %s149
      %s166 = sphi 0, %s150
    $region4: #{get_model_forward.5} parent=1 // loop_header_branch
      %15 = sbr.rel (%p13) target = $region8
    $region5: #{get_model_forward.5} parent=1 // loop_body
      %s17 = ssub.s32 %s12, 1
      %s18 = ssub.s32 %s12, 2
      %s25 = sadd.s32 1, %s20
      %p26 = scmp.ge.s32.totalorder %s25, 2
      %s27 = scalar_select %p26, 0, %s25
      %s28 = sadd.s32 1, %s19
      %s29 = scalar_select %p26, %s28, %s19
      %p30 = scmp.ge.s32.totalorder %s29, 1
      %s31 = scalar_select %p30, 0, %s29
      %s32 = ssub.s32 %s20, %s27
      %s33 = ssub.s32 %s19, %s31
      %s34 = sor.u32 %s32, %s33
      %p35 = scmp.eq.s32.totalorder %s34, 0
      %s37 = sadd.s32 %s36, 1
      %s38 = scalar_select %p35, %s36, %s37
      %p41 = pneg %p35
      %p42 = scmp.eq.s32.totalorder %s12, 1
      %p43 = por %p41, %p42
      %p44 = scmp.ne.s32.totalorder %s36, %s39
      %p45 = scmp.eq.s32.totalorder %s12, 0
      %p46 = por %p44, %p45
      %p47 = scmp.ne.s32.totalorder %s36, %s39
      %p48 = scmp.eq.s32.totalorder %s17, 1
      %p49 = por %p47, %p48
      %p50 = scmp.ne.s32.totalorder %s39, %s40
      %p51 = scmp.eq.s32.totalorder %s17, 0
      %p52 = por %p50, %p51
      %p53 = scmp.ne.s32.totalorder %s39, %s40
      %p54 = scmp.eq.s32.totalorder %s18, 1
      %p55 = por %p53, %p54
      %p57 = scmp.ne.s32.totalorder %s40, %s56
      %p58 = scmp.eq.s32.totalorder %s18, 0
      %p59 = por %p57, %p58
      %s61 = sadd.s32 %s60, 1
      %p64 = scmp.eq.s32.totalorder %s12, 1
      %p65 = scmp.ne.s32.totalorder %s60, %s62
      %p66 = scmp.eq.s32.totalorder %s12, 0
      %p67 = por %p65, %p66
      %p68 = scmp.ne.s32.totalorder %s60, %s62
      %p69 = scmp.eq.s32.totalorder %s17, 1
      %p70 = por %p68, %p69
      %p71 = scmp.ne.s32.totalorder %s62, %s63
      %p72 = scmp.eq.s32.totalorder %s17, 0
      %p73 = por %p71, %p72
      %p74 = scmp.ne.s32.totalorder %s62, %s63
      %p75 = scmp.eq.s32.totalorder %s18, 1
      %p76 = por %p74, %p75
      %p78 = scmp.ne.s32.totalorder %s63, %s77
      %p79 = scmp.eq.s32.totalorder %s18, 0
      %p80 = por %p78, %p79
      %s82 = sadd.s32 %s81, 1
      %p85 = scmp.eq.s32.totalorder %s12, 1
      %p86 = scmp.ne.s32.totalorder %s81, %s83
      %p87 = scmp.eq.s32.totalorder %s12, 0
      %p88 = por %p86, %p87
      %p89 = scmp.ne.s32.totalorder %s81, %s83
      %p90 = scmp.eq.s32.totalorder %s17, 1
      %p91 = por %p89, %p90
      %p92 = scmp.ne.s32.totalorder %s83, %s84
      %p93 = scmp.eq.s32.totalorder %s17, 0
      %p94 = por %p92, %p93
      %p95 = scmp.ne.s32.totalorder %s83, %s84
      %p96 = scmp.eq.s32.totalorder %s18, 1
      %p97 = por %p95, %p96
      %p99 = scmp.ne.s32.totalorder %s84, %s98
      %p100 = scmp.eq.s32.totalorder %s18, 0
      %p101 = por %p99, %p100
      %s103 = sadd.s32 %s102, 1
      %p106 = scmp.eq.s32.totalorder %s12, 1
      %p107 = scmp.ne.s32.totalorder %s102, %s104
      %p108 = scmp.eq.s32.totalorder %s12, 0
      %p109 = por %p107, %p108
      %p110 = scmp.ne.s32.totalorder %s102, %s104
      %p111 = scmp.eq.s32.totalorder %s17, 1
      %p112 = por %p110, %p111
      %p113 = scmp.ne.s32.totalorder %s104, %s105
      %p114 = scmp.eq.s32.totalorder %s17, 0
      %p115 = por %p113, %p114
      %p116 = scmp.ne.s32.totalorder %s104, %s105
      %p117 = scmp.eq.s32.totalorder %s18, 1
      %p118 = por %p116, %p117
      %p120 = scmp.ne.s32.totalorder %s105, %s119
      %p121 = scmp.eq.s32.totalorder %s18, 0
      %p122 = por %p120, %p121
      %s124 = sadd.s32 %s123, 1
      %p127 = scmp.eq.s32.totalorder %s12, 1
      %p128 = scmp.ne.s32.totalorder %s123, %s125
      %p129 = scmp.eq.s32.totalorder %s12, 0
      %p130 = por %p128, %p129
      %p131 = scmp.ne.s32.totalorder %s123, %s125
      %p132 = scmp.eq.s32.totalorder %s17, 1
      %p133 = por %p131, %p132
      %p134 = scmp.ne.s32.totalorder %s125, %s126
      %p135 = scmp.eq.s32.totalorder %s17, 0
      %p136 = por %p134, %p135
      %p137 = scmp.ne.s32.totalorder %s125, %s126
      %p138 = scmp.eq.s32.totalorder %s18, 1
      %p139 = por %p137, %p138
      %p141 = scmp.ne.s32.totalorder %s126, %s140
      %p142 = scmp.eq.s32.totalorder %s18, 0
      %p143 = por %p141, %p142
      %s144 = ssub.s32 %s19, %s31
      %p145 = scmp.eq.s32.totalorder %s144, 0
      %s147 = sadd.s32 %s146, 1
      %s148 = scalar_select %p145, %s146, %s147
      %p151 = pneg %p145
      %p152 = scmp.eq.s32.totalorder %s12, 1
      %p153 = por %p151, %p152
      %p154 = scmp.ne.s32.totalorder %s146, %s149
      %p155 = scmp.eq.s32.totalorder %s12, 0
      %p156 = por %p154, %p155
      %p157 = scmp.ne.s32.totalorder %s146, %s149
      %p158 = scmp.eq.s32.totalorder %s17, 1
      %p159 = por %p157, %p158
      %p160 = scmp.ne.s32.totalorder %s149, %s150
      %p161 = scmp.eq.s32.totalorder %s17, 0
      %p162 = por %p160, %p161
      %p163 = scmp.ne.s32.totalorder %s149, %s150
      %p164 = scmp.eq.s32.totalorder %s18, 1
      %p165 = por %p163, %p164
      %p167 = scmp.ne.s32.totalorder %s150, %s166
      %p168 = scmp.eq.s32.totalorder %s18, 0
      %p169 = por %p167, %p168
      %p170 = scmp.le.s32.totalorder 1, %s12
      %p171 = scmp.lt.s32.totalorder %s12, 3
      %p172 = pnand %p170, %p171
      %p173 = pneg %p172
      // Predicated region
      $region9: #{get_model_forward.5} parent=5 // pred_check
        _
      $region10: #{get_model_forward.5} parent=5 // pred_check_branch
        %175 = sbr.rel (%p172) target = $region12
      $region11: #{get_model_forward.5} parent=5 // pred_region
        %s176 = ssub.s32 %s12, 1
        // Predicated region
        $region13: #{get_model_forward.5} parent=11 // pred_check
          %p177 = pneg %p73
        $region14: #{get_model_forward.5} parent=11 // pred_check_branch
          %179 = sbr.rel (%p177) target = $region16
        $region15: #{get_model_forward.5} parent=11 // pred_region
          _
        $region16: #{get_model_forward.5} parent=11 // pred_fallthru
          _
        // Predicated region
        $region17: #{get_model_forward.5} parent=11 // pred_check
          %p180 = pneg %p94
        $region18: #{get_model_forward.5} parent=11 // pred_check_branch
          %182 = sbr.rel (%p180) target = $region20
        $region19: #{get_model_forward.5} parent=11 // pred_region
          _
        $region20: #{get_model_forward.5} parent=11 // pred_fallthru
          _
        // Predicated region
        $region21: #{get_model_forward.5} parent=11 // pred_check
          %p183 = pneg %p115
        $region22: #{get_model_forward.5} parent=11 // pred_check_branch
          %185 = sbr.rel (%p183) target = $region24
        $region23: #{get_model_forward.5} parent=11 // pred_region
          _
        $region24: #{get_model_forward.5} parent=11 // pred_fallthru
          _
        // Predicated region
        $region25: #{get_model_forward.5} parent=11 // pred_check
          %p186 = pneg %p136
        $region26: #{get_model_forward.5} parent=11 // pred_check_branch
          %188 = sbr.rel (%p186) target = $region28
        $region27: #{get_model_forward.5} parent=11 // pred_region
          %s190 = ssub.s32 32, 32
          %191 = vsyncadd [#allocation4], %s190
          %s193 = sshll.u32 [#allocation3], 4
          %s194 = int_to_ptr.vmem [resolvable:$true] %s193
          %196 = dma.hbm_to_vmem [thread:$0]  %s4, 32, %s194, [#allocation4]
        $region28: #{get_model_forward.5} parent=11 // pred_fallthru
          _
      $region12: #{get_model_forward.5} parent=5 // pred_fallthru
        _
      %p197 = scmp.lt.s32.totalorder %s12, 2
      // Predicated region
      $region29: #{get_model_forward.5} parent=5 // pred_check
        %p198 = pneg %p197
      $region30: #{get_model_forward.5} parent=5 // pred_check_branch
        %200 = sbr.rel (%p198) target = $region32
      $region31: #{get_model_forward.5} parent=5 // pred_region
        // Predicated region
        $region33: #{get_model_forward.5} parent=31 // pred_check
          %p201 = pneg %p46
        $region34: #{get_model_forward.5} parent=31 // pred_check_branch
          %203 = sbr.rel (%p201) target = $region36
        $region35: #{get_model_forward.5} parent=31 // pred_region
          %s204 = smul.u32 2, %s19
          %p205 = scmp.lt.s32.totalorder %s20, 1
          %s206 = scalar_select %p205, %s20, 1
          %p207 = scmp.lt.s32.totalorder %s204, 1
          %s208 = scalar_select %p207, %s204, 1
          %s209 = smul.addr %s206, 2
          %s210 = sadd.s32 %s208, %s209
          %s211 = smul.addr %s210, 4
          %s212 = scalar_lea.vmem %s0, %s211
          %s213 = smul.u32 2, %s19
        $region36: #{get_model_forward.5} parent=31 // pred_fallthru
          _
      $region32: #{get_model_forward.5} parent=5 // pred_fallthru
        _
      %p214 = scmp.le.s32.totalorder 1, %s12
      %p215 = scmp.lt.s32.totalorder %s12, 3
      %p216 = pnand %p214, %p215
      %p217 = pneg %p216
      // Predicated region
      $region37: #{get_model_forward.5} parent=5 // pred_check
        _
      $region38: #{get_model_forward.5} parent=5 // pred_check_branch
        %219 = sbr.rel (%p216) target = $region40
      $region39: #{get_model_forward.5} parent=5 // pred_region
        %s220 = ssub.s32 %s12, 1
        // Predicated region
        $region41: #{get_model_forward.5} parent=39 // pred_check
          %p221 = pneg %p136
        $region42: #{get_model_forward.5} parent=39 // pred_check_branch
          %223 = sbr.rel (%p221) target = $region44
        $region43: #{get_model_forward.5} parent=39 // pred_region
          %224 = dma.done [#allocation4], 32
        $region44: #{get_model_forward.5} parent=39 // pred_fallthru
          _
        %s225 = smul.u32 2, %s21
        %p226 = scmp.lt.s32.totalorder %s22, 1
        %s227 = scalar_select %p226, %s22, 1
        %p228 = scmp.lt.s32.totalorder %s225, 1
        %s229 = scalar_select %p228, %s225, 1
        %s230 = smul.addr %s227, 2
        %s231 = sadd.s32 %s229, %s230
        %s232 = smul.addr %s231, 4
        %s233 = scalar_lea.vmem %s0, %s232
        %p234 = pneg %p52
        %p235 = pneg %p49
        %p236 = pneg %p73
        %p237 = pneg %p70
        %p238 = pneg %p94
        %p239 = pneg %p91
        %p240 = pneg %p115
        %p241 = pneg %p112
        %p242 = pneg %p136
        %p243 = pneg %p133
        %p244 = pneg %p162
        %p245 = pneg %p159
        %s246 = smul.u32 2, %s21
        %p247 = scmp.lt.s32.totalorder %s246, 1
        %s248 = scalar_select %p247, %s246, 1
        %s249 = smul.addr %s248, 2
        %s250 = smul.addr %s249, 4
        %s251 = scalar_lea.vmem %s5, %s250
        %s252 = smul.u32 2, %s21
        %p253 = scmp.lt.s32.totalorder %s22, 1
        %s254 = scalar_select %p253, %s22, 1
        %p255 = scmp.lt.s32.totalorder %s252, 1
        %s256 = scalar_select %p255, %s252, 1
        %s257 = smul.addr %s254, 2
        %s258 = sadd.s32 %s256, %s257
        %s259 = smul.addr %s258, 4
        %s260 = scalar_lea.vmem %s0, %s259
        %s261 = smul.u32 2, %s21
        %s262 = smul.u32 2, %s21
        %p263 = scmp.lt.s32.totalorder %s262, 1
        %s264 = scalar_select %p263, %s262, 1
        %s265 = smul.addr %s264, 2
        %s266 = smul.addr %s265, 4
        %s267 = scalar_lea.vmem %s5, %s266
        %s268 = smul.u32 2, %s21
        %v270 = vld [vmem:[%s260] sm:$0xf]
        %v271 = vld [vmem:[%s260 + $0x4] sm:$0xf]
        %v272 = vld [vmem:[%s1] sm:$0xf]
        %v273 = vld [vmem:[%s1 + $0x4] sm:$0xf]
        %v274 = vld [vmem:[%s1 + $0x8] sm:$0xf]
        %v275 = vld [vmem:[%s1 + $0xc] sm:$0xf]
        %v276 = vld [vmem:[%s1 + $0x10] sm:$0xf]
        %v277 = vld [vmem:[%s1 + $0x14] sm:$0xf]
        %v278 = vld [vmem:[%s1 + $0x18] sm:$0xf]
        %v279 = vld [vmem:[%s1 + $0x1c] sm:$0xf]
        %v280 = vld [vmem:[%s1 + $0x20] sm:$0xf]
        %v281 = vld [vmem:[%s1 + $0x24] sm:$0xf]
        %v282 = vld [vmem:[%s1 + $0x28] sm:$0xf]
        %v283 = vld [vmem:[%s1 + $0x2c] sm:$0xf]
        %v284 = vld [vmem:[%s1 + $0x30] sm:$0xf]
        %v285 = vld [vmem:[%s1 + $0x34] sm:$0xf]
        %v286 = vld [vmem:[%s1 + $0x38] sm:$0xf]
        %v287 = vld [vmem:[%s1 + $0x3c] sm:$0xf]
        %v288 = vld [vmem:[%s2] sm:$0x1]
        %v290 = vlaneseq
        %v291 = vshrl.u32 %v290, 7
        %v292 = vsub.s32 0, %v291
        %v293 = vrot.slane %v288, %v292
        %v297 = vunpack.c.l.b16 %v270
        %v298 = vunpack.c.l.b16 %v271
        %v299 = vpack.c.b16 %v298, %v297
        %v317 = vunpack.c.l.b16 %v272
        %v318 = vunpack.c.l.b16 %v273
        %v319 = vunpack.c.l.b16 %v274
        %v320 = vunpack.c.l.b16 %v275
        %v321 = vunpack.c.l.b16 %v276
        %v322 = vunpack.c.l.b16 %v277
        %v323 = vunpack.c.l.b16 %v278
        %v324 = vunpack.c.l.b16 %v279
        %v325 = vunpack.c.l.b16 %v280
        %v326 = vunpack.c.l.b16 %v281
        %v327 = vunpack.c.l.b16 %v282
        %v328 = vunpack.c.l.b16 %v283
        %v329 = vunpack.c.l.b16 %v284
        %v330 = vunpack.c.l.b16 %v285
        %v331 = vunpack.c.l.b16 %v286
        %v332 = vunpack.c.l.b16 %v287
        %v333 = vpack.c.b16 %v318, %v317
        %v334 = vpack.c.b16 %v320, %v319
        %v335 = vpack.c.b16 %v322, %v321
        %v336 = vpack.c.b16 %v324, %v323
        %v337 = vpack.c.b16 %v326, %v325
        %v338 = vpack.c.b16 %v328, %v327
        %v339 = vpack.c.b16 %v330, %v329
        %v340 = vpack.c.b16 %v332, %v331
        %349 = vmatprep.subr.bf16.mxu0 0
        %350 = vmatpush1.bf16.msra.mxu0 %v340
        %351 = vmatprep.subr.bf16.mxu0 0
        %352 = vmatpush1.bf16.msra.mxu0 %v339
        %353 = vmatprep.subr.bf16.mxu0 0
        %354 = vmatpush1.bf16.msra.mxu0 %v338
        %355 = vmatprep.subr.bf16.mxu0 0
        %356 = vmatpush1.bf16.msra.mxu0 %v337
        %357 = vmatprep.subr.bf16.mxu0 0
        %358 = vmatpush1.bf16.msra.mxu0 %v336
        %359 = vmatprep.subr.bf16.mxu0 0
        %360 = vmatpush1.bf16.msra.mxu0 %v335
        %361 = vmatprep.subr.bf16.mxu0 0
        %362 = vmatpush1.bf16.msra.mxu0 %v334
        %363 = vmatprep.subr.bf16.mxu0 0
        %364 = vmatpush1.bf16.msra.mxu0 %v333
        %365 = vmatprep.subr.bf16.mxu0 0
        %366 = vmatpush2.bf16.msra.mxu0 0
        %367 = vmatprep.subr.bf16.mxu0 0
        %368 = vmatpush2.bf16.msra.mxu0 0
        %369 = vmatprep.subr.bf16.mxu0 0
        %370 = vmatpush2.bf16.msra.mxu0 0
        %371 = vmatprep.subr.bf16.mxu0 0
        %372 = vmatpush2.bf16.msra.mxu0 0
        %373 = vmatprep.subr.bf16.mxu0 0
        %374 = vmatpush2.bf16.msra.mxu0 0
        %375 = vmatprep.subr.bf16.mxu0 0
        %376 = vmatpush2.bf16.msra.mxu0 0
        %377 = vmatprep.subr.bf16.mxu0 0
        %378 = vmatpush2.bf16.msra.mxu0 0
        %379 = vmatprep.subr.bf16.mxu0 0
        %380 = vmatpush2.bf16.msra.mxu0 0
        %381 = vmatprep.mubr.bf16.mxu0 0
        %382 = vmatmul.mubr.bf16.gmra.mxu0 %v299
        %v383 = vpop.f32.mrf.mxu0
        %v384 = vadd.f32 %v293, %v383
        %v385 = vpop.f32.mrf.mxu0
        %v386 = vpop.f32.mrf.mxu0
        %v387 = vadd.f32 %v293, %v386
        %v388 = vpop.f32.mrf.mxu0
        %389 = vdwg.mxu0
        %v390 = vmax.f32 %v384, 0.0
        %v391 = vmax.f32 %v387, 0.0
        %v392 = vpack.c.bf16 %v391, %v390
        %v393 = vld [vmem:[%s3] sm:$0xff]
        %v394 = vld [vmem:[%s3 + $0x8] sm:$0xff]
        %v395 = vld [vmem:[%s3 + $0x10] sm:$0xff]
        %v396 = vld [vmem:[%s3 + $0x18] sm:$0xff]
        %v397 = vld [vmem:[%s3 + $0x20] sm:$0xff]
        %v398 = vld [vmem:[%s3 + $0x28] sm:$0xff]
        %v399 = vld [vmem:[%s3 + $0x30] sm:$0xff]
        %v400 = vld [vmem:[%s3 + $0x38] sm:$0xff]
        %v401 = vld [vmem:[%s3 + $0x40] sm:$0xff]
        %v402 = vld [vmem:[%s3 + $0x48] sm:$0xff]
        %v403 = vld [vmem:[%s3 + $0x50] sm:$0xff]
        %v404 = vld [vmem:[%s3 + $0x58] sm:$0xff]
        %v405 = vld [vmem:[%s3 + $0x60] sm:$0xff]
        %v406 = vld [vmem:[%s3 + $0x68] sm:$0xff]
        %v407 = vld [vmem:[%s3 + $0x70] sm:$0xff]
        %v408 = vld [vmem:[%s3 + $0x78] sm:$0xff]
        %v409 = vld [vmem:[#allocation3] sm:$0x3]
        %v411 = vlaneseq
        %v412 = vshrl.u32 %v411, 7
        %v413 = vsub.s32 0, %v412
        %v414 = vrot.slane %v409, %v413
        %v415 = vlaneseq
        %v416 = vshrl.u32 %v415, 7
        %v417 = vsub.s32 1, %v416
        %v418 = vrot.slane %v409, %v417
        %v437 = vunpack.c.l.b16 %v393
        %v438 = vunpack.c.h.b16 %v393
        %v439 = vunpack.c.l.b16 %v394
        %v440 = vunpack.c.h.b16 %v394
        %v441 = vunpack.c.l.b16 %v395
        %v442 = vunpack.c.h.b16 %v395
        %v443 = vunpack.c.l.b16 %v396
        %v444 = vunpack.c.h.b16 %v396
        %v445 = vunpack.c.l.b16 %v397
        %v446 = vunpack.c.h.b16 %v397
        %v447 = vunpack.c.l.b16 %v398
        %v448 = vunpack.c.h.b16 %v398
        %v449 = vunpack.c.l.b16 %v399
        %v450 = vunpack.c.h.b16 %v399
        %v451 = vunpack.c.l.b16 %v400
        %v452 = vunpack.c.h.b16 %v400
        %v453 = vunpack.c.l.b16 %v401
        %v454 = vunpack.c.h.b16 %v401
        %v455 = vunpack.c.l.b16 %v402
        %v456 = vunpack.c.h.b16 %v402
        %v457 = vunpack.c.l.b16 %v403
        %v458 = vunpack.c.h.b16 %v403
        %v459 = vunpack.c.l.b16 %v404
        %v460 = vunpack.c.h.b16 %v404
        %v461 = vunpack.c.l.b16 %v405
        %v462 = vunpack.c.h.b16 %v405
        %v463 = vunpack.c.l.b16 %v406
        %v464 = vunpack.c.h.b16 %v406
        %v465 = vunpack.c.l.b16 %v407
        %v466 = vunpack.c.h.b16 %v407
        %v467 = vunpack.c.l.b16 %v408
        %v468 = vunpack.c.h.b16 %v408
        %v469 = vpack.c.b16 %v439, %v437
        %v470 = vpack.c.b16 %v440, %v438
        %v471 = vpack.c.b16 %v443, %v441
        %v472 = vpack.c.b16 %v444, %v442
        %v473 = vpack.c.b16 %v447, %v445
        %v474 = vpack.c.b16 %v448, %v446
        %v475 = vpack.c.b16 %v451, %v449
        %v476 = vpack.c.b16 %v452, %v450
        %v477 = vpack.c.b16 %v455, %v453
        %v478 = vpack.c.b16 %v456, %v454
        %v479 = vpack.c.b16 %v459, %v457
        %v480 = vpack.c.b16 %v460, %v458
        %v481 = vpack.c.b16 %v463, %v461
        %v482 = vpack.c.b16 %v464, %v462
        %v483 = vpack.c.b16 %v467, %v465
        %v484 = vpack.c.b16 %v468, %v466
        %501 = vmatprep.subr.bf16.mxu0 %v484
        %502 = vmatpush1.bf16.msra.mxu0 %v483
        %503 = vmatprep.subr.bf16.mxu0 %v482
        %504 = vmatpush1.bf16.msra.mxu0 %v481
        %505 = vmatprep.subr.bf16.mxu0 %v480
        %506 = vmatpush1.bf16.msra.mxu0 %v479
        %507 = vmatprep.subr.bf16.mxu0 %v478
        %508 = vmatpush1.bf16.msra.mxu0 %v477
        %509 = vmatprep.subr.bf16.mxu0 %v476
        %510 = vmatpush1.bf16.msra.mxu0 %v475
        %511 = vmatprep.subr.bf16.mxu0 %v474
        %512 = vmatpush1.bf16.msra.mxu0 %v473
        %513 = vmatprep.subr.bf16.mxu0 %v472
        %514 = vmatpush1.bf16.msra.mxu0 %v471
        %515 = vmatprep.subr.bf16.mxu0 %v470
        %516 = vmatpush1.bf16.msra.mxu0 %v469
        %517 = vmatprep.subr.bf16.mxu0 0
        %518 = vmatpush2.bf16.msra.mxu0 0
        %519 = vmatprep.subr.bf16.mxu0 0
        %520 = vmatpush2.bf16.msra.mxu0 0
        %521 = vmatprep.subr.bf16.mxu0 0
        %522 = vmatpush2.bf16.msra.mxu0 0
        %523 = vmatprep.subr.bf16.mxu0 0
        %524 = vmatpush2.bf16.msra.mxu0 0
        %525 = vmatprep.subr.bf16.mxu0 0
        %526 = vmatpush2.bf16.msra.mxu0 0
        %527 = vmatprep.subr.bf16.mxu0 0
        %528 = vmatpush2.bf16.msra.mxu0 0
        %529 = vmatprep.subr.bf16.mxu0 0
        %530 = vmatpush2.bf16.msra.mxu0 0
        %531 = vmatprep.subr.bf16.mxu0 0
        %532 = vmatpush2.bf16.msra.mxu0 0
        %533 = vmatprep.mubr.bf16.mxu0 0
        %534 = vmatmul.mubr.bf16.gmra.mxu0 %v392
        %v535 = vpop.f32.mrf.mxu0
        %v536 = vadd.f32 %v414, %v535
        %v537 = vpop.f32.mrf.mxu0
        %v538 = vadd.f32 %v418, %v537
        %v539 = vpop.f32.mrf.mxu0
        %v540 = vadd.f32 %v414, %v539
        %v541 = vpop.f32.mrf.mxu0
        %v542 = vadd.f32 %v418, %v541
        %543 = vdwg.mxu0
        %v544 = vmax.f32 %v536, 0.0
        %v545 = vmax.f32 %v538, 0.0
        %v546 = vmax.f32 %v540, 0.0
        %v547 = vmax.f32 %v542, 0.0
        %p548 = scmp.eq.s32.totalorder %s22, 0
        // Predicated region
        $region45: #{get_model_forward.5} parent=39 // pred_check
          %p549 = pneg %p548
        $region46: #{get_model_forward.5} parent=39 // pred_check_branch
          %551 = sbr.rel (%p549) target = $region48
        $region47: #{get_model_forward.5} parent=39 // pred_region
          %552 = vst [vmem:[#allocation2] sm:$0xff] %v544
          %553 = vst [vmem:[#allocation2 + $0x8] sm:$0xff] %v545
          %554 = vst [vmem:[#allocation2 + $0x10] sm:$0xff] %v546
          %555 = vst [vmem:[#allocation2 + $0x18] sm:$0xff] %v547
        $region48: #{get_model_forward.5} parent=39 // pred_fallthru
          _
        %p556 = scmp.gt.s32.totalorder %s22, 0
        // Predicated region
        $region49: #{get_model_forward.5} parent=39 // pred_check
          %p557 = pneg %p556
        $region50: #{get_model_forward.5} parent=39 // pred_check_branch
          %559 = sbr.rel (%p557) target = $region52
        $region51: #{get_model_forward.5} parent=39 // pred_region
          %v560 = vld [vmem:[#allocation2] sm:$0xff]
          %v561 = vld [vmem:[#allocation2 + $0x8] sm:$0xff]
          %v562 = vld [vmem:[#allocation2 + $0x10] sm:$0xff]
          %v563 = vld [vmem:[#allocation2 + $0x18] sm:$0xff]
          %v564 = vmax.f32 %v560, %v544
          %v565 = vmax.f32 %v561, %v545
          %v566 = vmax.f32 %v562, %v546
          %v567 = vmax.f32 %v563, %v547
          %568 = vst [vmem:[#allocation2] sm:$0xff] %v564
          %569 = vst [vmem:[#allocation2 + $0x8] sm:$0xff] %v565
          %570 = vst [vmem:[#allocation2 + $0x10] sm:$0xff] %v566
          %571 = vst [vmem:[#allocation2 + $0x18] sm:$0xff] %v567
        $region52: #{get_model_forward.5} parent=39 // pred_fallthru
          _
        %p572 = scmp.eq.s32.totalorder %s22, 1
        // Predicated region
        $region53: #{get_model_forward.5} parent=39 // pred_check
          %p573 = pneg %p572
        $region54: #{get_model_forward.5} parent=39 // pred_check_branch
          %575 = sbr.rel (%p573) target = $region56
        $region55: #{get_model_forward.5} parent=39 // pred_region
          %v576 = vld [vmem:[#allocation2] sm:$0xff]
          %v577 = vld [vmem:[#allocation2 + $0x8] sm:$0xff]
          %v578 = vld [vmem:[#allocation2 + $0x10] sm:$0xff]
          %v579 = vld [vmem:[#allocation2 + $0x18] sm:$0xff]
          %v580 = vpack.c.bf16 %v578, %v576
          %v581 = vpack.c.bf16 %v579, %v577
          %v584 = vunpack.c.l.b16 %v580
          %v585 = vunpack.c.l.b16 %v581
          %v586 = vunpack.c.h.b16 %v580
          %v587 = vunpack.c.h.b16 %v581
          %v588 = vpack.c.b16 %v585, %v584
          %v589 = vpack.c.b16 %v587, %v586
          %592 = vst [vmem:[%s267] sm:$0xff] %v588
          %593 = vst [vmem:[%s267 + $0x8] sm:$0xff] %v589
        $region56: #{get_model_forward.5} parent=39 // pred_fallthru
          _
        %s594 = smul.u32 2, %s21
        %p595 = scmp.lt.s32.totalorder %s594, 1
        %s596 = scalar_select %p595, %s594, 1
        %s597 = smul.addr %s596, 2
        %s598 = smul.addr %s597, 4
        %s599 = scalar_lea.vmem %s5, %s598
        // Predicated region
        $region57: #{get_model_forward.5} parent=39 // pred_check
          %p600 = pneg %p159
        $region58: #{get_model_forward.5} parent=39 // pred_check_branch
          %602 = sbr.rel (%p600) target = $region60
        $region59: #{get_model_forward.5} parent=39 // pred_region
          %s603 = smul.u32 2, %s21
        $region60: #{get_model_forward.5} parent=39 // pred_fallthru
          _
        // Predicated region
        $region61: #{get_model_forward.5} parent=39 // pred_check
          %p604 = pneg %p159
        $region62: #{get_model_forward.5} parent=39 // pred_check_branch
          %606 = sbr.rel (%p604) target = $region64
        $region63: #{get_model_forward.5} parent=39 // pred_region
          %s607 = smul.u32 2, %s21
          %p608 = scmp.lt.s32.totalorder %s607, 1
          %s609 = scalar_select %p608, %s607, 1
          %s610 = smul.addr %s609, 2
          %s611 = smul.addr %s610, 4
          %s612 = scalar_lea.vmem %s5, %s611
        $region64: #{get_model_forward.5} parent=39 // pred_fallthru
          _
      $region40: #{get_model_forward.5} parent=5 // pred_fallthru
        _
      %p613 = scmp.le.s32.totalorder 2, %s12
      // Predicated region
      $region65: #{get_model_forward.5} parent=5 // pred_check
        %p614 = pneg %p613
      $region66: #{get_model_forward.5} parent=5 // pred_check_branch
        %616 = sbr.rel (%p614) target = $region68
      $region67: #{get_model_forward.5} parent=5 // pred_region
        %s617 = ssub.s32 %s12, 2
      $region68: #{get_model_forward.5} parent=5 // pred_fallthru
        _
    $region6: #{get_model_forward.5} parent=1 // loop_footer
      %s16 = sadd.s32 1, %s12
    $region7: #{get_model_forward.5} parent=1 // loop_footer_branch
      %11 = sbr.rel target = $region3
    $region8: #{get_model_forward.5} parent=1 // loop_exit
      _
    %618 = vsyncpa [#allocation4], 1
    %s619 = scalar_lea.sflag [#allocation4], 1
    %620 = vsyncpa %s619, 1

// kernel: get_model_forward.4
$region0: #{get_model_forward.4}
  #allocation0 [shape = 'u32[]', space=smem, size = 0x4, offset = 0x4, fixed_abs, tag = 'smem constant byte address 0x4 - core index']
  #allocation1 [shape = 'u32[144,128]{1,0:T(1,128)}', space=vmem, size = 0x12000, scoped, tag = 'internal scratch']
  #allocation2 [shape = 'f32[32,128]{1,0:T(8,128)}', space=vmem, size = 0x4000, scoped, tag = 'scratch operand']
  %s0 = inlined_call_operand.vmem [shape: bf16[4,32,8], index: 0, kind: input, shape index: {}]
  %s1 = inlined_call_operand.vmem [shape: bf16[8,128], index: 1, kind: input, shape index: {}]
  %s2 = inlined_call_operand.vmem [shape: f32[1,128], index: 2, kind: input, shape index: {}]
  %s3 = inlined_call_operand.vmem [shape: bf16[128,128], index: 3, kind: input, shape index: {}]
  %s4 = inlined_call_operand.hbm [shape: f32[1,128], index: 4, kind: input, shape index: {}]
  %s5 = inlined_call_operand.vmem [shape: bf16[32,128], index: 5, kind: output, shape index: {}]
  %s6 = sld [smem:[#allocation0]]
  $region69: #{get_model_forward.4} parent=0
    _
  %s8 = ssub.s32 1, %s6
  %s9 = scalar_select 0, %s8, %s6
  $region1: #{get_model_forward.4} parent=0
    #allocation3 [shape = 'u8[512]{0}', space=vmem, size = 0x400, scoped, tag = 'input window, operand 4, single buffered']
    #allocation4 [shape = 's32[2]{0}', space=sflag, size = 0x8, scoped, tag = 'scoped memory for get_model_forward.4']
    %10 = vsyncpa [#allocation4], 0
    loop: start=0, step=1, limit=6
    $region2: #{get_model_forward.4} parent=1 // loop_pre_header
      _
    $region3: #{get_model_forward.4} parent=1 // loop_header
      %s12 = sphi 0, %s16
      %p13 = scmp.ge.s32.totalorder %s12, 6
      %s19 = sphi 0, %s31
      %s20 = sphi 0, %s27
      %s21 = sphi 0, %s19
      %s22 = sphi 0, %s20
      %s23 = sphi 0, %s21
      %s24 = sphi 0, %s22
      %s36 = sphi 0, %s38
      %s39 = sphi 0, %s36
      %s40 = sphi 0, %s39
      %s56 = sphi 0, %s40
      %s60 = sphi 0, %s60
      %s62 = sphi 0, %s60
      %s63 = sphi 0, %s62
      %s77 = sphi 0, %s63
      %s81 = sphi 0, %s81
      %s83 = sphi 0, %s81
      %s84 = sphi 0, %s83
      %s98 = sphi 0, %s84
      %s102 = sphi 0, %s102
      %s104 = sphi 0, %s102
      %s105 = sphi 0, %s104
      %s119 = sphi 0, %s105
      %s123 = sphi 0, %s123
      %s125 = sphi 0, %s123
      %s126 = sphi 0, %s125
      %s140 = sphi 0, %s126
      %s146 = sphi 0, %s148
      %s149 = sphi 0, %s146
      %s150 = sphi 0, %s149
      %s166 = sphi 0, %s150
    $region4: #{get_model_forward.4} parent=1 // loop_header_branch
      %15 = sbr.rel (%p13) target = $region8
    $region5: #{get_model_forward.4} parent=1 // loop_body
      %s17 = ssub.s32 %s12, 1
      %s18 = ssub.s32 %s12, 2
      %s25 = sadd.s32 1, %s20
      %p26 = scmp.ge.s32.totalorder %s25, 4
      %s27 = scalar_select %p26, 0, %s25
      %s28 = sadd.s32 1, %s19
      %s29 = scalar_select %p26, %s28, %s19
      %p30 = scmp.ge.s32.totalorder %s29, 1
      %s31 = scalar_select %p30, 0, %s29
      %s32 = ssub.s32 %s20, %s27
      %s33 = ssub.s32 %s19, %s31
      %s34 = sor.u32 %s32, %s33
      %p35 = scmp.eq.s32.totalorder %s34, 0
      %s37 = sadd.s32 %s36, 1
      %s38 = scalar_select %p35, %s36, %s37
      %p41 = pneg %p35
      %p42 = scmp.eq.s32.totalorder %s12, 3
      %p43 = por %p41, %p42
      %p44 = scmp.ne.s32.totalorder %s36, %s39
      %p45 = scmp.eq.s32.totalorder %s12, 0
      %p46 = por %p44, %p45
      %p47 = scmp.ne.s32.totalorder %s36, %s39
      %p48 = scmp.eq.s32.totalorder %s17, 3
      %p49 = por %p47, %p48
      %p50 = scmp.ne.s32.totalorder %s39, %s40
      %p51 = scmp.eq.s32.totalorder %s17, 0
      %p52 = por %p50, %p51
      %p53 = scmp.ne.s32.totalorder %s39, %s40
      %p54 = scmp.eq.s32.totalorder %s18, 3
      %p55 = por %p53, %p54
      %p57 = scmp.ne.s32.totalorder %s40, %s56
      %p58 = scmp.eq.s32.totalorder %s18, 0
      %p59 = por %p57, %p58
      %s61 = sadd.s32 %s60, 1
      %p64 = scmp.eq.s32.totalorder %s12, 3
      %p65 = scmp.ne.s32.totalorder %s60, %s62
      %p66 = scmp.eq.s32.totalorder %s12, 0
      %p67 = por %p65, %p66
      %p68 = scmp.ne.s32.totalorder %s60, %s62
      %p69 = scmp.eq.s32.totalorder %s17, 3
      %p70 = por %p68, %p69
      %p71 = scmp.ne.s32.totalorder %s62, %s63
      %p72 = scmp.eq.s32.totalorder %s17, 0
      %p73 = por %p71, %p72
      %p74 = scmp.ne.s32.totalorder %s62, %s63
      %p75 = scmp.eq.s32.totalorder %s18, 3
      %p76 = por %p74, %p75
      %p78 = scmp.ne.s32.totalorder %s63, %s77
      %p79 = scmp.eq.s32.totalorder %s18, 0
      %p80 = por %p78, %p79
      %s82 = sadd.s32 %s81, 1
      %p85 = scmp.eq.s32.totalorder %s12, 3
      %p86 = scmp.ne.s32.totalorder %s81, %s83
      %p87 = scmp.eq.s32.totalorder %s12, 0
      %p88 = por %p86, %p87
      %p89 = scmp.ne.s32.totalorder %s81, %s83
      %p90 = scmp.eq.s32.totalorder %s17, 3
      %p91 = por %p89, %p90
      %p92 = scmp.ne.s32.totalorder %s83, %s84
      %p93 = scmp.eq.s32.totalorder %s17, 0
      %p94 = por %p92, %p93
      %p95 = scmp.ne.s32.totalorder %s83, %s84
      %p96 = scmp.eq.s32.totalorder %s18, 3
      %p97 = por %p95, %p96
      %p99 = scmp.ne.s32.totalorder %s84, %s98
      %p100 = scmp.eq.s32.totalorder %s18, 0
      %p101 = por %p99, %p100
      %s103 = sadd.s32 %s102, 1
      %p106 = scmp.eq.s32.totalorder %s12, 3
      %p107 = scmp.ne.s32.totalorder %s102, %s104
      %p108 = scmp.eq.s32.totalorder %s12, 0
      %p109 = por %p107, %p108
      %p110 = scmp.ne.s32.totalorder %s102, %s104
      %p111 = scmp.eq.s32.totalorder %s17, 3
      %p112 = por %p110, %p111
      %p113 = scmp.ne.s32.totalorder %s104, %s105
      %p114 = scmp.eq.s32.totalorder %s17, 0
      %p115 = por %p113, %p114
      %p116 = scmp.ne.s32.totalorder %s104, %s105
      %p117 = scmp.eq.s32.totalorder %s18, 3
      %p118 = por %p116, %p117
      %p120 = scmp.ne.s32.totalorder %s105, %s119
      %p121 = scmp.eq.s32.totalorder %s18, 0
      %p122 = por %p120, %p121
      %s124 = sadd.s32 %s123, 1
      %p127 = scmp.eq.s32.totalorder %s12, 3
      %p128 = scmp.ne.s32.totalorder %s123, %s125
      %p129 = scmp.eq.s32.totalorder %s12, 0
      %p130 = por %p128, %p129
      %p131 = scmp.ne.s32.totalorder %s123, %s125
      %p132 = scmp.eq.s32.totalorder %s17, 3
      %p133 = por %p131, %p132
      %p134 = scmp.ne.s32.totalorder %s125, %s126
      %p135 = scmp.eq.s32.totalorder %s17, 0
      %p136 = por %p134, %p135
      %p137 = scmp.ne.s32.totalorder %s125, %s126
      %p138 = scmp.eq.s32.totalorder %s18, 3
      %p139 = por %p137, %p138
      %p141 = scmp.ne.s32.totalorder %s126, %s140
      %p142 = scmp.eq.s32.totalorder %s18, 0
      %p143 = por %p141, %p142
      %s144 = ssub.s32 %s19, %s31
      %p145 = scmp.eq.s32.totalorder %s144, 0
      %s147 = sadd.s32 %s146, 1
      %s148 = scalar_select %p145, %s146, %s147
      %p151 = pneg %p145
      %p152 = scmp.eq.s32.totalorder %s12, 3
      %p153 = por %p151, %p152
      %p154 = scmp.ne.s32.totalorder %s146, %s149
      %p155 = scmp.eq.s32.totalorder %s12, 0
      %p156 = por %p154, %p155
      %p157 = scmp.ne.s32.totalorder %s146, %s149
      %p158 = scmp.eq.s32.totalorder %s17, 3
      %p159 = por %p157, %p158
      %p160 = scmp.ne.s32.totalorder %s149, %s150
      %p161 = scmp.eq.s32.totalorder %s17, 0
      %p162 = por %p160, %p161
      %p163 = scmp.ne.s32.totalorder %s149, %s150
      %p164 = scmp.eq.s32.totalorder %s18, 3
      %p165 = por %p163, %p164
      %p167 = scmp.ne.s32.totalorder %s150, %s166
      %p168 = scmp.eq.s32.totalorder %s18, 0
      %p169 = por %p167, %p168
      %p170 = scmp.le.s32.totalorder 1, %s12
      %p171 = scmp.lt.s32.totalorder %s12, 5
      %p172 = pnand %p170, %p171
      %p173 = pneg %p172
      // Predicated region
      $region9: #{get_model_forward.4} parent=5 // pred_check
        _
      $region10: #{get_model_forward.4} parent=5 // pred_check_branch
        %175 = sbr.rel (%p172) target = $region12
      $region11: #{get_model_forward.4} parent=5 // pred_region
        %s176 = ssub.s32 %s12, 1
        // Predicated region
        $region13: #{get_model_forward.4} parent=11 // pred_check
          %p177 = pneg %p73
        $region14: #{get_model_forward.4} parent=11 // pred_check_branch
          %179 = sbr.rel (%p177) target = $region16
        $region15: #{get_model_forward.4} parent=11 // pred_region
          _
        $region16: #{get_model_forward.4} parent=11 // pred_fallthru
          _
        // Predicated region
        $region17: #{get_model_forward.4} parent=11 // pred_check
          %p180 = pneg %p94
        $region18: #{get_model_forward.4} parent=11 // pred_check_branch
          %182 = sbr.rel (%p180) target = $region20
        $region19: #{get_model_forward.4} parent=11 // pred_region
          _
        $region20: #{get_model_forward.4} parent=11 // pred_fallthru
          _
        // Predicated region
        $region21: #{get_model_forward.4} parent=11 // pred_check
          %p183 = pneg %p115
        $region22: #{get_model_forward.4} parent=11 // pred_check_branch
          %185 = sbr.rel (%p183) target = $region24
        $region23: #{get_model_forward.4} parent=11 // pred_region
          _
        $region24: #{get_model_forward.4} parent=11 // pred_fallthru
          _
        // Predicated region
        $region25: #{get_model_forward.4} parent=11 // pred_check
          %p186 = pneg %p136
        $region26: #{get_model_forward.4} parent=11 // pred_check_branch
          %188 = sbr.rel (%p186) target = $region28
        $region27: #{get_model_forward.4} parent=11 // pred_region
          %s190 = ssub.s32 16, 16
          %191 = vsyncadd [#allocation4], %s190
          %s193 = sshll.u32 [#allocation3], 4
          %s194 = int_to_ptr.vmem [resolvable:$true] %s193
          %196 = dma.hbm_to_vmem [thread:$0]  %s4, 16, %s194, [#allocation4]
        $region28: #{get_model_forward.4} parent=11 // pred_fallthru
          _
      $region12: #{get_model_forward.4} parent=5 // pred_fallthru
        _
      %p197 = scmp.lt.s32.totalorder %s12, 4
      // Predicated region
      $region29: #{get_model_forward.4} parent=5 // pred_check
        %p198 = pneg %p197
      $region30: #{get_model_forward.4} parent=5 // pred_check_branch
        %200 = sbr.rel (%p198) target = $region32
      $region31: #{get_model_forward.4} parent=5 // pred_region
        // Predicated region
        $region33: #{get_model_forward.4} parent=31 // pred_check
          %p201 = pneg %p46
        $region34: #{get_model_forward.4} parent=31 // pred_check_branch
          %203 = sbr.rel (%p201) target = $region36
        $region35: #{get_model_forward.4} parent=31 // pred_region
          %s204 = smul.u32 4, %s19
          %p205 = scmp.lt.s32.totalorder %s20, 3
          %s206 = scalar_select %p205, %s20, 3
          %p207 = scmp.lt.s32.totalorder %s204, 3
          %s208 = scalar_select %p207, %s204, 3
          %s209 = smul.addr %s206, 4
          %s210 = sadd.s32 %s208, %s209
          %s211 = smul.addr %s210, 4
          %s212 = scalar_lea.vmem %s0, %s211
          %s213 = smul.u32 4, %s19
        $region36: #{get_model_forward.4} parent=31 // pred_fallthru
          _
      $region32: #{get_model_forward.4} parent=5 // pred_fallthru
        _
      %p214 = scmp.le.s32.totalorder 1, %s12
      %p215 = scmp.lt.s32.totalorder %s12, 5
      %p216 = pnand %p214, %p215
      %p217 = pneg %p216
      // Predicated region
      $region37: #{get_model_forward.4} parent=5 // pred_check
        _
      $region38: #{get_model_forward.4} parent=5 // pred_check_branch
        %219 = sbr.rel (%p216) target = $region40
      $region39: #{get_model_forward.4} parent=5 // pred_region
        %s220 = ssub.s32 %s12, 1
        // Predicated region
        $region41: #{get_model_forward.4} parent=39 // pred_check
          %p221 = pneg %p136
        $region42: #{get_model_forward.4} parent=39 // pred_check_branch
          %223 = sbr.rel (%p221) target = $region44
        $region43: #{get_model_forward.4} parent=39 // pred_region
          %224 = dma.done [#allocation4], 16
        $region44: #{get_model_forward.4} parent=39 // pred_fallthru
          _
        %s225 = smul.u32 4, %s21
        %p226 = scmp.lt.s32.totalorder %s22, 3
        %s227 = scalar_select %p226, %s22, 3
        %p228 = scmp.lt.s32.totalorder %s225, 3
        %s229 = scalar_select %p228, %s225, 3
        %s230 = smul.addr %s227, 4
        %s231 = sadd.s32 %s229, %s230
        %s232 = smul.addr %s231, 4
        %s233 = scalar_lea.vmem %s0, %s232
        %p234 = pneg %p52
        %p235 = pneg %p49
        %p236 = pneg %p73
        %p237 = pneg %p70
        %p238 = pneg %p94
        %p239 = pneg %p91
        %p240 = pneg %p115
        %p241 = pneg %p112
        %p242 = pneg %p136
        %p243 = pneg %p133
        %p244 = pneg %p162
        %p245 = pneg %p159
        %s246 = smul.u32 4, %s21
        %p247 = scmp.lt.s32.totalorder %s246, 3
        %s248 = scalar_select %p247, %s246, 3
        %s249 = smul.addr %s248, 4
        %s250 = scalar_lea.vmem %s5, %s249
        %s251 = smul.u32 4, %s21
        %p252 = scmp.lt.s32.totalorder %s22, 3
        %s253 = scalar_select %p252, %s22, 3
        %p254 = scmp.lt.s32.totalorder %s251, 3
        %s255 = scalar_select %p254, %s251, 3
        %s256 = smul.addr %s253, 4
        %s257 = sadd.s32 %s255, %s256
        %s258 = smul.addr %s257, 4
        %s259 = scalar_lea.vmem %s0, %s258
        %s260 = smul.u32 4, %s21
        %s261 = smul.u32 4, %s21
        %p262 = scmp.lt.s32.totalorder %s261, 3
        %s263 = scalar_select %p262, %s261, 3
        %s264 = smul.addr %s263, 4
        %s265 = scalar_lea.vmem %s5, %s264
        %s266 = smul.u32 4, %s21
        %v268 = vld [vmem:[%s259] sm:$0xf]
        %v269 = vld [vmem:[%s259 + $0x4] sm:$0xf]
        %v270 = vld [vmem:[%s259 + $0x8] sm:$0xf]
        %v271 = vld [vmem:[%s259 + $0xc] sm:$0xf]
        %v272 = vld [vmem:[%s1] sm:$0xf]
        %v273 = vld [vmem:[%s2] sm:$0x1]
        %v275 = vlaneseq
        %v276 = vshrl.u32 %v275, 7
        %v277 = vsub.s32 0, %v276
        %v278 = vrot.slane %v273, %v277
        %v284 = vunpack.c.l.b16 %v268
        %v285 = vunpack.c.l.b16 %v269
        %v286 = vunpack.c.l.b16 %v270
        %v287 = vunpack.c.l.b16 %v271
        %v288 = vpack.c.b16 %v285, %v284
        %v289 = vpack.c.b16 %v287, %v286
        %vm290 = vcmask 64512
        %v292 = vsel %vm290, %v288, 0
        %v295 = vsel %vm290, %v289, 0
        %vm297 = vcmask 1043456
        %v299 = vsel %vm297, %v272, 0
        %301 = vmatprep.subr.bf16.mxu0 0
        %302 = vmatpush1.bf16.msra.mxu0 0
        %303 = vmatprep.subr.bf16.mxu0 0
        %304 = vmatpush1.bf16.msra.mxu0 0
        %305 = vmatprep.subr.bf16.mxu0 0
        %306 = vmatpush1.bf16.msra.mxu0 0
        %307 = vmatprep.subr.bf16.mxu0 0
        %308 = vmatpush1.bf16.msra.mxu0 0
        %309 = vmatprep.subr.bf16.mxu0 0
        %310 = vmatpush1.bf16.msra.mxu0 0
        %311 = vmatprep.subr.bf16.mxu0 0
        %312 = vmatpush1.bf16.msra.mxu0 0
        %313 = vmatprep.subr.bf16.mxu0 0
        %314 = vmatpush1.bf16.msra.mxu0 0
        %315 = vmatprep.subr.bf16.mxu0 0
        %316 = vmatpush1.bf16.msra.mxu0 %v299
        %317 = vmatprep.subr.bf16.mxu0 0
        %318 = vmatpush2.bf16.msra.mxu0 0
        %319 = vmatprep.subr.bf16.mxu0 0
        %320 = vmatpush2.bf16.msra.mxu0 0
        %321 = vmatprep.subr.bf16.mxu0 0
        %322 = vmatpush2.bf16.msra.mxu0 0
        %323 = vmatprep.subr.bf16.mxu0 0
        %324 = vmatpush2.bf16.msra.mxu0 0
        %325 = vmatprep.subr.bf16.mxu0 0
        %326 = vmatpush2.bf16.msra.mxu0 0
        %327 = vmatprep.subr.bf16.mxu0 0
        %328 = vmatpush2.bf16.msra.mxu0 0
        %329 = vmatprep.subr.bf16.mxu0 0
        %330 = vmatpush2.bf16.msra.mxu0 0
        %331 = vmatprep.subr.bf16.mxu0 0
        %332 = vmatpush2.bf16.msra.mxu0 0
        %333 = vmatprep.mubr.bf16.mxu0 0
        %334 = vmatmul.mubr.bf16.gmra.mxu0 %v292
        %v335 = vpop.f32.mrf.mxu0
        %v336 = vadd.f32 %v278, %v335
        %v337 = vpop.f32.mrf.mxu0
        %v338 = vpop.f32.mrf.mxu0
        %v339 = vadd.f32 %v278, %v338
        %v340 = vpop.f32.mrf.mxu0
        %341 = vmatprep.mubr.bf16.mxu0 0
        %342 = vmatmul.mubr.bf16.gmra.mxu0 %v295
        %v343 = vpop.f32.mrf.mxu0
        %v344 = vadd.f32 %v278, %v343
        %v345 = vpop.f32.mrf.mxu0
        %v346 = vpop.f32.mrf.mxu0
        %v347 = vadd.f32 %v278, %v346
        %v348 = vpop.f32.mrf.mxu0
        %349 = vdwg.mxu0
        %v350 = vmax.f32 %v336, 0.0
        %v351 = vmax.f32 %v339, 0.0
        %v352 = vmax.f32 %v344, 0.0
        %v353 = vmax.f32 %v347, 0.0
        %v354 = vpack.c.bf16 %v351, %v350
        %v355 = vpack.c.bf16 %v353, %v352
        %v356 = vld [vmem:[%s3] sm:$0xf]
        %v357 = vld [vmem:[%s3 + $0x4] sm:$0xf]
        %v358 = vld [vmem:[%s3 + $0x8] sm:$0xf]
        %v359 = vld [vmem:[%s3 + $0xc] sm:$0xf]
        %v360 = vld [vmem:[%s3 + $0x10] sm:$0xf]
        %v361 = vld [vmem:[%s3 + $0x14] sm:$0xf]
        %v362 = vld [vmem:[%s3 + $0x18] sm:$0xf]
        %v363 = vld [vmem:[%s3 + $0x1c] sm:$0xf]
        %v364 = vld [vmem:[%s3 + $0x20] sm:$0xf]
        %v365 = vld [vmem:[%s3 + $0x24] sm:$0xf]
        %v366 = vld [vmem:[%s3 + $0x28] sm:$0xf]
        %v367 = vld [vmem:[%s3 + $0x2c] sm:$0xf]
        %v368 = vld [vmem:[%s3 + $0x30] sm:$0xf]
        %v369 = vld [vmem:[%s3 + $0x34] sm:$0xf]
        %v370 = vld [vmem:[%s3 + $0x38] sm:$0xf]
        %v371 = vld [vmem:[%s3 + $0x3c] sm:$0xf]
        %v372 = vld [vmem:[#allocation3] sm:$0x1]
        %v374 = vlaneseq
        %v375 = vshrl.u32 %v374, 7
        %v376 = vsub.s32 0, %v375
        %v377 = vrot.slane %v372, %v376
        %v395 = vunpack.c.l.b16 %v356
        %v396 = vunpack.c.l.b16 %v357
        %v397 = vunpack.c.l.b16 %v358
        %v398 = vunpack.c.l.b16 %v359
        %v399 = vunpack.c.l.b16 %v360
        %v400 = vunpack.c.l.b16 %v361
        %v401 = vunpack.c.l.b16 %v362
        %v402 = vunpack.c.l.b16 %v363
        %v403 = vunpack.c.l.b16 %v364
        %v404 = vunpack.c.l.b16 %v365
        %v405 = vunpack.c.l.b16 %v366
        %v406 = vunpack.c.l.b16 %v367
        %v407 = vunpack.c.l.b16 %v368
        %v408 = vunpack.c.l.b16 %v369
        %v409 = vunpack.c.l.b16 %v370
        %v410 = vunpack.c.l.b16 %v371
        %v411 = vpack.c.b16 %v396, %v395
        %v412 = vpack.c.b16 %v398, %v397
        %v413 = vpack.c.b16 %v400, %v399
        %v414 = vpack.c.b16 %v402, %v401
        %v415 = vpack.c.b16 %v404, %v403
        %v416 = vpack.c.b16 %v406, %v405
        %v417 = vpack.c.b16 %v408, %v407
        %v418 = vpack.c.b16 %v410, %v409
        %427 = vmatprep.subr.bf16.mxu0 0
        %428 = vmatpush1.bf16.msra.mxu0 %v418
        %429 = vmatprep.subr.bf16.mxu0 0
        %430 = vmatpush1.bf16.msra.mxu0 %v417
        %431 = vmatprep.subr.bf16.mxu0 0
        %432 = vmatpush1.bf16.msra.mxu0 %v416
        %433 = vmatprep.subr.bf16.mxu0 0
        %434 = vmatpush1.bf16.msra.mxu0 %v415
        %435 = vmatprep.subr.bf16.mxu0 0
        %436 = vmatpush1.bf16.msra.mxu0 %v414
        %437 = vmatprep.subr.bf16.mxu0 0
        %438 = vmatpush1.bf16.msra.mxu0 %v413
        %439 = vmatprep.subr.bf16.mxu0 0
        %440 = vmatpush1.bf16.msra.mxu0 %v412
        %441 = vmatprep.subr.bf16.mxu0 0
        %442 = vmatpush1.bf16.msra.mxu0 %v411
        %443 = vmatprep.subr.bf16.mxu0 0
        %444 = vmatpush2.bf16.msra.mxu0 0
        %445 = vmatprep.subr.bf16.mxu0 0
        %446 = vmatpush2.bf16.msra.mxu0 0
        %447 = vmatprep.subr.bf16.mxu0 0
        %448 = vmatpush2.bf16.msra.mxu0 0
        %449 = vmatprep.subr.bf16.mxu0 0
        %450 = vmatpush2.bf16.msra.mxu0 0
        %451 = vmatprep.subr.bf16.mxu0 0
        %452 = vmatpush2.bf16.msra.mxu0 0
        %453 = vmatprep.subr.bf16.mxu0 0
        %454 = vmatpush2.bf16.msra.mxu0 0
        %455 = vmatprep.subr.bf16.mxu0 0
        %456 = vmatpush2.bf16.msra.mxu0 0
        %457 = vmatprep.subr.bf16.mxu0 0
        %458 = vmatpush2.bf16.msra.mxu0 0
        %459 = vmatprep.mubr.bf16.mxu0 0
        %460 = vmatmul.mubr.bf16.gmra.mxu0 %v354
        %v461 = vpop.f32.mrf.mxu0
        %v462 = vadd.f32 %v377, %v461
        %v463 = vpop.f32.mrf.mxu0
        %v464 = vpop.f32.mrf.mxu0
        %v465 = vadd.f32 %v377, %v464
        %v466 = vpop.f32.mrf.mxu0
        %467 = vmatprep.mubr.bf16.mxu0 0
        %468 = vmatmul.mubr.bf16.gmra.mxu0 %v355
        %v469 = vpop.f32.mrf.mxu0
        %v470 = vadd.f32 %v377, %v469
        %v471 = vpop.f32.mrf.mxu0
        %v472 = vpop.f32.mrf.mxu0
        %v473 = vadd.f32 %v377, %v472
        %v474 = vpop.f32.mrf.mxu0
        %475 = vdwg.mxu0
        %v476 = vmax.f32 %v462, 0.0
        %v477 = vmax.f32 %v465, 0.0
        %v478 = vmax.f32 %v470, 0.0
        %v479 = vmax.f32 %v473, 0.0
        %p480 = scmp.eq.s32.totalorder %s22, 0
        // Predicated region
        $region45: #{get_model_forward.4} parent=39 // pred_check
          %p481 = pneg %p480
        $region46: #{get_model_forward.4} parent=39 // pred_check_branch
          %483 = sbr.rel (%p481) target = $region48
        $region47: #{get_model_forward.4} parent=39 // pred_region
          %484 = vst [vmem:[#allocation2] sm:$0xff] %v476
          %485 = vst [vmem:[#allocation2 + $0x8] sm:$0xff] %v477
          %486 = vst [vmem:[#allocation2 + $0x10] sm:$0xff] %v478
          %487 = vst [vmem:[#allocation2 + $0x18] sm:$0xff] %v479
        $region48: #{get_model_forward.4} parent=39 // pred_fallthru
          _
        %p488 = scmp.gt.s32.totalorder %s22, 0
        // Predicated region
        $region49: #{get_model_forward.4} parent=39 // pred_check
          %p489 = pneg %p488
        $region50: #{get_model_forward.4} parent=39 // pred_check_branch
          %491 = sbr.rel (%p489) target = $region52
        $region51: #{get_model_forward.4} parent=39 // pred_region
          %v492 = vld [vmem:[#allocation2] sm:$0xff]
          %v493 = vld [vmem:[#allocation2 + $0x8] sm:$0xff]
          %v494 = vld [vmem:[#allocation2 + $0x10] sm:$0xff]
          %v495 = vld [vmem:[#allocation2 + $0x18] sm:$0xff]
          %v496 = vmax.f32 %v492, %v476
          %v497 = vmax.f32 %v493, %v477
          %v498 = vmax.f32 %v494, %v478
          %v499 = vmax.f32 %v495, %v479
          %500 = vst [vmem:[#allocation2] sm:$0xff] %v496
          %501 = vst [vmem:[#allocation2 + $0x8] sm:$0xff] %v497
          %502 = vst [vmem:[#allocation2 + $0x10] sm:$0xff] %v498
          %503 = vst [vmem:[#allocation2 + $0x18] sm:$0xff] %v499
        $region52: #{get_model_forward.4} parent=39 // pred_fallthru
          _
        %p504 = scmp.eq.s32.totalorder %s22, 3
        // Predicated region
        $region53: #{get_model_forward.4} parent=39 // pred_check
          %p505 = pneg %p504
        $region54: #{get_model_forward.4} parent=39 // pred_check_branch
          %507 = sbr.rel (%p505) target = $region56
        $region55: #{get_model_forward.4} parent=39 // pred_region
          %v508 = vld [vmem:[#allocation2] sm:$0xff]
          %v509 = vld [vmem:[#allocation2 + $0x8] sm:$0xff]
          %v510 = vld [vmem:[#allocation2 + $0x10] sm:$0xff]
          %v511 = vld [vmem:[#allocation2 + $0x18] sm:$0xff]
          %v512 = vpack.c.bf16 %v509, %v508
          %v513 = vpack.c.bf16 %v511, %v510
          %v516 = vunpack.c.l.b16 %v512
          %v517 = vunpack.c.h.b16 %v512
          %v518 = vunpack.c.l.b16 %v513
          %v519 = vunpack.c.h.b16 %v513
          %v520 = vpack.c.b16 %v516, %v516
          %v521 = vpack.c.b16 %v517, %v517
          %v522 = vpack.c.b16 %v518, %v518
          %v523 = vpack.c.b16 %v519, %v519
          %528 = vst [vmem:[%s265] sm:$0xf] %v520
          %529 = vst [vmem:[%s265 + $0x4] sm:$0xf] %v521
          %530 = vst [vmem:[%s265 + $0x8] sm:$0xf] %v522
          %531 = vst [vmem:[%s265 + $0xc] sm:$0xf] %v523
        $region56: #{get_model_forward.4} parent=39 // pred_fallthru
          _
        %s532 = smul.u32 4, %s21
        %p533 = scmp.lt.s32.totalorder %s532, 3
        %s534 = scalar_select %p533, %s532, 3
        %s535 = smul.addr %s534, 4
        %s536 = scalar_lea.vmem %s5, %s535
        // Predicated region
        $region57: #{get_model_forward.4} parent=39 // pred_check
          %p537 = pneg %p159
        $region58: #{get_model_forward.4} parent=39 // pred_check_branch
          %539 = sbr.rel (%p537) target = $region60
        $region59: #{get_model_forward.4} parent=39 // pred_region
          %s540 = smul.u32 4, %s21
        $region60: #{get_model_forward.4} parent=39 // pred_fallthru
          _
        // Predicated region
        $region61: #{get_model_forward.4} parent=39 // pred_check
          %p541 = pneg %p159
        $region62: #{get_model_forward.4} parent=39 // pred_check_branch
          %543 = sbr.rel (%p541) target = $region64
        $region63: #{get_model_forward.4} parent=39 // pred_region
          %s544 = smul.u32 4, %s21
          %p545 = scmp.lt.s32.totalorder %s544, 3
          %s546 = scalar_select %p545, %s544, 3
          %s547 = smul.addr %s546, 4
          %s548 = scalar_lea.vmem %s5, %s547
        $region64: #{get_model_forward.4} parent=39 // pred_fallthru
          _
      $region40: #{get_model_forward.4} parent=5 // pred_fallthru
        _
      %p549 = scmp.le.s32.totalorder 2, %s12
      // Predicated region
      $region65: #{get_model_forward.4} parent=5 // pred_check
        %p550 = pneg %p549
      $region66: #{get_model_forward.4} parent=5 // pred_check_branch
        %552 = sbr.rel (%p550) target = $region68
      $region67: #{get_model_forward.4} parent=5 // pred_region
        %s553 = ssub.s32 %s12, 2
      $region68: #{get_model_forward.4} parent=5 // pred_fallthru
        _
    $region6: #{get_model_forward.4} parent=1 // loop_footer
      %s16 = sadd.s32 1, %s12
    $region7: #{get_model_forward.4} parent=1 // loop_footer_branch
      %11 = sbr.rel target = $region3
    $region8: #{get_model_forward.4} parent=1 // loop_exit
      _
    %554 = vsyncpa [#allocation4], 1
    %s555 = scalar_lea.sflag [#allocation4], 1
    %556 = vsyncpa %s555, 1

// kernel: get_model_forward.6
$region0: #{get_model_forward.6}
  #allocation0 [shape = 'u32[]', space=smem, size = 0x4, offset = 0x4, fixed_abs, tag = 'smem constant byte address 0x4 - core index']
  #allocation1 [shape = 'u32[144,128]{1,0:T(1,128)}', space=vmem, size = 0x12000, scoped, tag = 'internal scratch']
  #allocation2 [shape = 'f32[8,1024]{1,0:T(8,128)}', space=vmem, size = 0x8000, scoped, tag = 'scratch operand']
  %s0 = inlined_call_operand.vmem [shape: bf16[8,8,256], index: 0, kind: input, shape index: {}]
  %s1 = inlined_call_operand.vmem [shape: bf16[256,128], index: 1, kind: input, shape index: {}]
  %s2 = inlined_call_operand.hbm [shape: f32[1,128], index: 2, kind: input, shape index: {}]
  %s3 = inlined_call_operand.vmem [shape: bf16[128,1024], index: 3, kind: input, shape index: {}]
  %s4 = inlined_call_operand.hbm [shape: f32[1,1024], index: 4, kind: input, shape index: {}]
  %s5 = inlined_call_operand.vmem [shape: bf16[8,1024], index: 5, kind: output, shape index: {}]
  %s6 = sld [smem:[#allocation0]]
  $region73: #{get_model_forward.6} parent=0
    _
  %s8 = ssub.s32 1, %s6
  %s9 = scalar_select 0, %s8, %s6
  $region1: #{get_model_forward.6} parent=0
    #allocation3 [shape = 'u8[512]{0}', space=vmem, size = 0x400, scoped, tag = 'input window, operand 2, single buffered']
    #allocation4 [shape = 's32[2]{0}', space=sflag, size = 0x8, scoped, tag = 'scoped memory for get_model_forward.6']
    #allocation5 [shape = 'u8[4096]{0}', space=vmem, size = 0x1000, scoped, tag = 'input window, operand 4, single buffered']
    #allocation6 [shape = 's32[1]{0}', space=sflag, size = 0x4, scoped, tag = 'scoped memory for get_model_forward.6']
    %10 = vsyncpa [#allocation4], 0
    %11 = vsyncpa [#allocation6], 0
    loop: start=0, step=1, limit=10
    $region2: #{get_model_forward.6} parent=1 // loop_pre_header
      _
    $region3: #{get_model_forward.6} parent=1 // loop_header
      %s13 = sphi 0, %s17
      %p14 = scmp.ge.s32.totalorder %s13, 10
      %s20 = sphi 0, %s32
      %s21 = sphi 0, %s28
      %s22 = sphi 0, %s20
      %s23 = sphi 0, %s21
      %s24 = sphi 0, %s22
      %s25 = sphi 0, %s23
      %s37 = sphi 0, %s39
      %s40 = sphi 0, %s37
      %s41 = sphi 0, %s40
      %s57 = sphi 0, %s41
      %s61 = sphi 0, %s61
      %s63 = sphi 0, %s61
      %s64 = sphi 0, %s63
      %s78 = sphi 0, %s64
      %s82 = sphi 0, %s82
      %s84 = sphi 0, %s82
      %s85 = sphi 0, %s84
      %s99 = sphi 0, %s85
      %s103 = sphi 0, %s103
      %s105 = sphi 0, %s103
      %s106 = sphi 0, %s105
      %s120 = sphi 0, %s106
      %s124 = sphi 0, %s124
      %s126 = sphi 0, %s124
      %s127 = sphi 0, %s126
      %s141 = sphi 0, %s127
      %s147 = sphi 0, %s149
      %s150 = sphi 0, %s147
      %s151 = sphi 0, %s150
      %s167 = sphi 0, %s151
    $region4: #{get_model_forward.6} parent=1 // loop_header_branch
      %16 = sbr.rel (%p14) target = $region8
    $region5: #{get_model_forward.6} parent=1 // loop_body
      %s18 = ssub.s32 %s13, 1
      %s19 = ssub.s32 %s13, 2
      %s26 = sadd.s32 1, %s21
      %p27 = scmp.ge.s32.totalorder %s26, 8
      %s28 = scalar_select %p27, 0, %s26
      %s29 = sadd.s32 1, %s20
      %s30 = scalar_select %p27, %s29, %s20
      %p31 = scmp.ge.s32.totalorder %s30, 1
      %s32 = scalar_select %p31, 0, %s30
      %s33 = ssub.s32 %s21, %s28
      %s34 = ssub.s32 %s20, %s32
      %s35 = sor.u32 %s33, %s34
      %p36 = scmp.eq.s32.totalorder %s35, 0
      %s38 = sadd.s32 %s37, 1
      %s39 = scalar_select %p36, %s37, %s38
      %p42 = pneg %p36
      %p43 = scmp.eq.s32.totalorder %s13, 7
      %p44 = por %p42, %p43
      %p45 = scmp.ne.s32.totalorder %s37, %s40
      %p46 = scmp.eq.s32.totalorder %s13, 0
      %p47 = por %p45, %p46
      %p48 = scmp.ne.s32.totalorder %s37, %s40
      %p49 = scmp.eq.s32.totalorder %s18, 7
      %p50 = por %p48, %p49
      %p51 = scmp.ne.s32.totalorder %s40, %s41
      %p52 = scmp.eq.s32.totalorder %s18, 0
      %p53 = por %p51, %p52
      %p54 = scmp.ne.s32.totalorder %s40, %s41
      %p55 = scmp.eq.s32.totalorder %s19, 7
      %p56 = por %p54, %p55
      %p58 = scmp.ne.s32.totalorder %s41, %s57
      %p59 = scmp.eq.s32.totalorder %s19, 0
      %p60 = por %p58, %p59
      %s62 = sadd.s32 %s61, 1
      %p65 = scmp.eq.s32.totalorder %s13, 7
      %p66 = scmp.ne.s32.totalorder %s61, %s63
      %p67 = scmp.eq.s32.totalorder %s13, 0
      %p68 = por %p66, %p67
      %p69 = scmp.ne.s32.totalorder %s61, %s63
      %p70 = scmp.eq.s32.totalorder %s18, 7
      %p71 = por %p69, %p70
      %p72 = scmp.ne.s32.totalorder %s63, %s64
      %p73 = scmp.eq.s32.totalorder %s18, 0
      %p74 = por %p72, %p73
      %p75 = scmp.ne.s32.totalorder %s63, %s64
      %p76 = scmp.eq.s32.totalorder %s19, 7
      %p77 = por %p75, %p76
      %p79 = scmp.ne.s32.totalorder %s64, %s78
      %p80 = scmp.eq.s32.totalorder %s19, 0
      %p81 = por %p79, %p80
      %s83 = sadd.s32 %s82, 1
      %p86 = scmp.eq.s32.totalorder %s13, 7
      %p87 = scmp.ne.s32.totalorder %s82, %s84
      %p88 = scmp.eq.s32.totalorder %s13, 0
      %p89 = por %p87, %p88
      %p90 = scmp.ne.s32.totalorder %s82, %s84
      %p91 = scmp.eq.s32.totalorder %s18, 7
      %p92 = por %p90, %p91
      %p93 = scmp.ne.s32.totalorder %s84, %s85
      %p94 = scmp.eq.s32.totalorder %s18, 0
      %p95 = por %p93, %p94
      %p96 = scmp.ne.s32.totalorder %s84, %s85
      %p97 = scmp.eq.s32.totalorder %s19, 7
      %p98 = por %p96, %p97
      %p100 = scmp.ne.s32.totalorder %s85, %s99
      %p101 = scmp.eq.s32.totalorder %s19, 0
      %p102 = por %p100, %p101
      %s104 = sadd.s32 %s103, 1
      %p107 = scmp.eq.s32.totalorder %s13, 7
      %p108 = scmp.ne.s32.totalorder %s103, %s105
      %p109 = scmp.eq.s32.totalorder %s13, 0
      %p110 = por %p108, %p109
      %p111 = scmp.ne.s32.totalorder %s103, %s105
      %p112 = scmp.eq.s32.totalorder %s18, 7
      %p113 = por %p111, %p112
      %p114 = scmp.ne.s32.totalorder %s105, %s106
      %p115 = scmp.eq.s32.totalorder %s18, 0
      %p116 = por %p114, %p115
      %p117 = scmp.ne.s32.totalorder %s105, %s106
      %p118 = scmp.eq.s32.totalorder %s19, 7
      %p119 = por %p117, %p118
      %p121 = scmp.ne.s32.totalorder %s106, %s120
      %p122 = scmp.eq.s32.totalorder %s19, 0
      %p123 = por %p121, %p122
      %s125 = sadd.s32 %s124, 1
      %p128 = scmp.eq.s32.totalorder %s13, 7
      %p129 = scmp.ne.s32.totalorder %s124, %s126
      %p130 = scmp.eq.s32.totalorder %s13, 0
      %p131 = por %p129, %p130
      %p132 = scmp.ne.s32.totalorder %s124, %s126
      %p133 = scmp.eq.s32.totalorder %s18, 7
      %p134 = por %p132, %p133
      %p135 = scmp.ne.s32.totalorder %s126, %s127
      %p136 = scmp.eq.s32.totalorder %s18, 0
      %p137 = por %p135, %p136
      %p138 = scmp.ne.s32.totalorder %s126, %s127
      %p139 = scmp.eq.s32.totalorder %s19, 7
      %p140 = por %p138, %p139
      %p142 = scmp.ne.s32.totalorder %s127, %s141
      %p143 = scmp.eq.s32.totalorder %s19, 0
      %p144 = por %p142, %p143
      %s145 = ssub.s32 %s20, %s32
      %p146 = scmp.eq.s32.totalorder %s145, 0
      %s148 = sadd.s32 %s147, 1
      %s149 = scalar_select %p146, %s147, %s148
      %p152 = pneg %p146
      %p153 = scmp.eq.s32.totalorder %s13, 7
      %p154 = por %p152, %p153
      %p155 = scmp.ne.s32.totalorder %s147, %s150
      %p156 = scmp.eq.s32.totalorder %s13, 0
      %p157 = por %p155, %p156
      %p158 = scmp.ne.s32.totalorder %s147, %s150
      %p159 = scmp.eq.s32.totalorder %s18, 7
      %p160 = por %p158, %p159
      %p161 = scmp.ne.s32.totalorder %s150, %s151
      %p162 = scmp.eq.s32.totalorder %s18, 0
      %p163 = por %p161, %p162
      %p164 = scmp.ne.s32.totalorder %s150, %s151
      %p165 = scmp.eq.s32.totalorder %s19, 7
      %p166 = por %p164, %p165
      %p168 = scmp.ne.s32.totalorder %s151, %s167
      %p169 = scmp.eq.s32.totalorder %s19, 0
      %p170 = por %p168, %p169
      %p171 = scmp.le.s32.totalorder 1, %s13
      %p172 = scmp.lt.s32.totalorder %s13, 9
      %p173 = pnand %p171, %p172
      %p174 = pneg %p173
      // Predicated region
      $region9: #{get_model_forward.6} parent=5 // pred_check
        _
      $region10: #{get_model_forward.6} parent=5 // pred_check_branch
        %176 = sbr.rel (%p173) target = $region12
      $region11: #{get_model_forward.6} parent=5 // pred_region
        %s177 = ssub.s32 %s13, 1
        // Predicated region
        $region13: #{get_model_forward.6} parent=11 // pred_check
          %p178 = pneg %p74
        $region14: #{get_model_forward.6} parent=11 // pred_check_branch
          %180 = sbr.rel (%p178) target = $region16
        $region15: #{get_model_forward.6} parent=11 // pred_region
          _
        $region16: #{get_model_forward.6} parent=11 // pred_fallthru
          _
        // Predicated region
        $region17: #{get_model_forward.6} parent=11 // pred_check
          %p181 = pneg %p95
        $region18: #{get_model_forward.6} parent=11 // pred_check_branch
          %183 = sbr.rel (%p181) target = $region20
        $region19: #{get_model_forward.6} parent=11 // pred_region
          %s185 = ssub.s32 16, 16
          %186 = vsyncadd [#allocation4], %s185
          %s188 = sshll.u32 [#allocation3], 4
          %s189 = int_to_ptr.vmem [resolvable:$true] %s188
          %191 = dma.hbm_to_vmem [thread:$0]  %s2, 16, %s189, [#allocation4]
        $region20: #{get_model_forward.6} parent=11 // pred_fallthru
          _
        // Predicated region
        $region21: #{get_model_forward.6} parent=11 // pred_check
          %p192 = pneg %p116
        $region22: #{get_model_forward.6} parent=11 // pred_check_branch
          %194 = sbr.rel (%p192) target = $region24
        $region23: #{get_model_forward.6} parent=11 // pred_region
          _
        $region24: #{get_model_forward.6} parent=11 // pred_fallthru
          _
        // Predicated region
        $region25: #{get_model_forward.6} parent=11 // pred_check
          %p195 = pneg %p137
        $region26: #{get_model_forward.6} parent=11 // pred_check_branch
          %197 = sbr.rel (%p195) target = $region28
        $region27: #{get_model_forward.6} parent=11 // pred_region
          %s199 = ssub.s32 128, 128
          %200 = vsyncadd [#allocation6], %s199
          %s202 = sshll.u32 [#allocation5], 4
          %s203 = int_to_ptr.vmem [resolvable:$true] %s202
          %205 = dma.hbm_to_vmem [thread:$0]  %s4, 128, %s203, [#allocation6]
        $region28: #{get_model_forward.6} parent=11 // pred_fallthru
          _
      $region12: #{get_model_forward.6} parent=5 // pred_fallthru
        _
      %p206 = scmp.lt.s32.totalorder %s13, 8
      // Predicated region
      $region29: #{get_model_forward.6} parent=5 // pred_check
        %p207 = pneg %p206
      $region30: #{get_model_forward.6} parent=5 // pred_check_branch
        %209 = sbr.rel (%p207) target = $region32
      $region31: #{get_model_forward.6} parent=5 // pred_region
        // Predicated region
        $region33: #{get_model_forward.6} parent=31 // pred_check
          %p210 = pneg %p47
        $region34: #{get_model_forward.6} parent=31 // pred_check_branch
          %212 = sbr.rel (%p210) target = $region36
        $region35: #{get_model_forward.6} parent=31 // pred_region
          %p213 = scmp.lt.s32.totalorder %s21, 7
          %s214 = scalar_select %p213, %s21, 7
          %p215 = scmp.lt.s32.totalorder %s20, 0
          %s216 = scalar_select %p215, %s20, 0
          %s217 = smul.addr %s216, 2
          %s218 = smul.addr %s214, 2
          %s219 = sadd.s32 %s217, %s218
          %s220 = smul.addr %s219, 4
          %s221 = scalar_lea.vmem %s0, %s220
        $region36: #{get_model_forward.6} parent=31 // pred_fallthru
          _
      $region32: #{get_model_forward.6} parent=5 // pred_fallthru
        _
      %p222 = scmp.le.s32.totalorder 1, %s13
      %p223 = scmp.lt.s32.totalorder %s13, 9
      %p224 = pnand %p222, %p223
      %p225 = pneg %p224
      // Predicated region
      $region37: #{get_model_forward.6} parent=5 // pred_check
        _
      $region38: #{get_model_forward.6} parent=5 // pred_check_branch
        %227 = sbr.rel (%p224) target = $region40
      $region39: #{get_model_forward.6} parent=5 // pred_region
        %s228 = ssub.s32 %s13, 1
        // Predicated region
        $region41: #{get_model_forward.6} parent=39 // pred_check
          %p229 = pneg %p95
        $region42: #{get_model_forward.6} parent=39 // pred_check_branch
          %231 = sbr.rel (%p229) target = $region44
        $region43: #{get_model_forward.6} parent=39 // pred_region
          %232 = dma.done [#allocation4], 16
        $region44: #{get_model_forward.6} parent=39 // pred_fallthru
          _
        // Predicated region
        $region45: #{get_model_forward.6} parent=39 // pred_check
          %p233 = pneg %p137
        $region46: #{get_model_forward.6} parent=39 // pred_check_branch
          %235 = sbr.rel (%p233) target = $region48
        $region47: #{get_model_forward.6} parent=39 // pred_region
          %236 = dma.done [#allocation6], 128
        $region48: #{get_model_forward.6} parent=39 // pred_fallthru
          _
        %p237 = scmp.lt.s32.totalorder %s23, 7
        %s238 = scalar_select %p237, %s23, 7
        %p239 = scmp.lt.s32.totalorder %s22, 0
        %s240 = scalar_select %p239, %s22, 0
        %s241 = smul.addr %s240, 2
        %s242 = smul.addr %s238, 2
        %s243 = sadd.s32 %s241, %s242
        %s244 = smul.addr %s243, 4
        %s245 = scalar_lea.vmem %s0, %s244
        %p246 = pneg %p53
        %p247 = pneg %p50
        %p248 = pneg %p74
        %p249 = pneg %p71
        %p250 = pneg %p95
        %p251 = pneg %p92
        %p252 = pneg %p116
        %p253 = pneg %p113
        %p254 = pneg %p137
        %p255 = pneg %p134
        %p256 = pneg %p163
        %p257 = pneg %p160
        %p258 = scmp.lt.s32.totalorder %s22, 0
        %s259 = scalar_select %p258, %s22, 0
        %s260 = smul.addr %s259, 8
        %s261 = smul.addr %s260, 4
        %s262 = scalar_lea.vmem %s5, %s261
        %p263 = scmp.lt.s32.totalorder %s23, 7
        %s264 = scalar_select %p263, %s23, 7
        %p265 = scmp.lt.s32.totalorder %s22, 0
        %s266 = scalar_select %p265, %s22, 0
        %s267 = smul.addr %s266, 2
        %s268 = smul.addr %s264, 2
        %s269 = sadd.s32 %s267, %s268
        %s270 = smul.addr %s269, 4
        %s271 = scalar_lea.vmem %s0, %s270
        %p272 = scmp.lt.s32.totalorder %s22, 0
        %s273 = scalar_select %p272, %s22, 0
        %s274 = smul.addr %s273, 8
        %s275 = smul.addr %s274, 4
        %s276 = scalar_lea.vmem %s5, %s275
        %v278 = vld [vmem:[%s271] sm:$0xff]
        %v279 = vld [vmem:[%s1] sm:$0xf]
        %v280 = vld [vmem:[%s1 + $0x4] sm:$0xf]
        %v281 = vld [vmem:[%s1 + $0x8] sm:$0xf]
        %v282 = vld [vmem:[%s1 + $0xc] sm:$0xf]
        %v283 = vld [vmem:[%s1 + $0x10] sm:$0xf]
        %v284 = vld [vmem:[%s1 + $0x14] sm:$0xf]
        %v285 = vld [vmem:[%s1 + $0x18] sm:$0xf]
        %v286 = vld [vmem:[%s1 + $0x1c] sm:$0xf]
        %v287 = vld [vmem:[%s1 + $0x20] sm:$0xf]
        %v288 = vld [vmem:[%s1 + $0x24] sm:$0xf]
        %v289 = vld [vmem:[%s1 + $0x28] sm:$0xf]
        %v290 = vld [vmem:[%s1 + $0x2c] sm:$0xf]
        %v291 = vld [vmem:[%s1 + $0x30] sm:$0xf]
        %v292 = vld [vmem:[%s1 + $0x34] sm:$0xf]
        %v293 = vld [vmem:[%s1 + $0x38] sm:$0xf]
        %v294 = vld [vmem:[%s1 + $0x3c] sm:$0xf]
        %v295 = vld [vmem:[%s1 + $0x40] sm:$0xf]
        %v296 = vld [vmem:[%s1 + $0x44] sm:$0xf]
        %v297 = vld [vmem:[%s1 + $0x48] sm:$0xf]
        %v298 = vld [vmem:[%s1 + $0x4c] sm:$0xf]
        %v299 = vld [vmem:[%s1 + $0x50] sm:$0xf]
        %v300 = vld [vmem:[%s1 + $0x54] sm:$0xf]
        %v301 = vld [vmem:[%s1 + $0x58] sm:$0xf]
        %v302 = vld [vmem:[%s1 + $0x5c] sm:$0xf]
        %v303 = vld [vmem:[%s1 + $0x60] sm:$0xf]
        %v304 = vld [vmem:[%s1 + $0x64] sm:$0xf]
        %v305 = vld [vmem:[%s1 + $0x68] sm:$0xf]
        %v306 = vld [vmem:[%s1 + $0x6c] sm:$0xf]
        %v307 = vld [vmem:[%s1 + $0x70] sm:$0xf]
        %v308 = vld [vmem:[%s1 + $0x74] sm:$0xf]
        %v309 = vld [vmem:[%s1 + $0x78] sm:$0xf]
        %v310 = vld [vmem:[%s1 + $0x7c] sm:$0xf]
        %v311 = vld [vmem:[#allocation3] sm:$0x1]
        %v313 = vlaneseq
        %v314 = vshrl.u32 %v313, 7
        %v315 = vsub.s32 0, %v314
        %v316 = vrot.slane %v311, %v315
        %v319 = vunpack.c.l.b16 %v278
        %v320 = vunpack.c.h.b16 %v278
        %v321 = vpack.c.b16 %v319, %v319
        %v322 = vpack.c.b16 %v320, %v320
        %v357 = vunpack.c.l.b16 %v279
        %v358 = vunpack.c.l.b16 %v280
        %v359 = vunpack.c.l.b16 %v281
        %v360 = vunpack.c.l.b16 %v282
        %v361 = vunpack.c.l.b16 %v283
        %v362 = vunpack.c.l.b16 %v284
        %v363 = vunpack.c.l.b16 %v285
        %v364 = vunpack.c.l.b16 %v286
        %v365 = vunpack.c.l.b16 %v287
        %v366 = vunpack.c.l.b16 %v288
        %v367 = vunpack.c.l.b16 %v289
        %v368 = vunpack.c.l.b16 %v290
        %v369 = vunpack.c.l.b16 %v291
        %v370 = vunpack.c.l.b16 %v292
        %v371 = vunpack.c.l.b16 %v293
        %v372 = vunpack.c.l.b16 %v294
        %v373 = vunpack.c.l.b16 %v295
        %v374 = vunpack.c.l.b16 %v296
        %v375 = vunpack.c.l.b16 %v297
        %v376 = vunpack.c.l.b16 %v298
        %v377 = vunpack.c.l.b16 %v299
        %v378 = vunpack.c.l.b16 %v300
        %v379 = vunpack.c.l.b16 %v301
        %v380 = vunpack.c.l.b16 %v302
        %v381 = vunpack.c.l.b16 %v303
        %v382 = vunpack.c.l.b16 %v304
        %v383 = vunpack.c.l.b16 %v305
        %v384 = vunpack.c.l.b16 %v306
        %v385 = vunpack.c.l.b16 %v307
        %v386 = vunpack.c.l.b16 %v308
        %v387 = vunpack.c.l.b16 %v309
        %v388 = vunpack.c.l.b16 %v310
        %v389 = vpack.c.b16 %v358, %v357
        %v390 = vpack.c.b16 %v360, %v359
        %v391 = vpack.c.b16 %v362, %v361
        %v392 = vpack.c.b16 %v364, %v363
        %v393 = vpack.c.b16 %v366, %v365
        %v394 = vpack.c.b16 %v368, %v367
        %v395 = vpack.c.b16 %v370, %v369
        %v396 = vpack.c.b16 %v372, %v371
        %v397 = vpack.c.b16 %v374, %v373
        %v398 = vpack.c.b16 %v376, %v375
        %v399 = vpack.c.b16 %v378, %v377
        %v400 = vpack.c.b16 %v380, %v379
        %v401 = vpack.c.b16 %v382, %v381
        %v402 = vpack.c.b16 %v384, %v383
        %v403 = vpack.c.b16 %v386, %v385
        %v404 = vpack.c.b16 %v388, %v387
        %421 = vmatprep.subr.bf16.mxu0 0
        %422 = vmatpush1.bf16.msra.mxu0 %v396
        %423 = vmatprep.subr.bf16.mxu0 0
        %424 = vmatpush1.bf16.msra.mxu0 %v395
        %425 = vmatprep.subr.bf16.mxu0 0
        %426 = vmatpush1.bf16.msra.mxu0 %v394
        %427 = vmatprep.subr.bf16.mxu0 0
        %428 = vmatpush1.bf16.msra.mxu0 %v393
        %429 = vmatprep.subr.bf16.mxu0 0
        %430 = vmatpush1.bf16.msra.mxu0 %v392
        %431 = vmatprep.subr.bf16.mxu0 0
        %432 = vmatpush1.bf16.msra.mxu0 %v391
        %433 = vmatprep.subr.bf16.mxu0 0
        %434 = vmatpush1.bf16.msra.mxu0 %v390
        %435 = vmatprep.subr.bf16.mxu0 0
        %436 = vmatpush1.bf16.msra.mxu0 %v389
        %437 = vmatprep.subr.bf16.mxu0 0
        %438 = vmatpush2.bf16.msra.mxu0 %v404
        %439 = vmatprep.subr.bf16.mxu0 0
        %440 = vmatpush2.bf16.msra.mxu0 %v403
        %441 = vmatprep.subr.bf16.mxu0 0
        %442 = vmatpush2.bf16.msra.mxu0 %v402
        %443 = vmatprep.subr.bf16.mxu0 0
        %444 = vmatpush2.bf16.msra.mxu0 %v401
        %445 = vmatprep.subr.bf16.mxu0 0
        %446 = vmatpush2.bf16.msra.mxu0 %v400
        %447 = vmatprep.subr.bf16.mxu0 0
        %448 = vmatpush2.bf16.msra.mxu0 %v399
        %449 = vmatprep.subr.bf16.mxu0 0
        %450 = vmatpush2.bf16.msra.mxu0 %v398
        %451 = vmatprep.subr.bf16.mxu0 0
        %452 = vmatpush2.bf16.msra.mxu0 %v397
        %453 = vmatprep.mubr.bf16.mxu0 %v322
        %454 = vmatmul.mubr.bf16.gmra.mxu0 %v321
        %v455 = vpop.f32.mrf.mxu0
        %v456 = vadd.f32 %v316, %v455
        %v457 = vpop.f32.mrf.mxu0
        %v458 = vpop.f32.mrf.mxu0
        %v459 = vpop.f32.mrf.mxu0
        %460 = vdwg.mxu0
        %v461 = vmax.f32 %v456, 0.0
        %v462 = vpack.c.bf16 %v461, %v461
        %v463 = vld [vmem:[%s3] sm:$0xff]
        %v464 = vld [vmem:[%s3 + $0x8] sm:$0xff]
        %v465 = vld [vmem:[%s3 + $0x10] sm:$0xff]
        %v466 = vld [vmem:[%s3 + $0x18] sm:$0xff]
        %v467 = vld [vmem:[%s3 + $0x20] sm:$0xff]
        %v468 = vld [vmem:[%s3 + $0x28] sm:$0xff]
        %v469 = vld [vmem:[%s3 + $0x30] sm:$0xff]
        %v470 = vld [vmem:[%s3 + $0x38] sm:$0xff]
        %v471 = vld [vmem:[%s3 + $0x40] sm:$0xff]
        %v472 = vld [vmem:[%s3 + $0x48] sm:$0xff]
        %v473 = vld [vmem:[%s3 + $0x50] sm:$0xff]
        %v474 = vld [vmem:[%s3 + $0x58] sm:$0xff]
        %v475 = vld [vmem:[%s3 + $0x60] sm:$0xff]
        %v476 = vld [vmem:[%s3 + $0x68] sm:$0xff]
        %v477 = vld [vmem:[%s3 + $0x70] sm:$0xff]
        %v478 = vld [vmem:[%s3 + $0x78] sm:$0xff]
        %v479 = vld [vmem:[%s3 + $0x80] sm:$0xff]
        %v480 = vld [vmem:[%s3 + $0x88] sm:$0xff]
        %v481 = vld [vmem:[%s3 + $0x90] sm:$0xff]
        %v482 = vld [vmem:[%s3 + $0x98] sm:$0xff]
        %v483 = vld [vmem:[%s3 + $0xa0] sm:$0xff]
        %v484 = vld [vmem:[%s3 + $0xa8] sm:$0xff]
        %v485 = vld [vmem:[%s3 + $0xb0] sm:$0xff]
        %v486 = vld [vmem:[%s3 + $0xb8] sm:$0xff]
        %v487 = vld [vmem:[%s3 + $0xc0] sm:$0xff]
        %v488 = vld [vmem:[%s3 + $0xc8] sm:$0xff]
        %v489 = vld [vmem:[%s3 + $0xd0] sm:$0xff]
        %v490 = vld [vmem:[%s3 + $0xd8] sm:$0xff]
        %v491 = vld [vmem:[%s3 + $0xe0] sm:$0xff]
        %v492 = vld [vmem:[%s3 + $0xe8] sm:$0xff]
        %v493 = vld [vmem:[%s3 + $0xf0] sm:$0xff]
        %v494 = vld [vmem:[%s3 + $0xf8] sm:$0xff]
        %v495 = vld [vmem:[%s3 + $0x100] sm:$0xff]
        %v496 = vld [vmem:[%s3 + $0x108] sm:$0xff]
        %v497 = vld [vmem:[%s3 + $0x110] sm:$0xff]
        %v498 = vld [vmem:[%s3 + $0x118] sm:$0xff]
        %v499 = vld [vmem:[%s3 + $0x120] sm:$0xff]
        %v500 = vld [vmem:[%s3 + $0x128] sm:$0xff]
        %v501 = vld [vmem:[%s3 + $0x130] sm:$0xff]
        %v502 = vld [vmem:[%s3 + $0x138] sm:$0xff]
        %v503 = vld [vmem:[%s3 + $0x140] sm:$0xff]
        %v504 = vld [vmem:[%s3 + $0x148] sm:$0xff]
        %v505 = vld [vmem:[%s3 + $0x150] sm:$0xff]
        %v506 = vld [vmem:[%s3 + $0x158] sm:$0xff]
        %v507 = vld [vmem:[%s3 + $0x160] sm:$0xff]
        %v508 = vld [vmem:[%s3 + $0x168] sm:$0xff]
        %v509 = vld [vmem:[%s3 + $0x170] sm:$0xff]
        %v510 = vld [vmem:[%s3 + $0x178] sm:$0xff]
        %v511 = vld [vmem:[%s3 + $0x180] sm:$0xff]
        %v512 = vld [vmem:[%s3 + $0x188] sm:$0xff]
        %v513 = vld [vmem:[%s3 + $0x190] sm:$0xff]
        %v514 = vld [vmem:[%s3 + $0x198] sm:$0xff]
        %v515 = vld [vmem:[%s3 + $0x1a0] sm:$0xff]
        %v516 = vld [vmem:[%s3 + $0x1a8] sm:$0xff]
        %v517 = vld [vmem:[%s3 + $0x1b0] sm:$0xff]
        %v518 = vld [vmem:[%s3 + $0x1b8] sm:$0xff]
        %v519 = vld [vmem:[%s3 + $0x1c0] sm:$0xff]
        %v520 = vld [vmem:[%s3 + $0x1c8] sm:$0xff]
        %v521 = vld [vmem:[%s3 + $0x1d0] sm:$0xff]
        %v522 = vld [vmem:[%s3 + $0x1d8] sm:$0xff]
        %v523 = vld [vmem:[%s3 + $0x1e0] sm:$0xff]
        %v524 = vld [vmem:[%s3 + $0x1e8] sm:$0xff]
        %v525 = vld [vmem:[%s3 + $0x1f0] sm:$0xff]
        %v526 = vld [vmem:[%s3 + $0x1f8] sm:$0xff]
        %v527 = vld [vmem:[#allocation5] sm:$0xff]
        %v529 = vlaneseq
        %v530 = vshrl.u32 %v529, 7
        %v531 = vsub.s32 0, %v530
        %v532 = vrot.slane %v527, %v531
        %v533 = vlaneseq
        %v534 = vshrl.u32 %v533, 7
        %v535 = vsub.s32 1, %v534
        %v536 = vrot.slane %v527, %v535
        %v537 = vlaneseq
        %v538 = vshrl.u32 %v537, 7
        %v539 = vsub.s32 2, %v538
        %v540 = vrot.slane %v527, %v539
        %v541 = vlaneseq
        %v542 = vshrl.u32 %v541, 7
        %v543 = vsub.s32 3, %v542
        %v544 = vrot.slane %v527, %v543
        %v545 = vlaneseq
        %v546 = vshrl.u32 %v545, 7
        %v547 = vsub.s32 4, %v546
        %v548 = vrot.slane %v527, %v547
        %v549 = vlaneseq
        %v550 = vshrl.u32 %v549, 7
        %v551 = vsub.s32 5, %v550
        %v552 = vrot.slane %v527, %v551
        %v553 = vlaneseq
        %v554 = vshrl.u32 %v553, 7
        %v555 = vsub.s32 6, %v554
        %v556 = vrot.slane %v527, %v555
        %v557 = vlaneseq
        %v558 = vshrl.u32 %v557, 7
        %v559 = vsub.s32 7, %v558
        %v560 = vrot.slane %v527, %v559
        %v633 = vunpack.c.l.b16 %v463
        %v634 = vunpack.c.h.b16 %v463
        %v635 = vunpack.c.l.b16 %v464
        %v636 = vunpack.c.h.b16 %v464
        %v637 = vunpack.c.l.b16 %v465
        %v638 = vunpack.c.h.b16 %v465
        %v639 = vunpack.c.l.b16 %v466
        %v640 = vunpack.c.h.b16 %v466
        %v641 = vunpack.c.l.b16 %v467
        %v642 = vunpack.c.h.b16 %v467
        %v643 = vunpack.c.l.b16 %v468
        %v644 = vunpack.c.h.b16 %v468
        %v645 = vunpack.c.l.b16 %v469
        %v646 = vunpack.c.h.b16 %v469
        %v647 = vunpack.c.l.b16 %v470
        %v648 = vunpack.c.h.b16 %v470
        %v649 = vunpack.c.l.b16 %v471
        %v650 = vunpack.c.h.b16 %v471
        %v651 = vunpack.c.l.b16 %v472
        %v652 = vunpack.c.h.b16 %v472
        %v653 = vunpack.c.l.b16 %v473
        %v654 = vunpack.c.h.b16 %v473
        %v655 = vunpack.c.l.b16 %v474
        %v656 = vunpack.c.h.b16 %v474
        %v657 = vunpack.c.l.b16 %v475
        %v658 = vunpack.c.h.b16 %v475
        %v659 = vunpack.c.l.b16 %v476
        %v660 = vunpack.c.h.b16 %v476
        %v661 = vunpack.c.l.b16 %v477
        %v662 = vunpack.c.h.b16 %v477
        %v663 = vunpack.c.l.b16 %v478
        %v664 = vunpack.c.h.b16 %v478
        %v665 = vunpack.c.l.b16 %v479
        %v666 = vunpack.c.h.b16 %v479
        %v667 = vunpack.c.l.b16 %v480
        %v668 = vunpack.c.h.b16 %v480
        %v669 = vunpack.c.l.b16 %v481
        %v670 = vunpack.c.h.b16 %v481
        %v671 = vunpack.c.l.b16 %v482
        %v672 = vunpack.c.h.b16 %v482
        %v673 = vunpack.c.l.b16 %v483
        %v674 = vunpack.c.h.b16 %v483
        %v675 = vunpack.c.l.b16 %v484
        %v676 = vunpack.c.h.b16 %v484
        %v677 = vunpack.c.l.b16 %v485
        %v678 = vunpack.c.h.b16 %v485
        %v679 = vunpack.c.l.b16 %v486
        %v680 = vunpack.c.h.b16 %v486
        %v681 = vunpack.c.l.b16 %v487
        %v682 = vunpack.c.h.b16 %v487
        %v683 = vunpack.c.l.b16 %v488
        %v684 = vunpack.c.h.b16 %v488
        %v685 = vunpack.c.l.b16 %v489
        %v686 = vunpack.c.h.b16 %v489
        %v687 = vunpack.c.l.b16 %v490
        %v688 = vunpack.c.h.b16 %v490
        %v689 = vunpack.c.l.b16 %v491
        %v690 = vunpack.c.h.b16 %v491
        %v691 = vunpack.c.l.b16 %v492
        %v692 = vunpack.c.h.b16 %v492
        %v693 = vunpack.c.l.b16 %v493
        %v694 = vunpack.c.h.b16 %v493
        %v695 = vunpack.c.l.b16 %v494
        %v696 = vunpack.c.h.b16 %v494
        %v697 = vunpack.c.l.b16 %v495
        %v698 = vunpack.c.h.b16 %v495
        %v699 = vunpack.c.l.b16 %v496
        %v700 = vunpack.c.h.b16 %v496
        %v701 = vunpack.c.l.b16 %v497
        %v702 = vunpack.c.h.b16 %v497
        %v703 = vunpack.c.l.b16 %v498
        %v704 = vunpack.c.h.b16 %v498
        %v705 = vunpack.c.l.b16 %v499
        %v706 = vunpack.c.h.b16 %v499
        %v707 = vunpack.c.l.b16 %v500
        %v708 = vunpack.c.h.b16 %v500
        %v709 = vunpack.c.l.b16 %v501
        %v710 = vunpack.c.h.b16 %v501
        %v711 = vunpack.c.l.b16 %v502
        %v712 = vunpack.c.h.b16 %v502
        %v713 = vunpack.c.l.b16 %v503
        %v714 = vunpack.c.h.b16 %v503
        %v715 = vunpack.c.l.b16 %v504
        %v716 = vunpack.c.h.b16 %v504
        %v717 = vunpack.c.l.b16 %v505
        %v718 = vunpack.c.h.b16 %v505
        %v719 = vunpack.c.l.b16 %v506
        %v720 = vunpack.c.h.b16 %v506
        %v721 = vunpack.c.l.b16 %v507
        %v722 = vunpack.c.h.b16 %v507
        %v723 = vunpack.c.l.b16 %v508
        %v724 = vunpack.c.h.b16 %v508
        %v725 = vunpack.c.l.b16 %v509
        %v726 = vunpack.c.h.b16 %v509
        %v727 = vunpack.c.l.b16 %v510
        %v728 = vunpack.c.h.b16 %v510
        %v729 = vunpack.c.l.b16 %v511
        %v730 = vunpack.c.h.b16 %v511
        %v731 = vunpack.c.l.b16 %v512
        %v732 = vunpack.c.h.b16 %v512
        %v733 = vunpack.c.l.b16 %v513
        %v734 = vunpack.c.h.b16 %v513
        %v735 = vunpack.c.l.b16 %v514
        %v736 = vunpack.c.h.b16 %v514
        %v737 = vunpack.c.l.b16 %v515
        %v738 = vunpack.c.h.b16 %v515
        %v739 = vunpack.c.l.b16 %v516
        %v740 = vunpack.c.h.b16 %v516
        %v741 = vunpack.c.l.b16 %v517
        %v742 = vunpack.c.h.b16 %v517
        %v743 = vunpack.c.l.b16 %v518
        %v744 = vunpack.c.h.b16 %v518
        %v745 = vunpack.c.l.b16 %v519
        %v746 = vunpack.c.h.b16 %v519
        %v747 = vunpack.c.l.b16 %v520
        %v748 = vunpack.c.h.b16 %v520
        %v749 = vunpack.c.l.b16 %v521
        %v750 = vunpack.c.h.b16 %v521
        %v751 = vunpack.c.l.b16 %v522
        %v752 = vunpack.c.h.b16 %v522
        %v753 = vunpack.c.l.b16 %v523
        %v754 = vunpack.c.h.b16 %v523
        %v755 = vunpack.c.l.b16 %v524
        %v756 = vunpack.c.h.b16 %v524
        %v757 = vunpack.c.l.b16 %v525
        %v758 = vunpack.c.h.b16 %v525
        %v759 = vunpack.c.l.b16 %v526
        %v760 = vunpack.c.h.b16 %v526
        %v761 = vpack.c.b16 %v641, %v633
        %v762 = vpack.c.b16 %v642, %v634
        %v763 = vpack.c.b16 %v643, %v635
        %v764 = vpack.c.b16 %v644, %v636
        %v765 = vpack.c.b16 %v645, %v637
        %v766 = vpack.c.b16 %v646, %v638
        %v767 = vpack.c.b16 %v647, %v639
        %v768 = vpack.c.b16 %v648, %v640
        %v769 = vpack.c.b16 %v657, %v649
        %v770 = vpack.c.b16 %v658, %v650
        %v771 = vpack.c.b16 %v659, %v651
        %v772 = vpack.c.b16 %v660, %v652
        %v773 = vpack.c.b16 %v661, %v653
        %v774 = vpack.c.b16 %v662, %v654
        %v775 = vpack.c.b16 %v663, %v655
        %v776 = vpack.c.b16 %v664, %v656
        %v777 = vpack.c.b16 %v673, %v665
        %v778 = vpack.c.b16 %v674, %v666
        %v779 = vpack.c.b16 %v675, %v667
        %v780 = vpack.c.b16 %v676, %v668
        %v781 = vpack.c.b16 %v677, %v669
        %v782 = vpack.c.b16 %v678, %v670
        %v783 = vpack.c.b16 %v679, %v671
        %v784 = vpack.c.b16 %v680, %v672
        %v785 = vpack.c.b16 %v689, %v681
        %v786 = vpack.c.b16 %v690, %v682
        %v787 = vpack.c.b16 %v691, %v683
        %v788 = vpack.c.b16 %v692, %v684
        %v789 = vpack.c.b16 %v693, %v685
        %v790 = vpack.c.b16 %v694, %v686
        %v791 = vpack.c.b16 %v695, %v687
        %v792 = vpack.c.b16 %v696, %v688
        %v793 = vpack.c.b16 %v705, %v697
        %v794 = vpack.c.b16 %v706, %v698
        %v795 = vpack.c.b16 %v707, %v699
        %v796 = vpack.c.b16 %v708, %v700
        %v797 = vpack.c.b16 %v709, %v701
        %v798 = vpack.c.b16 %v710, %v702
        %v799 = vpack.c.b16 %v711, %v703
        %v800 = vpack.c.b16 %v712, %v704
        %v801 = vpack.c.b16 %v721, %v713
        %v802 = vpack.c.b16 %v722, %v714
        %v803 = vpack.c.b16 %v723, %v715
        %v804 = vpack.c.b16 %v724, %v716
        %v805 = vpack.c.b16 %v725, %v717
        %v806 = vpack.c.b16 %v726, %v718
        %v807 = vpack.c.b16 %v727, %v719
        %v808 = vpack.c.b16 %v728, %v720
        %v809 = vpack.c.b16 %v737, %v729
        %v810 = vpack.c.b16 %v738, %v730
        %v811 = vpack.c.b16 %v739, %v731
        %v812 = vpack.c.b16 %v740, %v732
        %v813 = vpack.c.b16 %v741, %v733
        %v814 = vpack.c.b16 %v742, %v734
        %v815 = vpack.c.b16 %v743, %v735
        %v816 = vpack.c.b16 %v744, %v736
        %v817 = vpack.c.b16 %v753, %v745
        %v818 = vpack.c.b16 %v754, %v746
        %v819 = vpack.c.b16 %v755, %v747
        %v820 = vpack.c.b16 %v756, %v748
        %v821 = vpack.c.b16 %v757, %v749
        %v822 = vpack.c.b16 %v758, %v750
        %v823 = vpack.c.b16 %v759, %v751
        %v824 = vpack.c.b16 %v760, %v752
        %889 = vmatprep.subr.bf16.mxu0 %v818
        %890 = vmatpush1.bf16.msra.mxu0 %v817
        %891 = vmatprep.subr.bf16.mxu0 %v810
        %892 = vmatpush1.bf16.msra.mxu0 %v809
        %893 = vmatprep.subr.bf16.mxu0 %v802
        %894 = vmatpush1.bf16.msra.mxu0 %v801
        %895 = vmatprep.subr.bf16.mxu0 %v794
        %896 = vmatpush1.bf16.msra.mxu0 %v793
        %897 = vmatprep.subr.bf16.mxu0 %v786
        %898 = vmatpush1.bf16.msra.mxu0 %v785
        %899 = vmatprep.subr.bf16.mxu0 %v778
        %900 = vmatpush1.bf16.msra.mxu0 %v777
        %901 = vmatprep.subr.bf16.mxu0 %v770
        %902 = vmatpush1.bf16.msra.mxu0 %v769
        %903 = vmatprep.subr.bf16.mxu0 %v762
        %904 = vmatpush1.bf16.msra.mxu0 %v761
        %905 = vmatprep.subr.bf16.mxu0 0
        %906 = vmatpush2.bf16.msra.mxu0 0
        %907 = vmatprep.subr.bf16.mxu0 0
        %908 = vmatpush2.bf16.msra.mxu0 0
        %909 = vmatprep.subr.bf16.mxu0 0
        %910 = vmatpush2.bf16.msra.mxu0 0
        %911 = vmatprep.subr.bf16.mxu0 0
        %912 = vmatpush2.bf16.msra.mxu0 0
        %913 = vmatprep.subr.bf16.mxu0 0
        %914 = vmatpush2.bf16.msra.mxu0 0
        %915 = vmatprep.subr.bf16.mxu0 0
        %916 = vmatpush2.bf16.msra.mxu0 0
        %917 = vmatprep.subr.bf16.mxu0 0
        %918 = vmatpush2.bf16.msra.mxu0 0
        %919 = vmatprep.subr.bf16.mxu0 0
        %920 = vmatpush2.bf16.msra.mxu0 0
        %921 = vmatprep.mubr.bf16.mxu0 0
        %922 = vmatmul.mubr.bf16.gmra.mxu0 %v462
        %v923 = vpop.f32.mrf.mxu0
        %v924 = vadd.f32 %v532, %v923
        %v925 = vpop.f32.mrf.mxu0
        %v926 = vadd.f32 %v536, %v925
        %v927 = vpop.f32.mrf.mxu0
        %v928 = vpop.f32.mrf.mxu0
        %929 = vdwg.mxu0
        %930 = vmatprep.subr.bf16.mxu0 %v820
        %931 = vmatpush1.bf16.msra.mxu0 %v819
        %932 = vmatprep.subr.bf16.mxu0 %v812
        %933 = vmatpush1.bf16.msra.mxu0 %v811
        %934 = vmatprep.subr.bf16.mxu0 %v804
        %935 = vmatpush1.bf16.msra.mxu0 %v803
        %936 = vmatprep.subr.bf16.mxu0 %v796
        %937 = vmatpush1.bf16.msra.mxu0 %v795
        %938 = vmatprep.subr.bf16.mxu0 %v788
        %939 = vmatpush1.bf16.msra.mxu0 %v787
        %940 = vmatprep.subr.bf16.mxu0 %v780
        %941 = vmatpush1.bf16.msra.mxu0 %v779
        %942 = vmatprep.subr.bf16.mxu0 %v772
        %943 = vmatpush1.bf16.msra.mxu0 %v771
        %944 = vmatprep.subr.bf16.mxu0 %v764
        %945 = vmatpush1.bf16.msra.mxu0 %v763
        %946 = vmatprep.subr.bf16.mxu0 0
        %947 = vmatpush2.bf16.msra.mxu0 0
        %948 = vmatprep.subr.bf16.mxu0 0
        %949 = vmatpush2.bf16.msra.mxu0 0
        %950 = vmatprep.subr.bf16.mxu0 0
        %951 = vmatpush2.bf16.msra.mxu0 0
        %952 = vmatprep.subr.bf16.mxu0 0
        %953 = vmatpush2.bf16.msra.mxu0 0
        %954 = vmatprep.subr.bf16.mxu0 0
        %955 = vmatpush2.bf16.msra.mxu0 0
        %956 = vmatprep.subr.bf16.mxu0 0
        %957 = vmatpush2.bf16.msra.mxu0 0
        %958 = vmatprep.subr.bf16.mxu0 0
        %959 = vmatpush2.bf16.msra.mxu0 0
        %960 = vmatprep.subr.bf16.mxu0 0
        %961 = vmatpush2.bf16.msra.mxu0 0
        %962 = vmatprep.mubr.bf16.mxu0 0
        %963 = vmatmul.mubr.bf16.gmra.mxu0 %v462
        %v964 = vpop.f32.mrf.mxu0
        %v965 = vadd.f32 %v540, %v964
        %v966 = vpop.f32.mrf.mxu0
        %v967 = vadd.f32 %v544, %v966
        %v968 = vpop.f32.mrf.mxu0
        %v969 = vpop.f32.mrf.mxu0
        %970 = vdwg.mxu0
        %971 = vmatprep.subr.bf16.mxu0 %v822
        %972 = vmatpush1.bf16.msra.mxu0 %v821
        %973 = vmatprep.subr.bf16.mxu0 %v814
        %974 = vmatpush1.bf16.msra.mxu0 %v813
        %975 = vmatprep.subr.bf16.mxu0 %v806
        %976 = vmatpush1.bf16.msra.mxu0 %v805
        %977 = vmatprep.subr.bf16.mxu0 %v798
        %978 = vmatpush1.bf16.msra.mxu0 %v797
        %979 = vmatprep.subr.bf16.mxu0 %v790
        %980 = vmatpush1.bf16.msra.mxu0 %v789
        %981 = vmatprep.subr.bf16.mxu0 %v782
        %982 = vmatpush1.bf16.msra.mxu0 %v781
        %983 = vmatprep.subr.bf16.mxu0 %v774
        %984 = vmatpush1.bf16.msra.mxu0 %v773
        %985 = vmatprep.subr.bf16.mxu0 %v766
        %986 = vmatpush1.bf16.msra.mxu0 %v765
        %987 = vmatprep.subr.bf16.mxu0 0
        %988 = vmatpush2.bf16.msra.mxu0 0
        %989 = vmatprep.subr.bf16.mxu0 0
        %990 = vmatpush2.bf16.msra.mxu0 0
        %991 = vmatprep.subr.bf16.mxu0 0
        %992 = vmatpush2.bf16.msra.mxu0 0
        %993 = vmatprep.subr.bf16.mxu0 0
        %994 = vmatpush2.bf16.msra.mxu0 0
        %995 = vmatprep.subr.bf16.mxu0 0
        %996 = vmatpush2.bf16.msra.mxu0 0
        %997 = vmatprep.subr.bf16.mxu0 0
        %998 = vmatpush2.bf16.msra.mxu0 0
        %999 = vmatprep.subr.bf16.mxu0 0
        %1000 = vmatpush2.bf16.msra.mxu0 0
        %1001 = vmatprep.subr.bf16.mxu0 0
        %1002 = vmatpush2.bf16.msra.mxu0 0
        %1003 = vmatprep.mubr.bf16.mxu0 0
        %1004 = vmatmul.mubr.bf16.gmra.mxu0 %v462
        %v1005 = vpop.f32.mrf.mxu0
        %v1006 = vadd.f32 %v548, %v1005
        %v1007 = vpop.f32.mrf.mxu0
        %v1008 = vadd.f32 %v552, %v1007
        %v1009 = vpop.f32.mrf.mxu0
        %v1010 = vpop.f32.mrf.mxu0
        %1011 = vdwg.mxu0
        %1012 = vmatprep.subr.bf16.mxu0 %v824
        %1013 = vmatpush1.bf16.msra.mxu0 %v823
        %1014 = vmatprep.subr.bf16.mxu0 %v816
        %1015 = vmatpush1.bf16.msra.mxu0 %v815
        %1016 = vmatprep.subr.bf16.mxu0 %v808
        %1017 = vmatpush1.bf16.msra.mxu0 %v807
        %1018 = vmatprep.subr.bf16.mxu0 %v800
        %1019 = vmatpush1.bf16.msra.mxu0 %v799
        %1020 = vmatprep.subr.bf16.mxu0 %v792
        %1021 = vmatpush1.bf16.msra.mxu0 %v791
        %1022 = vmatprep.subr.bf16.mxu0 %v784
        %1023 = vmatpush1.bf16.msra.mxu0 %v783
        %1024 = vmatprep.subr.bf16.mxu0 %v776
        %1025 = vmatpush1.bf16.msra.mxu0 %v775
        %1026 = vmatprep.subr.bf16.mxu0 %v768
        %1027 = vmatpush1.bf16.msra.mxu0 %v767
        %1028 = vmatprep.subr.bf16.mxu0 0
        %1029 = vmatpush2.bf16.msra.mxu0 0
        %1030 = vmatprep.subr.bf16.mxu0 0
        %1031 = vmatpush2.bf16.msra.mxu0 0
        %1032 = vmatprep.subr.bf16.mxu0 0
        %1033 = vmatpush2.bf16.msra.mxu0 0
        %1034 = vmatprep.subr.bf16.mxu0 0
        %1035 = vmatpush2.bf16.msra.mxu0 0
        %1036 = vmatprep.subr.bf16.mxu0 0
        %1037 = vmatpush2.bf16.msra.mxu0 0
        %1038 = vmatprep.subr.bf16.mxu0 0
        %1039 = vmatpush2.bf16.msra.mxu0 0
        %1040 = vmatprep.subr.bf16.mxu0 0
        %1041 = vmatpush2.bf16.msra.mxu0 0
        %1042 = vmatprep.subr.bf16.mxu0 0
        %1043 = vmatpush2.bf16.msra.mxu0 0
        %1044 = vmatprep.mubr.bf16.mxu0 0
        %1045 = vmatmul.mubr.bf16.gmra.mxu0 %v462
        %v1046 = vpop.f32.mrf.mxu0
        %v1047 = vadd.f32 %v556, %v1046
        %v1048 = vpop.f32.mrf.mxu0
        %v1049 = vadd.f32 %v560, %v1048
        %v1050 = vpop.f32.mrf.mxu0
        %v1051 = vpop.f32.mrf.mxu0
        %1052 = vdwg.mxu0
        %v1053 = vmax.f32 %v924, 0.0
        %v1054 = vmax.f32 %v926, 0.0
        %v1055 = vmax.f32 %v965, 0.0
        %v1056 = vmax.f32 %v967, 0.0
        %v1057 = vmax.f32 %v1006, 0.0
        %v1058 = vmax.f32 %v1008, 0.0
        %v1059 = vmax.f32 %v1047, 0.0
        %v1060 = vmax.f32 %v1049, 0.0
        %p1061 = scmp.eq.s32.totalorder %s23, 0
        // Predicated region
        $region49: #{get_model_forward.6} parent=39 // pred_check
          %p1062 = pneg %p1061
        $region50: #{get_model_forward.6} parent=39 // pred_check_branch
          %1064 = sbr.rel (%p1062) target = $region52
        $region51: #{get_model_forward.6} parent=39 // pred_region
          %1065 = vst [vmem:[#allocation2] sm:$0xff] %v1053
          %1066 = vst [vmem:[#allocation2 + $0x8] sm:$0xff] %v1054
          %1067 = vst [vmem:[#allocation2 + $0x10] sm:$0xff] %v1055
          %1068 = vst [vmem:[#allocation2 + $0x18] sm:$0xff] %v1056
          %1069 = vst [vmem:[#allocation2 + $0x20] sm:$0xff] %v1057
          %1070 = vst [vmem:[#allocation2 + $0x28] sm:$0xff] %v1058
          %1071 = vst [vmem:[#allocation2 + $0x30] sm:$0xff] %v1059
          %1072 = vst [vmem:[#allocation2 + $0x38] sm:$0xff] %v1060
        $region52: #{get_model_forward.6} parent=39 // pred_fallthru
          _
        %p1073 = scmp.gt.s32.totalorder %s23, 0
        // Predicated region
        $region53: #{get_model_forward.6} parent=39 // pred_check
          %p1074 = pneg %p1073
        $region54: #{get_model_forward.6} parent=39 // pred_check_branch
          %1076 = sbr.rel (%p1074) target = $region56
        $region55: #{get_model_forward.6} parent=39 // pred_region
          %v1077 = vld [vmem:[#allocation2] sm:$0xff]
          %v1078 = vld [vmem:[#allocation2 + $0x8] sm:$0xff]
          %v1079 = vld [vmem:[#allocation2 + $0x10] sm:$0xff]
          %v1080 = vld [vmem:[#allocation2 + $0x18] sm:$0xff]
          %v1081 = vld [vmem:[#allocation2 + $0x20] sm:$0xff]
          %v1082 = vld [vmem:[#allocation2 + $0x28] sm:$0xff]
          %v1083 = vld [vmem:[#allocation2 + $0x30] sm:$0xff]
          %v1084 = vld [vmem:[#allocation2 + $0x38] sm:$0xff]
          %v1085 = vmax.f32 %v1077, %v1053
          %v1086 = vmax.f32 %v1078, %v1054
          %v1087 = vmax.f32 %v1079, %v1055
          %v1088 = vmax.f32 %v1080, %v1056
          %v1089 = vmax.f32 %v1081, %v1057
          %v1090 = vmax.f32 %v1082, %v1058
          %v1091 = vmax.f32 %v1083, %v1059
          %v1092 = vmax.f32 %v1084, %v1060
          %1093 = vst [vmem:[#allocation2] sm:$0xff] %v1085
          %1094 = vst [vmem:[#allocation2 + $0x8] sm:$0xff] %v1086
          %1095 = vst [vmem:[#allocation2 + $0x10] sm:$0xff] %v1087
          %1096 = vst [vmem:[#allocation2 + $0x18] sm:$0xff] %v1088
          %1097 = vst [vmem:[#allocation2 + $0x20] sm:$0xff] %v1089
          %1098 = vst [vmem:[#allocation2 + $0x28] sm:$0xff] %v1090
          %1099 = vst [vmem:[#allocation2 + $0x30] sm:$0xff] %v1091
          %1100 = vst [vmem:[#allocation2 + $0x38] sm:$0xff] %v1092
        $region56: #{get_model_forward.6} parent=39 // pred_fallthru
          _
        %p1101 = scmp.eq.s32.totalorder %s23, 7
        // Predicated region
        $region57: #{get_model_forward.6} parent=39 // pred_check
          %p1102 = pneg %p1101
        $region58: #{get_model_forward.6} parent=39 // pred_check_branch
          %1104 = sbr.rel (%p1102) target = $region60
        $region59: #{get_model_forward.6} parent=39 // pred_region
          %v1105 = vld [vmem:[#allocation2] sm:$0xff]
          %v1106 = vld [vmem:[#allocation2 + $0x8] sm:$0xff]
          %v1107 = vld [vmem:[#allocation2 + $0x10] sm:$0xff]
          %v1108 = vld [vmem:[#allocation2 + $0x18] sm:$0xff]
          %v1109 = vld [vmem:[#allocation2 + $0x20] sm:$0xff]
          %v1110 = vld [vmem:[#allocation2 + $0x28] sm:$0xff]
          %v1111 = vld [vmem:[#allocation2 + $0x30] sm:$0xff]
          %v1112 = vld [vmem:[#allocation2 + $0x38] sm:$0xff]
          %v1113 = vpack.c.bf16 %v1105, %v1105
          %v1114 = vpack.c.bf16 %v1106, %v1106
          %v1115 = vpack.c.bf16 %v1107, %v1107
          %v1116 = vpack.c.bf16 %v1108, %v1108
          %v1117 = vpack.c.bf16 %v1109, %v1109
          %v1118 = vpack.c.bf16 %v1110, %v1110
          %v1119 = vpack.c.bf16 %v1111, %v1111
          %v1120 = vpack.c.bf16 %v1112, %v1112
          %v1129 = vunpack.c.l.b16 %v1113
          %v1130 = vunpack.c.l.b16 %v1114
          %v1131 = vunpack.c.l.b16 %v1115
          %v1132 = vunpack.c.l.b16 %v1116
          %v1133 = vunpack.c.l.b16 %v1117
          %v1134 = vunpack.c.l.b16 %v1118
          %v1135 = vunpack.c.l.b16 %v1119
          %v1136 = vunpack.c.l.b16 %v1120
          %v1137 = vpack.c.b16 %v1130, %v1129
          %v1138 = vpack.c.b16 %v1132, %v1131
          %v1139 = vpack.c.b16 %v1134, %v1133
          %v1140 = vpack.c.b16 %v1136, %v1135
          %1145 = vst [vmem:[%s276] sm:$0xff] %v1137
          %1146 = vst [vmem:[%s276 + $0x8] sm:$0xff] %v1138
          %1147 = vst [vmem:[%s276 + $0x10] sm:$0xff] %v1139
          %1148 = vst [vmem:[%s276 + $0x18] sm:$0xff] %v1140
        $region60: #{get_model_forward.6} parent=39 // pred_fallthru
          _
        %p1149 = scmp.lt.s32.totalorder %s22, 0
        %s1150 = scalar_select %p1149, %s22, 0
        %s1151 = smul.addr %s1150, 8
        %s1152 = smul.addr %s1151, 4
        %s1153 = scalar_lea.vmem %s5, %s1152
        // Predicated region
        $region61: #{get_model_forward.6} parent=39 // pred_check
          %p1154 = pneg %p160
        $region62: #{get_model_forward.6} parent=39 // pred_check_branch
          %1156 = sbr.rel (%p1154) target = $region64
        $region63: #{get_model_forward.6} parent=39 // pred_region
          _
        $region64: #{get_model_forward.6} parent=39 // pred_fallthru
          _
        // Predicated region
        $region65: #{get_model_forward.6} parent=39 // pred_check
          %p1157 = pneg %p160
        $region66: #{get_model_forward.6} parent=39 // pred_check_branch
          %1159 = sbr.rel (%p1157) target = $region68
        $region67: #{get_model_forward.6} parent=39 // pred_region
          %p1160 = scmp.lt.s32.totalorder %s22, 0
          %s1161 = scalar_select %p1160, %s22, 0
          %s1162 = smul.addr %s1161, 8
          %s1163 = smul.addr %s1162, 4
          %s1164 = scalar_lea.vmem %s5, %s1163
        $region68: #{get_model_forward.6} parent=39 // pred_fallthru
          _
      $region40: #{get_model_forward.6} parent=5 // pred_fallthru
        _
      %p1165 = scmp.le.s32.totalorder 2, %s13
      // Predicated region
      $region69: #{get_model_forward.6} parent=5 // pred_check
        %p1166 = pneg %p1165
      $region70: #{get_model_forward.6} parent=5 // pred_check_branch
        %1168 = sbr.rel (%p1166) target = $region72
      $region71: #{get_model_forward.6} parent=5 // pred_region
        %s1169 = ssub.s32 %s13, 2
      $region72: #{get_model_forward.6} parent=5 // pred_fallthru
        _
    $region6: #{get_model_forward.6} parent=1 // loop_footer
      %s17 = sadd.s32 1, %s13
    $region7: #{get_model_forward.6} parent=1 // loop_footer_branch
      %12 = sbr.rel target = $region3
    $region8: #{get_model_forward.6} parent=1 // loop_exit
      _
    %1170 = vsyncpa [#allocation4], 1
    %s1171 = scalar_lea.sflag [#allocation4], 1
    %1172 = vsyncpa %s1171, 1
    %1173 = vsyncpa [#allocation6], 1

// kernel: get_model_forward.7
$region0: #{get_model_forward.7}
  #allocation0 [shape = 'u32[]', space=smem, size = 0x4, offset = 0x4, fixed_abs, tag = 'smem constant byte address 0x4 - core index']
  #allocation1 [shape = 'u32[144,128]{1,0:T(1,128)}', space=vmem, size = 0x12000, scoped, tag = 'internal scratch']
  %s0 = inlined_call_operand.vmem [shape: bf16[8,1024], index: 0, kind: input, shape index: {}]
  %s1 = inlined_call_operand.vmem [shape: bf16[1024,512], index: 1, kind: input, shape index: {}]
  %s2 = inlined_call_operand.vmem [shape: f32[1,512], index: 2, kind: input, shape index: {}]
  %s3 = inlined_call_operand.vmem [shape: f32[1,512], index: 3, kind: input, shape index: {}]
  %s4 = inlined_call_operand.vmem [shape: f32[1,512], index: 4, kind: input, shape index: {}]
  %s5 = inlined_call_operand.vmem [shape: bf16[512,256], index: 5, kind: input, shape index: {}]
  %s6 = inlined_call_operand.vmem [shape: f32[1,256], index: 6, kind: input, shape index: {}]
  %s7 = inlined_call_operand.vmem [shape: f32[1,256], index: 7, kind: input, shape index: {}]
  %s8 = inlined_call_operand.vmem [shape: f32[1,256], index: 8, kind: input, shape index: {}]
  %s9 = inlined_call_operand.vmem [shape: bf16[256,128], index: 9, kind: input, shape index: {}]
  %s10 = inlined_call_operand.vmem [shape: f32[1,128], index: 10, kind: input, shape index: {}]
  %s11 = inlined_call_operand.vmem [shape: f32[8,128], index: 11, kind: output, shape index: {}]
  %s12 = sld [smem:[#allocation0]]
  $region54: #{get_model_forward.7} parent=0
    _
  %s14 = ssub.s32 1, %s12
  %s15 = scalar_select 0, %s14, %s12
  // Predicated region
  $region2: #{get_model_forward.7} parent=0 // pred_check
    _
  $region3: #{get_model_forward.7} parent=0 // pred_check_branch
    %17 = sbr.rel (0) target = $region5
  $region4: #{get_model_forward.7} parent=0 // pred_region
    _
  $region5: #{get_model_forward.7} parent=0 // pred_fallthru
    _
  // Predicated region
  $region6: #{get_model_forward.7} parent=0 // pred_check
    _
  $region7: #{get_model_forward.7} parent=0 // pred_check_branch
    %19 = sbr.rel (0) target = $region9
  $region8: #{get_model_forward.7} parent=0 // pred_region
    _
  $region9: #{get_model_forward.7} parent=0 // pred_fallthru
    _
  // Predicated region
  $region10: #{get_model_forward.7} parent=0 // pred_check
    _
  $region11: #{get_model_forward.7} parent=0 // pred_check_branch
    %21 = sbr.rel (0) target = $region13
  $region12: #{get_model_forward.7} parent=0 // pred_region
    _
  $region13: #{get_model_forward.7} parent=0 // pred_fallthru
    _
  // Predicated region
  $region14: #{get_model_forward.7} parent=0 // pred_check
    _
  $region15: #{get_model_forward.7} parent=0 // pred_check_branch
    %23 = sbr.rel (0) target = $region17
  $region16: #{get_model_forward.7} parent=0 // pred_region
    _
  $region17: #{get_model_forward.7} parent=0 // pred_fallthru
    _
  // Predicated region
  $region18: #{get_model_forward.7} parent=0 // pred_check
    _
  $region19: #{get_model_forward.7} parent=0 // pred_check_branch
    %25 = sbr.rel (0) target = $region21
  $region20: #{get_model_forward.7} parent=0 // pred_region
    _
  $region21: #{get_model_forward.7} parent=0 // pred_fallthru
    _
  // Predicated region
  $region22: #{get_model_forward.7} parent=0 // pred_check
    _
  $region23: #{get_model_forward.7} parent=0 // pred_check_branch
    %27 = sbr.rel (0) target = $region25
  $region24: #{get_model_forward.7} parent=0 // pred_region
    _
  $region25: #{get_model_forward.7} parent=0 // pred_fallthru
    _
  // Predicated region
  $region26: #{get_model_forward.7} parent=0 // pred_check
    _
  $region27: #{get_model_forward.7} parent=0 // pred_check_branch
    %29 = sbr.rel (0) target = $region29
  $region28: #{get_model_forward.7} parent=0 // pred_region
    _
  $region29: #{get_model_forward.7} parent=0 // pred_fallthru
    _
  // Predicated region
  $region30: #{get_model_forward.7} parent=0 // pred_check
    _
  $region31: #{get_model_forward.7} parent=0 // pred_check_branch
    %31 = sbr.rel (0) target = $region33
  $region32: #{get_model_forward.7} parent=0 // pred_region
    _
  $region33: #{get_model_forward.7} parent=0 // pred_fallthru
    _
  // Predicated region
  $region34: #{get_model_forward.7} parent=0 // pred_check
    _
  $region35: #{get_model_forward.7} parent=0 // pred_check_branch
    %33 = sbr.rel (0) target = $region37
  $region36: #{get_model_forward.7} parent=0 // pred_region
    _
  $region37: #{get_model_forward.7} parent=0 // pred_fallthru
    _
  // Predicated region
  $region38: #{get_model_forward.7} parent=0 // pred_check
    _
  $region39: #{get_model_forward.7} parent=0 // pred_check_branch
    %35 = sbr.rel (0) target = $region41
  $region40: #{get_model_forward.7} parent=0 // pred_region
    _
  $region41: #{get_model_forward.7} parent=0 // pred_fallthru
    _
  // Predicated region
  $region42: #{get_model_forward.7} parent=0 // pred_check
    _
  $region43: #{get_model_forward.7} parent=0 // pred_check_branch
    %37 = sbr.rel (0) target = $region45
  $region44: #{get_model_forward.7} parent=0 // pred_region
    _
  $region45: #{get_model_forward.7} parent=0 // pred_fallthru
    _
  %v39 = vld [vmem:[%s0] sm:$0xff]
  %v40 = vld [vmem:[%s0 + $0x8] sm:$0xff]
  %v41 = vld [vmem:[%s0 + $0x10] sm:$0xff]
  %v42 = vld [vmem:[%s0 + $0x18] sm:$0xff]
  %v43 = vld [vmem:[%s1] sm:$0xff]
  %v44 = vld [vmem:[%s1 + $0x8] sm:$0xff]
  %v45 = vld [vmem:[%s1 + $0x10] sm:$0xff]
  %v46 = vld [vmem:[%s1 + $0x18] sm:$0xff]
  %v47 = vld [vmem:[%s1 + $0x20] sm:$0xff]
  %v48 = vld [vmem:[%s1 + $0x28] sm:$0xff]
  %v49 = vld [vmem:[%s1 + $0x30] sm:$0xff]
  %v50 = vld [vmem:[%s1 + $0x38] sm:$0xff]
  %v51 = vld [vmem:[%s1 + $0x40] sm:$0xff]
  %v52 = vld [vmem:[%s1 + $0x48] sm:$0xff]
  %v53 = vld [vmem:[%s1 + $0x50] sm:$0xff]
  %v54 = vld [vmem:[%s1 + $0x58] sm:$0xff]
  %v55 = vld [vmem:[%s1 + $0x60] sm:$0xff]
  %v56 = vld [vmem:[%s1 + $0x68] sm:$0xff]
  %v57 = vld [vmem:[%s1 + $0x70] sm:$0xff]
  %v58 = vld [vmem:[%s1 + $0x78] sm:$0xff]
  %v59 = vld [vmem:[%s1 + $0x80] sm:$0xff]
  %v60 = vld [vmem:[%s1 + $0x88] sm:$0xff]
  %v61 = vld [vmem:[%s1 + $0x90] sm:$0xff]
  %v62 = vld [vmem:[%s1 + $0x98] sm:$0xff]
  %v63 = vld [vmem:[%s1 + $0xa0] sm:$0xff]
  %v64 = vld [vmem:[%s1 + $0xa8] sm:$0xff]
  %v65 = vld [vmem:[%s1 + $0xb0] sm:$0xff]
  %v66 = vld [vmem:[%s1 + $0xb8] sm:$0xff]
  %v67 = vld [vmem:[%s1 + $0xc0] sm:$0xff]
  %v68 = vld [vmem:[%s1 + $0xc8] sm:$0xff]
  %v69 = vld [vmem:[%s1 + $0xd0] sm:$0xff]
  %v70 = vld [vmem:[%s1 + $0xd8] sm:$0xff]
  %v71 = vld [vmem:[%s1 + $0xe0] sm:$0xff]
  %v72 = vld [vmem:[%s1 + $0xe8] sm:$0xff]
  %v73 = vld [vmem:[%s1 + $0xf0] sm:$0xff]
  %v74 = vld [vmem:[%s1 + $0xf8] sm:$0xff]
  %v75 = vld [vmem:[%s1 + $0x100] sm:$0xff]
  %v76 = vld [vmem:[%s1 + $0x108] sm:$0xff]
  %v77 = vld [vmem:[%s1 + $0x110] sm:$0xff]
  %v78 = vld [vmem:[%s1 + $0x118] sm:$0xff]
  %v79 = vld [vmem:[%s1 + $0x120] sm:$0xff]
  %v80 = vld [vmem:[%s1 + $0x128] sm:$0xff]
  %v81 = vld [vmem:[%s1 + $0x130] sm:$0xff]
  %v82 = vld [vmem:[%s1 + $0x138] sm:$0xff]
  %v83 = vld [vmem:[%s1 + $0x140] sm:$0xff]
  %v84 = vld [vmem:[%s1 + $0x148] sm:$0xff]
  %v85 = vld [vmem:[%s1 + $0x150] sm:$0xff]
  %v86 = vld [vmem:[%s1 + $0x158] sm:$0xff]
  %v87 = vld [vmem:[%s1 + $0x160] sm:$0xff]
  %v88 = vld [vmem:[%s1 + $0x168] sm:$0xff]
  %v89 = vld [vmem:[%s1 + $0x170] sm:$0xff]
  %v90 = vld [vmem:[%s1 + $0x178] sm:$0xff]
  %v91 = vld [vmem:[%s1 + $0x180] sm:$0xff]
  %v92 = vld [vmem:[%s1 + $0x188] sm:$0xff]
  %v93 = vld [vmem:[%s1 + $0x190] sm:$0xff]
  %v94 = vld [vmem:[%s1 + $0x198] sm:$0xff]
  %v95 = vld [vmem:[%s1 + $0x1a0] sm:$0xff]
  %v96 = vld [vmem:[%s1 + $0x1a8] sm:$0xff]
  %v97 = vld [vmem:[%s1 + $0x1b0] sm:$0xff]
  %v98 = vld [vmem:[%s1 + $0x1b8] sm:$0xff]
  %v99 = vld [vmem:[%s1 + $0x1c0] sm:$0xff]
  %v100 = vld [vmem:[%s1 + $0x1c8] sm:$0xff]
  %v101 = vld [vmem:[%s1 + $0x1d0] sm:$0xff]
  %v102 = vld [vmem:[%s1 + $0x1d8] sm:$0xff]
  %v103 = vld [vmem:[%s1 + $0x1e0] sm:$0xff]
  %v104 = vld [vmem:[%s1 + $0x1e8] sm:$0xff]
  %v105 = vld [vmem:[%s1 + $0x1f0] sm:$0xff]
  %v106 = vld [vmem:[%s1 + $0x1f8] sm:$0xff]
  %v107 = vld [vmem:[%s1 + $0x200] sm:$0xff]
  %v108 = vld [vmem:[%s1 + $0x208] sm:$0xff]
  %v109 = vld [vmem:[%s1 + $0x210] sm:$0xff]
  %v110 = vld [vmem:[%s1 + $0x218] sm:$0xff]
  %v111 = vld [vmem:[%s1 + $0x220] sm:$0xff]
  %v112 = vld [vmem:[%s1 + $0x228] sm:$0xff]
  %v113 = vld [vmem:[%s1 + $0x230] sm:$0xff]
  %v114 = vld [vmem:[%s1 + $0x238] sm:$0xff]
  %v115 = vld [vmem:[%s1 + $0x240] sm:$0xff]
  %v116 = vld [vmem:[%s1 + $0x248] sm:$0xff]
  %v117 = vld [vmem:[%s1 + $0x250] sm:$0xff]
  %v118 = vld [vmem:[%s1 + $0x258] sm:$0xff]
  %v119 = vld [vmem:[%s1 + $0x260] sm:$0xff]
  %v120 = vld [vmem:[%s1 + $0x268] sm:$0xff]
  %v121 = vld [vmem:[%s1 + $0x270] sm:$0xff]
  %v122 = vld [vmem:[%s1 + $0x278] sm:$0xff]
  %v123 = vld [vmem:[%s1 + $0x280] sm:$0xff]
  %v124 = vld [vmem:[%s1 + $0x288] sm:$0xff]
  %v125 = vld [vmem:[%s1 + $0x290] sm:$0xff]
  %v126 = vld [vmem:[%s1 + $0x298] sm:$0xff]
  %v127 = vld [vmem:[%s1 + $0x2a0] sm:$0xff]
  %v128 = vld [vmem:[%s1 + $0x2a8] sm:$0xff]
  %v129 = vld [vmem:[%s1 + $0x2b0] sm:$0xff]
  %v130 = vld [vmem:[%s1 + $0x2b8] sm:$0xff]
  %v131 = vld [vmem:[%s1 + $0x2c0] sm:$0xff]
  %v132 = vld [vmem:[%s1 + $0x2c8] sm:$0xff]
  %v133 = vld [vmem:[%s1 + $0x2d0] sm:$0xff]
  %v134 = vld [vmem:[%s1 + $0x2d8] sm:$0xff]
  %v135 = vld [vmem:[%s1 + $0x2e0] sm:$0xff]
  %v136 = vld [vmem:[%s1 + $0x2e8] sm:$0xff]
  %v137 = vld [vmem:[%s1 + $0x2f0] sm:$0xff]
  %v138 = vld [vmem:[%s1 + $0x2f8] sm:$0xff]
  %v139 = vld [vmem:[%s1 + $0x300] sm:$0xff]
  %v140 = vld [vmem:[%s1 + $0x308] sm:$0xff]
  %v141 = vld [vmem:[%s1 + $0x310] sm:$0xff]
  %v142 = vld [vmem:[%s1 + $0x318] sm:$0xff]
  %v143 = vld [vmem:[%s1 + $0x320] sm:$0xff]
  %v144 = vld [vmem:[%s1 + $0x328] sm:$0xff]
  %v145 = vld [vmem:[%s1 + $0x330] sm:$0xff]
  %v146 = vld [vmem:[%s1 + $0x338] sm:$0xff]
  %v147 = vld [vmem:[%s1 + $0x340] sm:$0xff]
  %v148 = vld [vmem:[%s1 + $0x348] sm:$0xff]
  %v149 = vld [vmem:[%s1 + $0x350] sm:$0xff]
  %v150 = vld [vmem:[%s1 + $0x358] sm:$0xff]
  %v151 = vld [vmem:[%s1 + $0x360] sm:$0xff]
  %v152 = vld [vmem:[%s1 + $0x368] sm:$0xff]
  %v153 = vld [vmem:[%s1 + $0x370] sm:$0xff]
  %v154 = vld [vmem:[%s1 + $0x378] sm:$0xff]
  %v155 = vld [vmem:[%s1 + $0x380] sm:$0xff]
  %v156 = vld [vmem:[%s1 + $0x388] sm:$0xff]
  %v157 = vld [vmem:[%s1 + $0x390] sm:$0xff]
  %v158 = vld [vmem:[%s1 + $0x398] sm:$0xff]
  %v159 = vld [vmem:[%s1 + $0x3a0] sm:$0xff]
  %v160 = vld [vmem:[%s1 + $0x3a8] sm:$0xff]
  %v161 = vld [vmem:[%s1 + $0x3b0] sm:$0xff]
  %v162 = vld [vmem:[%s1 + $0x3b8] sm:$0xff]
  %v163 = vld [vmem:[%s1 + $0x3c0] sm:$0xff]
  %v164 = vld [vmem:[%s1 + $0x3c8] sm:$0xff]
  %v165 = vld [vmem:[%s1 + $0x3d0] sm:$0xff]
  %v166 = vld [vmem:[%s1 + $0x3d8] sm:$0xff]
  %v167 = vld [vmem:[%s1 + $0x3e0] sm:$0xff]
  %v168 = vld [vmem:[%s1 + $0x3e8] sm:$0xff]
  %v169 = vld [vmem:[%s1 + $0x3f0] sm:$0xff]
  %v170 = vld [vmem:[%s1 + $0x3f8] sm:$0xff]
  %v171 = vld [vmem:[%s1 + $0x400] sm:$0xff]
  %v172 = vld [vmem:[%s1 + $0x408] sm:$0xff]
  %v173 = vld [vmem:[%s1 + $0x410] sm:$0xff]
  %v174 = vld [vmem:[%s1 + $0x418] sm:$0xff]
  %v175 = vld [vmem:[%s1 + $0x420] sm:$0xff]
  %v176 = vld [vmem:[%s1 + $0x428] sm:$0xff]
  %v177 = vld [vmem:[%s1 + $0x430] sm:$0xff]
  %v178 = vld [vmem:[%s1 + $0x438] sm:$0xff]
  %v179 = vld [vmem:[%s1 + $0x440] sm:$0xff]
  %v180 = vld [vmem:[%s1 + $0x448] sm:$0xff]
  %v181 = vld [vmem:[%s1 + $0x450] sm:$0xff]
  %v182 = vld [vmem:[%s1 + $0x458] sm:$0xff]
  %v183 = vld [vmem:[%s1 + $0x460] sm:$0xff]
  %v184 = vld [vmem:[%s1 + $0x468] sm:$0xff]
  %v185 = vld [vmem:[%s1 + $0x470] sm:$0xff]
  %v186 = vld [vmem:[%s1 + $0x478] sm:$0xff]
  %v187 = vld [vmem:[%s1 + $0x480] sm:$0xff]
  %v188 = vld [vmem:[%s1 + $0x488] sm:$0xff]
  %v189 = vld [vmem:[%s1 + $0x490] sm:$0xff]
  %v190 = vld [vmem:[%s1 + $0x498] sm:$0xff]
  %v191 = vld [vmem:[%s1 + $0x4a0] sm:$0xff]
  %v192 = vld [vmem:[%s1 + $0x4a8] sm:$0xff]
  %v193 = vld [vmem:[%s1 + $0x4b0] sm:$0xff]
  %v194 = vld [vmem:[%s1 + $0x4b8] sm:$0xff]
  %v195 = vld [vmem:[%s1 + $0x4c0] sm:$0xff]
  %v196 = vld [vmem:[%s1 + $0x4c8] sm:$0xff]
  %v197 = vld [vmem:[%s1 + $0x4d0] sm:$0xff]
  %v198 = vld [vmem:[%s1 + $0x4d8] sm:$0xff]
  %v199 = vld [vmem:[%s1 + $0x4e0] sm:$0xff]
  %v200 = vld [vmem:[%s1 + $0x4e8] sm:$0xff]
  %v201 = vld [vmem:[%s1 + $0x4f0] sm:$0xff]
  %v202 = vld [vmem:[%s1 + $0x4f8] sm:$0xff]
  %v203 = vld [vmem:[%s1 + $0x500] sm:$0xff]
  %v204 = vld [vmem:[%s1 + $0x508] sm:$0xff]
  %v205 = vld [vmem:[%s1 + $0x510] sm:$0xff]
  %v206 = vld [vmem:[%s1 + $0x518] sm:$0xff]
  %v207 = vld [vmem:[%s1 + $0x520] sm:$0xff]
  %v208 = vld [vmem:[%s1 + $0x528] sm:$0xff]
  %v209 = vld [vmem:[%s1 + $0x530] sm:$0xff]
  %v210 = vld [vmem:[%s1 + $0x538] sm:$0xff]
  %v211 = vld [vmem:[%s1 + $0x540] sm:$0xff]
  %v212 = vld [vmem:[%s1 + $0x548] sm:$0xff]
  %v213 = vld [vmem:[%s1 + $0x550] sm:$0xff]
  %v214 = vld [vmem:[%s1 + $0x558] sm:$0xff]
  %v215 = vld [vmem:[%s1 + $0x560] sm:$0xff]
  %v216 = vld [vmem:[%s1 + $0x568] sm:$0xff]
  %v217 = vld [vmem:[%s1 + $0x570] sm:$0xff]
  %v218 = vld [vmem:[%s1 + $0x578] sm:$0xff]
  %v219 = vld [vmem:[%s1 + $0x580] sm:$0xff]
  %v220 = vld [vmem:[%s1 + $0x588] sm:$0xff]
  %v221 = vld [vmem:[%s1 + $0x590] sm:$0xff]
  %v222 = vld [vmem:[%s1 + $0x598] sm:$0xff]
  %v223 = vld [vmem:[%s1 + $0x5a0] sm:$0xff]
  %v224 = vld [vmem:[%s1 + $0x5a8] sm:$0xff]
  %v225 = vld [vmem:[%s1 + $0x5b0] sm:$0xff]
  %v226 = vld [vmem:[%s1 + $0x5b8] sm:$0xff]
  %v227 = vld [vmem:[%s1 + $0x5c0] sm:$0xff]
  %v228 = vld [vmem:[%s1 + $0x5c8] sm:$0xff]
  %v229 = vld [vmem:[%s1 + $0x5d0] sm:$0xff]
  %v230 = vld [vmem:[%s1 + $0x5d8] sm:$0xff]
  %v231 = vld [vmem:[%s1 + $0x5e0] sm:$0xff]
  %v232 = vld [vmem:[%s1 + $0x5e8] sm:$0xff]
  %v233 = vld [vmem:[%s1 + $0x5f0] sm:$0xff]
  %v234 = vld [vmem:[%s1 + $0x5f8] sm:$0xff]
  %v235 = vld [vmem:[%s1 + $0x600] sm:$0xff]
  %v236 = vld [vmem:[%s1 + $0x608] sm:$0xff]
  %v237 = vld [vmem:[%s1 + $0x610] sm:$0xff]
  %v238 = vld [vmem:[%s1 + $0x618] sm:$0xff]
  %v239 = vld [vmem:[%s1 + $0x620] sm:$0xff]
  %v240 = vld [vmem:[%s1 + $0x628] sm:$0xff]
  %v241 = vld [vmem:[%s1 + $0x630] sm:$0xff]
  %v242 = vld [vmem:[%s1 + $0x638] sm:$0xff]
  %v243 = vld [vmem:[%s1 + $0x640] sm:$0xff]
  %v244 = vld [vmem:[%s1 + $0x648] sm:$0xff]
  %v245 = vld [vmem:[%s1 + $0x650] sm:$0xff]
  %v246 = vld [vmem:[%s1 + $0x658] sm:$0xff]
  %v247 = vld [vmem:[%s1 + $0x660] sm:$0xff]
  %v248 = vld [vmem:[%s1 + $0x668] sm:$0xff]
  %v249 = vld [vmem:[%s1 + $0x670] sm:$0xff]
  %v250 = vld [vmem:[%s1 + $0x678] sm:$0xff]
  %v251 = vld [vmem:[%s1 + $0x680] sm:$0xff]
  %v252 = vld [vmem:[%s1 + $0x688] sm:$0xff]
  %v253 = vld [vmem:[%s1 + $0x690] sm:$0xff]
  %v254 = vld [vmem:[%s1 + $0x698] sm:$0xff]
  %v255 = vld [vmem:[%s1 + $0x6a0] sm:$0xff]
  %v256 = vld [vmem:[%s1 + $0x6a8] sm:$0xff]
  %v257 = vld [vmem:[%s1 + $0x6b0] sm:$0xff]
  %v258 = vld [vmem:[%s1 + $0x6b8] sm:$0xff]
  %v259 = vld [vmem:[%s1 + $0x6c0] sm:$0xff]
  %v260 = vld [vmem:[%s1 + $0x6c8] sm:$0xff]
  %v261 = vld [vmem:[%s1 + $0x6d0] sm:$0xff]
  %v262 = vld [vmem:[%s1 + $0x6d8] sm:$0xff]
  %v263 = vld [vmem:[%s1 + $0x6e0] sm:$0xff]
  %v264 = vld [vmem:[%s1 + $0x6e8] sm:$0xff]
  %v265 = vld [vmem:[%s1 + $0x6f0] sm:$0xff]
  %v266 = vld [vmem:[%s1 + $0x6f8] sm:$0xff]
  %v267 = vld [vmem:[%s1 + $0x700] sm:$0xff]
  %v268 = vld [vmem:[%s1 + $0x708] sm:$0xff]
  %v269 = vld [vmem:[%s1 + $0x710] sm:$0xff]
  %v270 = vld [vmem:[%s1 + $0x718] sm:$0xff]
  %v271 = vld [vmem:[%s1 + $0x720] sm:$0xff]
  %v272 = vld [vmem:[%s1 + $0x728] sm:$0xff]
  %v273 = vld [vmem:[%s1 + $0x730] sm:$0xff]
  %v274 = vld [vmem:[%s1 + $0x738] sm:$0xff]
  %v275 = vld [vmem:[%s1 + $0x740] sm:$0xff]
  %v276 = vld [vmem:[%s1 + $0x748] sm:$0xff]
  %v277 = vld [vmem:[%s1 + $0x750] sm:$0xff]
  %v278 = vld [vmem:[%s1 + $0x758] sm:$0xff]
  %v279 = vld [vmem:[%s1 + $0x760] sm:$0xff]
  %v280 = vld [vmem:[%s1 + $0x768] sm:$0xff]
  %v281 = vld [vmem:[%s1 + $0x770] sm:$0xff]
  %v282 = vld [vmem:[%s1 + $0x778] sm:$0xff]
  %v283 = vld [vmem:[%s1 + $0x780] sm:$0xff]
  %v284 = vld [vmem:[%s1 + $0x788] sm:$0xff]
  %v285 = vld [vmem:[%s1 + $0x790] sm:$0xff]
  %v286 = vld [vmem:[%s1 + $0x798] sm:$0xff]
  %v287 = vld [vmem:[%s1 + $0x7a0] sm:$0xff]
  %v288 = vld [vmem:[%s1 + $0x7a8] sm:$0xff]
  %v289 = vld [vmem:[%s1 + $0x7b0] sm:$0xff]
  %v290 = vld [vmem:[%s1 + $0x7b8] sm:$0xff]
  %v291 = vld [vmem:[%s1 + $0x7c0] sm:$0xff]
  %v292 = vld [vmem:[%s1 + $0x7c8] sm:$0xff]
  %v293 = vld [vmem:[%s1 + $0x7d0] sm:$0xff]
  %v294 = vld [vmem:[%s1 + $0x7d8] sm:$0xff]
  %v295 = vld [vmem:[%s1 + $0x7e0] sm:$0xff]
  %v296 = vld [vmem:[%s1 + $0x7e8] sm:$0xff]
  %v297 = vld [vmem:[%s1 + $0x7f0] sm:$0xff]
  %v298 = vld [vmem:[%s1 + $0x7f8] sm:$0xff]
  %v299 = vld [vmem:[%s2] sm:$0xf]
  %v301 = vlaneseq
  %v302 = vshrl.u32 %v301, 7
  %v303 = vsub.s32 0, %v302
  %v304 = vrot.slane %v299, %v303
  %v305 = vlaneseq
  %v306 = vshrl.u32 %v305, 7
  %v307 = vsub.s32 1, %v306
  %v308 = vrot.slane %v299, %v307
  %v309 = vlaneseq
  %v310 = vshrl.u32 %v309, 7
  %v311 = vsub.s32 2, %v310
  %v312 = vrot.slane %v299, %v311
  %v313 = vlaneseq
  %v314 = vshrl.u32 %v313, 7
  %v315 = vsub.s32 3, %v314
  %v316 = vrot.slane %v299, %v315
  %v325 = vunpack.c.l.b16 %v39
  %v326 = vunpack.c.h.b16 %v39
  %v327 = vunpack.c.l.b16 %v40
  %v328 = vunpack.c.h.b16 %v40
  %v329 = vunpack.c.l.b16 %v41
  %v330 = vunpack.c.h.b16 %v41
  %v331 = vunpack.c.l.b16 %v42
  %v332 = vunpack.c.h.b16 %v42
  %v333 = vpack.c.b16 %v325, %v325
  %v334 = vpack.c.b16 %v326, %v326
  %v335 = vpack.c.b16 %v327, %v327
  %v336 = vpack.c.b16 %v328, %v328
  %v337 = vpack.c.b16 %v329, %v329
  %v338 = vpack.c.b16 %v330, %v330
  %v339 = vpack.c.b16 %v331, %v331
  %v340 = vpack.c.b16 %v332, %v332
  %v605 = vunpack.c.l.b16 %v43
  %v606 = vunpack.c.h.b16 %v43
  %v607 = vunpack.c.l.b16 %v44
  %v608 = vunpack.c.h.b16 %v44
  %v609 = vunpack.c.l.b16 %v45
  %v610 = vunpack.c.h.b16 %v45
  %v611 = vunpack.c.l.b16 %v46
  %v612 = vunpack.c.h.b16 %v46
  %v613 = vunpack.c.l.b16 %v47
  %v614 = vunpack.c.h.b16 %v47
  %v615 = vunpack.c.l.b16 %v48
  %v616 = vunpack.c.h.b16 %v48
  %v617 = vunpack.c.l.b16 %v49
  %v618 = vunpack.c.h.b16 %v49
  %v619 = vunpack.c.l.b16 %v50
  %v620 = vunpack.c.h.b16 %v50
  %v621 = vunpack.c.l.b16 %v51
  %v622 = vunpack.c.h.b16 %v51
  %v623 = vunpack.c.l.b16 %v52
  %v624 = vunpack.c.h.b16 %v52
  %v625 = vunpack.c.l.b16 %v53
  %v626 = vunpack.c.h.b16 %v53
  %v627 = vunpack.c.l.b16 %v54
  %v628 = vunpack.c.h.b16 %v54
  %v629 = vunpack.c.l.b16 %v55
  %v630 = vunpack.c.h.b16 %v55
  %v631 = vunpack.c.l.b16 %v56
  %v632 = vunpack.c.h.b16 %v56
  %v633 = vunpack.c.l.b16 %v57
  %v634 = vunpack.c.h.b16 %v57
  %v635 = vunpack.c.l.b16 %v58
  %v636 = vunpack.c.h.b16 %v58
  %v637 = vunpack.c.l.b16 %v59
  %v638 = vunpack.c.h.b16 %v59
  %v639 = vunpack.c.l.b16 %v60
  %v640 = vunpack.c.h.b16 %v60
  %v641 = vunpack.c.l.b16 %v61
  %v642 = vunpack.c.h.b16 %v61
  %v643 = vunpack.c.l.b16 %v62
  %v644 = vunpack.c.h.b16 %v62
  %v645 = vunpack.c.l.b16 %v63
  %v646 = vunpack.c.h.b16 %v63
  %v647 = vunpack.c.l.b16 %v64
  %v648 = vunpack.c.h.b16 %v64
  %v649 = vunpack.c.l.b16 %v65
  %v650 = vunpack.c.h.b16 %v65
  %v651 = vunpack.c.l.b16 %v66
  %v652 = vunpack.c.h.b16 %v66
  %v653 = vunpack.c.l.b16 %v67
  %v654 = vunpack.c.h.b16 %v67
  %v655 = vunpack.c.l.b16 %v68
  %v656 = vunpack.c.h.b16 %v68
  %v657 = vunpack.c.l.b16 %v69
  %v658 = vunpack.c.h.b16 %v69
  %v659 = vunpack.c.l.b16 %v70
  %v660 = vunpack.c.h.b16 %v70
  %v661 = vunpack.c.l.b16 %v71
  %v662 = vunpack.c.h.b16 %v71
  %v663 = vunpack.c.l.b16 %v72
  %v664 = vunpack.c.h.b16 %v72
  %v665 = vunpack.c.l.b16 %v73
  %v666 = vunpack.c.h.b16 %v73
  %v667 = vunpack.c.l.b16 %v74
  %v668 = vunpack.c.h.b16 %v74
  %v669 = vunpack.c.l.b16 %v75
  %v670 = vunpack.c.h.b16 %v75
  %v671 = vunpack.c.l.b16 %v76
  %v672 = vunpack.c.h.b16 %v76
  %v673 = vunpack.c.l.b16 %v77
  %v674 = vunpack.c.h.b16 %v77
  %v675 = vunpack.c.l.b16 %v78
  %v676 = vunpack.c.h.b16 %v78
  %v677 = vunpack.c.l.b16 %v79
  %v678 = vunpack.c.h.b16 %v79
  %v679 = vunpack.c.l.b16 %v80
  %v680 = vunpack.c.h.b16 %v80
  %v681 = vunpack.c.l.b16 %v81
  %v682 = vunpack.c.h.b16 %v81
  %v683 = vunpack.c.l.b16 %v82
  %v684 = vunpack.c.h.b16 %v82
  %v685 = vunpack.c.l.b16 %v83
  %v686 = vunpack.c.h.b16 %v83
  %v687 = vunpack.c.l.b16 %v84
  %v688 = vunpack.c.h.b16 %v84
  %v689 = vunpack.c.l.b16 %v85
  %v690 = vunpack.c.h.b16 %v85
  %v691 = vunpack.c.l.b16 %v86
  %v692 = vunpack.c.h.b16 %v86
  %v693 = vunpack.c.l.b16 %v87
  %v694 = vunpack.c.h.b16 %v87
  %v695 = vunpack.c.l.b16 %v88
  %v696 = vunpack.c.h.b16 %v88
  %v697 = vunpack.c.l.b16 %v89
  %v698 = vunpack.c.h.b16 %v89
  %v699 = vunpack.c.l.b16 %v90
  %v700 = vunpack.c.h.b16 %v90
  %v701 = vunpack.c.l.b16 %v91
  %v702 = vunpack.c.h.b16 %v91
  %v703 = vunpack.c.l.b16 %v92
  %v704 = vunpack.c.h.b16 %v92
  %v705 = vunpack.c.l.b16 %v93
  %v706 = vunpack.c.h.b16 %v93
  %v707 = vunpack.c.l.b16 %v94
  %v708 = vunpack.c.h.b16 %v94
  %v709 = vunpack.c.l.b16 %v95
  %v710 = vunpack.c.h.b16 %v95
  %v711 = vunpack.c.l.b16 %v96
  %v712 = vunpack.c.h.b16 %v96
  %v713 = vunpack.c.l.b16 %v97
  %v714 = vunpack.c.h.b16 %v97
  %v715 = vunpack.c.l.b16 %v98
  %v716 = vunpack.c.h.b16 %v98
  %v717 = vunpack.c.l.b16 %v99
  %v718 = vunpack.c.h.b16 %v99
  %v719 = vunpack.c.l.b16 %v100
  %v720 = vunpack.c.h.b16 %v100
  %v721 = vunpack.c.l.b16 %v101
  %v722 = vunpack.c.h.b16 %v101
  %v723 = vunpack.c.l.b16 %v102
  %v724 = vunpack.c.h.b16 %v102
  %v725 = vunpack.c.l.b16 %v103
  %v726 = vunpack.c.h.b16 %v103
  %v727 = vunpack.c.l.b16 %v104
  %v728 = vunpack.c.h.b16 %v104
  %v729 = vunpack.c.l.b16 %v105
  %v730 = vunpack.c.h.b16 %v105
  %v731 = vunpack.c.l.b16 %v106
  %v732 = vunpack.c.h.b16 %v106
  %v733 = vunpack.c.l.b16 %v107
  %v734 = vunpack.c.h.b16 %v107
  %v735 = vunpack.c.l.b16 %v108
  %v736 = vunpack.c.h.b16 %v108
  %v737 = vunpack.c.l.b16 %v109
  %v738 = vunpack.c.h.b16 %v109
  %v739 = vunpack.c.l.b16 %v110
  %v740 = vunpack.c.h.b16 %v110
  %v741 = vunpack.c.l.b16 %v111
  %v742 = vunpack.c.h.b16 %v111
  %v743 = vunpack.c.l.b16 %v112
  %v744 = vunpack.c.h.b16 %v112
  %v745 = vunpack.c.l.b16 %v113
  %v746 = vunpack.c.h.b16 %v113
  %v747 = vunpack.c.l.b16 %v114
  %v748 = vunpack.c.h.b16 %v114
  %v749 = vunpack.c.l.b16 %v115
  %v750 = vunpack.c.h.b16 %v115
  %v751 = vunpack.c.l.b16 %v116
  %v752 = vunpack.c.h.b16 %v116
  %v753 = vunpack.c.l.b16 %v117
  %v754 = vunpack.c.h.b16 %v117
  %v755 = vunpack.c.l.b16 %v118
  %v756 = vunpack.c.h.b16 %v118
  %v757 = vunpack.c.l.b16 %v119
  %v758 = vunpack.c.h.b16 %v119
  %v759 = vunpack.c.l.b16 %v120
  %v760 = vunpack.c.h.b16 %v120
  %v761 = vunpack.c.l.b16 %v121
  %v762 = vunpack.c.h.b16 %v121
  %v763 = vunpack.c.l.b16 %v122
  %v764 = vunpack.c.h.b16 %v122
  %v765 = vunpack.c.l.b16 %v123
  %v766 = vunpack.c.h.b16 %v123
  %v767 = vunpack.c.l.b16 %v124
  %v768 = vunpack.c.h.b16 %v124
  %v769 = vunpack.c.l.b16 %v125
  %v770 = vunpack.c.h.b16 %v125
  %v771 = vunpack.c.l.b16 %v126
  %v772 = vunpack.c.h.b16 %v126
  %v773 = vunpack.c.l.b16 %v127
  %v774 = vunpack.c.h.b16 %v127
  %v775 = vunpack.c.l.b16 %v128
  %v776 = vunpack.c.h.b16 %v128
  %v777 = vunpack.c.l.b16 %v129
  %v778 = vunpack.c.h.b16 %v129
  %v779 = vunpack.c.l.b16 %v130
  %v780 = vunpack.c.h.b16 %v130
  %v781 = vunpack.c.l.b16 %v131
  %v782 = vunpack.c.h.b16 %v131
  %v783 = vunpack.c.l.b16 %v132
  %v784 = vunpack.c.h.b16 %v132
  %v785 = vunpack.c.l.b16 %v133
  %v786 = vunpack.c.h.b16 %v133
  %v787 = vunpack.c.l.b16 %v134
  %v788 = vunpack.c.h.b16 %v134
  %v789 = vunpack.c.l.b16 %v135
  %v790 = vunpack.c.h.b16 %v135
  %v791 = vunpack.c.l.b16 %v136
  %v792 = vunpack.c.h.b16 %v136
  %v793 = vunpack.c.l.b16 %v137
  %v794 = vunpack.c.h.b16 %v137
  %v795 = vunpack.c.l.b16 %v138
  %v796 = vunpack.c.h.b16 %v138
  %v797 = vunpack.c.l.b16 %v139
  %v798 = vunpack.c.h.b16 %v139
  %v799 = vunpack.c.l.b16 %v140
  %v800 = vunpack.c.h.b16 %v140
  %v801 = vunpack.c.l.b16 %v141
  %v802 = vunpack.c.h.b16 %v141
  %v803 = vunpack.c.l.b16 %v142
  %v804 = vunpack.c.h.b16 %v142
  %v805 = vunpack.c.l.b16 %v143
  %v806 = vunpack.c.h.b16 %v143
  %v807 = vunpack.c.l.b16 %v144
  %v808 = vunpack.c.h.b16 %v144
  %v809 = vunpack.c.l.b16 %v145
  %v810 = vunpack.c.h.b16 %v145
  %v811 = vunpack.c.l.b16 %v146
  %v812 = vunpack.c.h.b16 %v146
  %v813 = vunpack.c.l.b16 %v147
  %v814 = vunpack.c.h.b16 %v147
  %v815 = vunpack.c.l.b16 %v148
  %v816 = vunpack.c.h.b16 %v148
  %v817 = vunpack.c.l.b16 %v149
  %v818 = vunpack.c.h.b16 %v149
  %v819 = vunpack.c.l.b16 %v150
  %v820 = vunpack.c.h.b16 %v150
  %v821 = vunpack.c.l.b16 %v151
  %v822 = vunpack.c.h.b16 %v151
  %v823 = vunpack.c.l.b16 %v152
  %v824 = vunpack.c.h.b16 %v152
  %v825 = vunpack.c.l.b16 %v153
  %v826 = vunpack.c.h.b16 %v153
  %v827 = vunpack.c.l.b16 %v154
  %v828 = vunpack.c.h.b16 %v154
  %v829 = vunpack.c.l.b16 %v155
  %v830 = vunpack.c.h.b16 %v155
  %v831 = vunpack.c.l.b16 %v156
  %v832 = vunpack.c.h.b16 %v156
  %v833 = vunpack.c.l.b16 %v157
  %v834 = vunpack.c.h.b16 %v157
  %v835 = vunpack.c.l.b16 %v158
  %v836 = vunpack.c.h.b16 %v158
  %v837 = vunpack.c.l.b16 %v159
  %v838 = vunpack.c.h.b16 %v159
  %v839 = vunpack.c.l.b16 %v160
  %v840 = vunpack.c.h.b16 %v160
  %v841 = vunpack.c.l.b16 %v161
  %v842 = vunpack.c.h.b16 %v161
  %v843 = vunpack.c.l.b16 %v162
  %v844 = vunpack.c.h.b16 %v162
  %v845 = vunpack.c.l.b16 %v163
  %v846 = vunpack.c.h.b16 %v163
  %v847 = vunpack.c.l.b16 %v164
  %v848 = vunpack.c.h.b16 %v164
  %v849 = vunpack.c.l.b16 %v165
  %v850 = vunpack.c.h.b16 %v165
  %v851 = vunpack.c.l.b16 %v166
  %v852 = vunpack.c.h.b16 %v166
  %v853 = vunpack.c.l.b16 %v167
  %v854 = vunpack.c.h.b16 %v167
  %v855 = vunpack.c.l.b16 %v168
  %v856 = vunpack.c.h.b16 %v168
  %v857 = vunpack.c.l.b16 %v169
  %v858 = vunpack.c.h.b16 %v169
  %v859 = vunpack.c.l.b16 %v170
  %v860 = vunpack.c.h.b16 %v170
  %v861 = vunpack.c.l.b16 %v171
  %v862 = vunpack.c.h.b16 %v171
  %v863 = vunpack.c.l.b16 %v172
  %v864 = vunpack.c.h.b16 %v172
  %v865 = vunpack.c.l.b16 %v173
  %v866 = vunpack.c.h.b16 %v173
  %v867 = vunpack.c.l.b16 %v174
  %v868 = vunpack.c.h.b16 %v174
  %v869 = vunpack.c.l.b16 %v175
  %v870 = vunpack.c.h.b16 %v175
  %v871 = vunpack.c.l.b16 %v176
  %v872 = vunpack.c.h.b16 %v176
  %v873 = vunpack.c.l.b16 %v177
  %v874 = vunpack.c.h.b16 %v177
  %v875 = vunpack.c.l.b16 %v178
  %v876 = vunpack.c.h.b16 %v178
  %v877 = vunpack.c.l.b16 %v179
  %v878 = vunpack.c.h.b16 %v179
  %v879 = vunpack.c.l.b16 %v180
  %v880 = vunpack.c.h.b16 %v180
  %v881 = vunpack.c.l.b16 %v181
  %v882 = vunpack.c.h.b16 %v181
  %v883 = vunpack.c.l.b16 %v182
  %v884 = vunpack.c.h.b16 %v182
  %v885 = vunpack.c.l.b16 %v183
  %v886 = vunpack.c.h.b16 %v183
  %v887 = vunpack.c.l.b16 %v184
  %v888 = vunpack.c.h.b16 %v184
  %v889 = vunpack.c.l.b16 %v185
  %v890 = vunpack.c.h.b16 %v185
  %v891 = vunpack.c.l.b16 %v186
  %v892 = vunpack.c.h.b16 %v186
  %v893 = vunpack.c.l.b16 %v187
  %v894 = vunpack.c.h.b16 %v187
  %v895 = vunpack.c.l.b16 %v188
  %v896 = vunpack.c.h.b16 %v188
  %v897 = vunpack.c.l.b16 %v189
  %v898 = vunpack.c.h.b16 %v189
  %v899 = vunpack.c.l.b16 %v190
  %v900 = vunpack.c.h.b16 %v190
  %v901 = vunpack.c.l.b16 %v191
  %v902 = vunpack.c.h.b16 %v191
  %v903 = vunpack.c.l.b16 %v192
  %v904 = vunpack.c.h.b16 %v192
  %v905 = vunpack.c.l.b16 %v193
  %v906 = vunpack.c.h.b16 %v193
  %v907 = vunpack.c.l.b16 %v194
  %v908 = vunpack.c.h.b16 %v194
  %v909 = vunpack.c.l.b16 %v195
  %v910 = vunpack.c.h.b16 %v195
  %v911 = vunpack.c.l.b16 %v196
  %v912 = vunpack.c.h.b16 %v196
  %v913 = vunpack.c.l.b16 %v197
  %v914 = vunpack.c.h.b16 %v197
  %v915 = vunpack.c.l.b16 %v198
  %v916 = vunpack.c.h.b16 %v198
  %v917 = vunpack.c.l.b16 %v199
  %v918 = vunpack.c.h.b16 %v199
  %v919 = vunpack.c.l.b16 %v200
  %v920 = vunpack.c.h.b16 %v200
  %v921 = vunpack.c.l.b16 %v201
  %v922 = vunpack.c.h.b16 %v201
  %v923 = vunpack.c.l.b16 %v202
  %v924 = vunpack.c.h.b16 %v202
  %v925 = vunpack.c.l.b16 %v203
  %v926 = vunpack.c.h.b16 %v203
  %v927 = vunpack.c.l.b16 %v204
  %v928 = vunpack.c.h.b16 %v204
  %v929 = vunpack.c.l.b16 %v205
  %v930 = vunpack.c.h.b16 %v205
  %v931 = vunpack.c.l.b16 %v206
  %v932 = vunpack.c.h.b16 %v206
  %v933 = vunpack.c.l.b16 %v207
  %v934 = vunpack.c.h.b16 %v207
  %v935 = vunpack.c.l.b16 %v208
  %v936 = vunpack.c.h.b16 %v208
  %v937 = vunpack.c.l.b16 %v209
  %v938 = vunpack.c.h.b16 %v209
  %v939 = vunpack.c.l.b16 %v210
  %v940 = vunpack.c.h.b16 %v210
  %v941 = vunpack.c.l.b16 %v211
  %v942 = vunpack.c.h.b16 %v211
  %v943 = vunpack.c.l.b16 %v212
  %v944 = vunpack.c.h.b16 %v212
  %v945 = vunpack.c.l.b16 %v213
  %v946 = vunpack.c.h.b16 %v213
  %v947 = vunpack.c.l.b16 %v214
  %v948 = vunpack.c.h.b16 %v214
  %v949 = vunpack.c.l.b16 %v215
  %v950 = vunpack.c.h.b16 %v215
  %v951 = vunpack.c.l.b16 %v216
  %v952 = vunpack.c.h.b16 %v216
  %v953 = vunpack.c.l.b16 %v217
  %v954 = vunpack.c.h.b16 %v217
  %v955 = vunpack.c.l.b16 %v218
  %v956 = vunpack.c.h.b16 %v218
  %v957 = vunpack.c.l.b16 %v219
  %v958 = vunpack.c.h.b16 %v219
  %v959 = vunpack.c.l.b16 %v220
  %v960 = vunpack.c.h.b16 %v220
  %v961 = vunpack.c.l.b16 %v221
  %v962 = vunpack.c.h.b16 %v221
  %v963 = vunpack.c.l.b16 %v222
  %v964 = vunpack.c.h.b16 %v222
  %v965 = vunpack.c.l.b16 %v223
  %v966 = vunpack.c.h.b16 %v223
  %v967 = vunpack.c.l.b16 %v224
  %v968 = vunpack.c.h.b16 %v224
  %v969 = vunpack.c.l.b16 %v225
  %v970 = vunpack.c.h.b16 %v225
  %v971 = vunpack.c.l.b16 %v226
  %v972 = vunpack.c.h.b16 %v226
  %v973 = vunpack.c.l.b16 %v227
  %v974 = vunpack.c.h.b16 %v227
  %v975 = vunpack.c.l.b16 %v228
  %v976 = vunpack.c.h.b16 %v228
  %v977 = vunpack.c.l.b16 %v229
  %v978 = vunpack.c.h.b16 %v229
  %v979 = vunpack.c.l.b16 %v230
  %v980 = vunpack.c.h.b16 %v230
  %v981 = vunpack.c.l.b16 %v231
  %v982 = vunpack.c.h.b16 %v231
  %v983 = vunpack.c.l.b16 %v232
  %v984 = vunpack.c.h.b16 %v232
  %v985 = vunpack.c.l.b16 %v233
  %v986 = vunpack.c.h.b16 %v233
  %v987 = vunpack.c.l.b16 %v234
  %v988 = vunpack.c.h.b16 %v234
  %v989 = vunpack.c.l.b16 %v235
  %v990 = vunpack.c.h.b16 %v235
  %v991 = vunpack.c.l.b16 %v236
  %v992 = vunpack.c.h.b16 %v236
  %v993 = vunpack.c.l.b16 %v237
  %v994 = vunpack.c.h.b16 %v237
  %v995 = vunpack.c.l.b16 %v238
  %v996 = vunpack.c.h.b16 %v238
  %v997 = vunpack.c.l.b16 %v239
  %v998 = vunpack.c.h.b16 %v239
  %v999 = vunpack.c.l.b16 %v240
  %v1000 = vunpack.c.h.b16 %v240
  %v1001 = vunpack.c.l.b16 %v241
  %v1002 = vunpack.c.h.b16 %v241
  %v1003 = vunpack.c.l.b16 %v242
  %v1004 = vunpack.c.h.b16 %v242
  %v1005 = vunpack.c.l.b16 %v243
  %v1006 = vunpack.c.h.b16 %v243
  %v1007 = vunpack.c.l.b16 %v244
  %v1008 = vunpack.c.h.b16 %v244
  %v1009 = vunpack.c.l.b16 %v245
  %v1010 = vunpack.c.h.b16 %v245
  %v1011 = vunpack.c.l.b16 %v246
  %v1012 = vunpack.c.h.b16 %v246
  %v1013 = vunpack.c.l.b16 %v247
  %v1014 = vunpack.c.h.b16 %v247
  %v1015 = vunpack.c.l.b16 %v248
  %v1016 = vunpack.c.h.b16 %v248
  %v1017 = vunpack.c.l.b16 %v249
  %v1018 = vunpack.c.h.b16 %v249
  %v1019 = vunpack.c.l.b16 %v250
  %v1020 = vunpack.c.h.b16 %v250
  %v1021 = vunpack.c.l.b16 %v251
  %v1022 = vunpack.c.h.b16 %v251
  %v1023 = vunpack.c.l.b16 %v252
  %v1024 = vunpack.c.h.b16 %v252
  %v1025 = vunpack.c.l.b16 %v253
  %v1026 = vunpack.c.h.b16 %v253
  %v1027 = vunpack.c.l.b16 %v254
  %v1028 = vunpack.c.h.b16 %v254
  %v1029 = vunpack.c.l.b16 %v255
  %v1030 = vunpack.c.h.b16 %v255
  %v1031 = vunpack.c.l.b16 %v256
  %v1032 = vunpack.c.h.b16 %v256
  %v1033 = vunpack.c.l.b16 %v257
  %v1034 = vunpack.c.h.b16 %v257
  %v1035 = vunpack.c.l.b16 %v258
  %v1036 = vunpack.c.h.b16 %v258
  %v1037 = vunpack.c.l.b16 %v259
  %v1038 = vunpack.c.h.b16 %v259
  %v1039 = vunpack.c.l.b16 %v260
  %v1040 = vunpack.c.h.b16 %v260
  %v1041 = vunpack.c.l.b16 %v261
  %v1042 = vunpack.c.h.b16 %v261
  %v1043 = vunpack.c.l.b16 %v262
  %v1044 = vunpack.c.h.b16 %v262
  %v1045 = vunpack.c.l.b16 %v263
  %v1046 = vunpack.c.h.b16 %v263
  %v1047 = vunpack.c.l.b16 %v264
  %v1048 = vunpack.c.h.b16 %v264
  %v1049 = vunpack.c.l.b16 %v265
  %v1050 = vunpack.c.h.b16 %v265
  %v1051 = vunpack.c.l.b16 %v266
  %v1052 = vunpack.c.h.b16 %v266
  %v1053 = vunpack.c.l.b16 %v267
  %v1054 = vunpack.c.h.b16 %v267
  %v1055 = vunpack.c.l.b16 %v268
  %v1056 = vunpack.c.h.b16 %v268
  %v1057 = vunpack.c.l.b16 %v269
  %v1058 = vunpack.c.h.b16 %v269
  %v1059 = vunpack.c.l.b16 %v270
  %v1060 = vunpack.c.h.b16 %v270
  %v1061 = vunpack.c.l.b16 %v271
  %v1062 = vunpack.c.h.b16 %v271
  %v1063 = vunpack.c.l.b16 %v272
  %v1064 = vunpack.c.h.b16 %v272
  %v1065 = vunpack.c.l.b16 %v273
  %v1066 = vunpack.c.h.b16 %v273
  %v1067 = vunpack.c.l.b16 %v274
  %v1068 = vunpack.c.h.b16 %v274
  %v1069 = vunpack.c.l.b16 %v275
  %v1070 = vunpack.c.h.b16 %v275
  %v1071 = vunpack.c.l.b16 %v276
  %v1072 = vunpack.c.h.b16 %v276
  %v1073 = vunpack.c.l.b16 %v277
  %v1074 = vunpack.c.h.b16 %v277
  %v1075 = vunpack.c.l.b16 %v278
  %v1076 = vunpack.c.h.b16 %v278
  %v1077 = vunpack.c.l.b16 %v279
  %v1078 = vunpack.c.h.b16 %v279
  %v1079 = vunpack.c.l.b16 %v280
  %v1080 = vunpack.c.h.b16 %v280
  %v1081 = vunpack.c.l.b16 %v281
  %v1082 = vunpack.c.h.b16 %v281
  %v1083 = vunpack.c.l.b16 %v282
  %v1084 = vunpack.c.h.b16 %v282
  %v1085 = vunpack.c.l.b16 %v283
  %v1086 = vunpack.c.h.b16 %v283
  %v1087 = vunpack.c.l.b16 %v284
  %v1088 = vunpack.c.h.b16 %v284
  %v1089 = vunpack.c.l.b16 %v285
  %v1090 = vunpack.c.h.b16 %v285
  %v1091 = vunpack.c.l.b16 %v286
  %v1092 = vunpack.c.h.b16 %v286
  %v1093 = vunpack.c.l.b16 %v287
  %v1094 = vunpack.c.h.b16 %v287
  %v1095 = vunpack.c.l.b16 %v288
  %v1096 = vunpack.c.h.b16 %v288
  %v1097 = vunpack.c.l.b16 %v289
  %v1098 = vunpack.c.h.b16 %v289
  %v1099 = vunpack.c.l.b16 %v290
  %v1100 = vunpack.c.h.b16 %v290
  %v1101 = vunpack.c.l.b16 %v291
  %v1102 = vunpack.c.h.b16 %v291
  %v1103 = vunpack.c.l.b16 %v292
  %v1104 = vunpack.c.h.b16 %v292
  %v1105 = vunpack.c.l.b16 %v293
  %v1106 = vunpack.c.h.b16 %v293
  %v1107 = vunpack.c.l.b16 %v294
  %v1108 = vunpack.c.h.b16 %v294
  %v1109 = vunpack.c.l.b16 %v295
  %v1110 = vunpack.c.h.b16 %v295
  %v1111 = vunpack.c.l.b16 %v296
  %v1112 = vunpack.c.h.b16 %v296
  %v1113 = vunpack.c.l.b16 %v297
  %v1114 = vunpack.c.h.b16 %v297
  %v1115 = vunpack.c.l.b16 %v298
  %v1116 = vunpack.c.h.b16 %v298
  %v1117 = vpack.c.b16 %v609, %v605
  %v1118 = vpack.c.b16 %v610, %v606
  %v1119 = vpack.c.b16 %v611, %v607
  %v1120 = vpack.c.b16 %v612, %v608
  %v1121 = vpack.c.b16 %v617, %v613
  %v1122 = vpack.c.b16 %v618, %v614
  %v1123 = vpack.c.b16 %v619, %v615
  %v1124 = vpack.c.b16 %v620, %v616
  %v1125 = vpack.c.b16 %v625, %v621
  %v1126 = vpack.c.b16 %v626, %v622
  %v1127 = vpack.c.b16 %v627, %v623
  %v1128 = vpack.c.b16 %v628, %v624
  %v1129 = vpack.c.b16 %v633, %v629
  %v1130 = vpack.c.b16 %v634, %v630
  %v1131 = vpack.c.b16 %v635, %v631
  %v1132 = vpack.c.b16 %v636, %v632
  %v1133 = vpack.c.b16 %v641, %v637
  %v1134 = vpack.c.b16 %v642, %v638
  %v1135 = vpack.c.b16 %v643, %v639
  %v1136 = vpack.c.b16 %v644, %v640
  %v1137 = vpack.c.b16 %v649, %v645
  %v1138 = vpack.c.b16 %v650, %v646
  %v1139 = vpack.c.b16 %v651, %v647
  %v1140 = vpack.c.b16 %v652, %v648
  %v1141 = vpack.c.b16 %v657, %v653
  %v1142 = vpack.c.b16 %v658, %v654
  %v1143 = vpack.c.b16 %v659, %v655
  %v1144 = vpack.c.b16 %v660, %v656
  %v1145 = vpack.c.b16 %v665, %v661
  %v1146 = vpack.c.b16 %v666, %v662
  %v1147 = vpack.c.b16 %v667, %v663
  %v1148 = vpack.c.b16 %v668, %v664
  %v1149 = vpack.c.b16 %v673, %v669
  %v1150 = vpack.c.b16 %v674, %v670
  %v1151 = vpack.c.b16 %v675, %v671
  %v1152 = vpack.c.b16 %v676, %v672
  %v1153 = vpack.c.b16 %v681, %v677
  %v1154 = vpack.c.b16 %v682, %v678
  %v1155 = vpack.c.b16 %v683, %v679
  %v1156 = vpack.c.b16 %v684, %v680
  %v1157 = vpack.c.b16 %v689, %v685
  %v1158 = vpack.c.b16 %v690, %v686
  %v1159 = vpack.c.b16 %v691, %v687
  %v1160 = vpack.c.b16 %v692, %v688
  %v1161 = vpack.c.b16 %v697, %v693
  %v1162 = vpack.c.b16 %v698, %v694
  %v1163 = vpack.c.b16 %v699, %v695
  %v1164 = vpack.c.b16 %v700, %v696
  %v1165 = vpack.c.b16 %v705, %v701
  %v1166 = vpack.c.b16 %v706, %v702
  %v1167 = vpack.c.b16 %v707, %v703
  %v1168 = vpack.c.b16 %v708, %v704
  %v1169 = vpack.c.b16 %v713, %v709
  %v1170 = vpack.c.b16 %v714, %v710
  %v1171 = vpack.c.b16 %v715, %v711
  %v1172 = vpack.c.b16 %v716, %v712
  %v1173 = vpack.c.b16 %v721, %v717
  %v1174 = vpack.c.b16 %v722, %v718
  %v1175 = vpack.c.b16 %v723, %v719
  %v1176 = vpack.c.b16 %v724, %v720
  %v1177 = vpack.c.b16 %v729, %v725
  %v1178 = vpack.c.b16 %v730, %v726
  %v1179 = vpack.c.b16 %v731, %v727
  %v1180 = vpack.c.b16 %v732, %v728
  %v1181 = vpack.c.b16 %v737, %v733
  %v1182 = vpack.c.b16 %v738, %v734
  %v1183 = vpack.c.b16 %v739, %v735
  %v1184 = vpack.c.b16 %v740, %v736
  %v1185 = vpack.c.b16 %v745, %v741
  %v1186 = vpack.c.b16 %v746, %v742
  %v1187 = vpack.c.b16 %v747, %v743
  %v1188 = vpack.c.b16 %v748, %v744
  %v1189 = vpack.c.b16 %v753, %v749
  %v1190 = vpack.c.b16 %v754, %v750
  %v1191 = vpack.c.b16 %v755, %v751
  %v1192 = vpack.c.b16 %v756, %v752
  %v1193 = vpack.c.b16 %v761, %v757
  %v1194 = vpack.c.b16 %v762, %v758
  %v1195 = vpack.c.b16 %v763, %v759
  %v1196 = vpack.c.b16 %v764, %v760
  %v1197 = vpack.c.b16 %v769, %v765
  %v1198 = vpack.c.b16 %v770, %v766
  %v1199 = vpack.c.b16 %v771, %v767
  %v1200 = vpack.c.b16 %v772, %v768
  %v1201 = vpack.c.b16 %v777, %v773
  %v1202 = vpack.c.b16 %v778, %v774
  %v1203 = vpack.c.b16 %v779, %v775
  %v1204 = vpack.c.b16 %v780, %v776
  %v1205 = vpack.c.b16 %v785, %v781
  %v1206 = vpack.c.b16 %v786, %v782
  %v1207 = vpack.c.b16 %v787, %v783
  %v1208 = vpack.c.b16 %v788, %v784
  %v1209 = vpack.c.b16 %v793, %v789
  %v1210 = vpack.c.b16 %v794, %v790
  %v1211 = vpack.c.b16 %v795, %v791
  %v1212 = vpack.c.b16 %v796, %v792
  %v1213 = vpack.c.b16 %v801, %v797
  %v1214 = vpack.c.b16 %v802, %v798
  %v1215 = vpack.c.b16 %v803, %v799
  %v1216 = vpack.c.b16 %v804, %v800
  %v1217 = vpack.c.b16 %v809, %v805
  %v1218 = vpack.c.b16 %v810, %v806
  %v1219 = vpack.c.b16 %v811, %v807
  %v1220 = vpack.c.b16 %v812, %v808
  %v1221 = vpack.c.b16 %v817, %v813
  %v1222 = vpack.c.b16 %v818, %v814
  %v1223 = vpack.c.b16 %v819, %v815
  %v1224 = vpack.c.b16 %v820, %v816
  %v1225 = vpack.c.b16 %v825, %v821
  %v1226 = vpack.c.b16 %v826, %v822
  %v1227 = vpack.c.b16 %v827, %v823
  %v1228 = vpack.c.b16 %v828, %v824
  %v1229 = vpack.c.b16 %v833, %v829
  %v1230 = vpack.c.b16 %v834, %v830
  %v1231 = vpack.c.b16 %v835, %v831
  %v1232 = vpack.c.b16 %v836, %v832
  %v1233 = vpack.c.b16 %v841, %v837
  %v1234 = vpack.c.b16 %v842, %v838
  %v1235 = vpack.c.b16 %v843, %v839
  %v1236 = vpack.c.b16 %v844, %v840
  %v1237 = vpack.c.b16 %v849, %v845
  %v1238 = vpack.c.b16 %v850, %v846
  %v1239 = vpack.c.b16 %v851, %v847
  %v1240 = vpack.c.b16 %v852, %v848
  %v1241 = vpack.c.b16 %v857, %v853
  %v1242 = vpack.c.b16 %v858, %v854
  %v1243 = vpack.c.b16 %v859, %v855
  %v1244 = vpack.c.b16 %v860, %v856
  %v1245 = vpack.c.b16 %v865, %v861
  %v1246 = vpack.c.b16 %v866, %v862
  %v1247 = vpack.c.b16 %v867, %v863
  %v1248 = vpack.c.b16 %v868, %v864
  %v1249 = vpack.c.b16 %v873, %v869
  %v1250 = vpack.c.b16 %v874, %v870
  %v1251 = vpack.c.b16 %v875, %v871
  %v1252 = vpack.c.b16 %v876, %v872
  %v1253 = vpack.c.b16 %v881, %v877
  %v1254 = vpack.c.b16 %v882, %v878
  %v1255 = vpack.c.b16 %v883, %v879
  %v1256 = vpack.c.b16 %v884, %v880
  %v1257 = vpack.c.b16 %v889, %v885
  %v1258 = vpack.c.b16 %v890, %v886
  %v1259 = vpack.c.b16 %v891, %v887
  %v1260 = vpack.c.b16 %v892, %v888
  %v1261 = vpack.c.b16 %v897, %v893
  %v1262 = vpack.c.b16 %v898, %v894
  %v1263 = vpack.c.b16 %v899, %v895
  %v1264 = vpack.c.b16 %v900, %v896
  %v1265 = vpack.c.b16 %v905, %v901
  %v1266 = vpack.c.b16 %v906, %v902
  %v1267 = vpack.c.b16 %v907, %v903
  %v1268 = vpack.c.b16 %v908, %v904
  %v1269 = vpack.c.b16 %v913, %v909
  %v1270 = vpack.c.b16 %v914, %v910
  %v1271 = vpack.c.b16 %v915, %v911
  %v1272 = vpack.c.b16 %v916, %v912
  %v1273 = vpack.c.b16 %v921, %v917
  %v1274 = vpack.c.b16 %v922, %v918
  %v1275 = vpack.c.b16 %v923, %v919
  %v1276 = vpack.c.b16 %v924, %v920
  %v1277 = vpack.c.b16 %v929, %v925
  %v1278 = vpack.c.b16 %v930, %v926
  %v1279 = vpack.c.b16 %v931, %v927
  %v1280 = vpack.c.b16 %v932, %v928
  %v1281 = vpack.c.b16 %v937, %v933
  %v1282 = vpack.c.b16 %v938, %v934
  %v1283 = vpack.c.b16 %v939, %v935
  %v1284 = vpack.c.b16 %v940, %v936
  %v1285 = vpack.c.b16 %v945, %v941
  %v1286 = vpack.c.b16 %v946, %v942
  %v1287 = vpack.c.b16 %v947, %v943
  %v1288 = vpack.c.b16 %v948, %v944
  %v1289 = vpack.c.b16 %v953, %v949
  %v1290 = vpack.c.b16 %v954, %v950
  %v1291 = vpack.c.b16 %v955, %v951
  %v1292 = vpack.c.b16 %v956, %v952
  %v1293 = vpack.c.b16 %v961, %v957
  %v1294 = vpack.c.b16 %v962, %v958
  %v1295 = vpack.c.b16 %v963, %v959
  %v1296 = vpack.c.b16 %v964, %v960
  %v1297 = vpack.c.b16 %v969, %v965
  %v1298 = vpack.c.b16 %v970, %v966
  %v1299 = vpack.c.b16 %v971, %v967
  %v1300 = vpack.c.b16 %v972, %v968
  %v1301 = vpack.c.b16 %v977, %v973
  %v1302 = vpack.c.b16 %v978, %v974
  %v1303 = vpack.c.b16 %v979, %v975
  %v1304 = vpack.c.b16 %v980, %v976
  %v1305 = vpack.c.b16 %v985, %v981
  %v1306 = vpack.c.b16 %v986, %v982
  %v1307 = vpack.c.b16 %v987, %v983
  %v1308 = vpack.c.b16 %v988, %v984
  %v1309 = vpack.c.b16 %v993, %v989
  %v1310 = vpack.c.b16 %v994, %v990
  %v1311 = vpack.c.b16 %v995, %v991
  %v1312 = vpack.c.b16 %v996, %v992
  %v1313 = vpack.c.b16 %v1001, %v997
  %v1314 = vpack.c.b16 %v1002, %v998
  %v1315 = vpack.c.b16 %v1003, %v999
  %v1316 = vpack.c.b16 %v1004, %v1000
  %v1317 = vpack.c.b16 %v1009, %v1005
  %v1318 = vpack.c.b16 %v1010, %v1006
  %v1319 = vpack.c.b16 %v1011, %v1007
  %v1320 = vpack.c.b16 %v1012, %v1008
  %v1321 = vpack.c.b16 %v1017, %v1013
  %v1322 = vpack.c.b16 %v1018, %v1014
  %v1323 = vpack.c.b16 %v1019, %v1015
  %v1324 = vpack.c.b16 %v1020, %v1016
  %v1325 = vpack.c.b16 %v1025, %v1021
  %v1326 = vpack.c.b16 %v1026, %v1022
  %v1327 = vpack.c.b16 %v1027, %v1023
  %v1328 = vpack.c.b16 %v1028, %v1024
  %v1329 = vpack.c.b16 %v1033, %v1029
  %v1330 = vpack.c.b16 %v1034, %v1030
  %v1331 = vpack.c.b16 %v1035, %v1031
  %v1332 = vpack.c.b16 %v1036, %v1032
  %v1333 = vpack.c.b16 %v1041, %v1037
  %v1334 = vpack.c.b16 %v1042, %v1038
  %v1335 = vpack.c.b16 %v1043, %v1039
  %v1336 = vpack.c.b16 %v1044, %v1040
  %v1337 = vpack.c.b16 %v1049, %v1045
  %v1338 = vpack.c.b16 %v1050, %v1046
  %v1339 = vpack.c.b16 %v1051, %v1047
  %v1340 = vpack.c.b16 %v1052, %v1048
  %v1341 = vpack.c.b16 %v1057, %v1053
  %v1342 = vpack.c.b16 %v1058, %v1054
  %v1343 = vpack.c.b16 %v1059, %v1055
  %v1344 = vpack.c.b16 %v1060, %v1056
  %v1345 = vpack.c.b16 %v1065, %v1061
  %v1346 = vpack.c.b16 %v1066, %v1062
  %v1347 = vpack.c.b16 %v1067, %v1063
  %v1348 = vpack.c.b16 %v1068, %v1064
  %v1349 = vpack.c.b16 %v1073, %v1069
  %v1350 = vpack.c.b16 %v1074, %v1070
  %v1351 = vpack.c.b16 %v1075, %v1071
  %v1352 = vpack.c.b16 %v1076, %v1072
  %v1353 = vpack.c.b16 %v1081, %v1077
  %v1354 = vpack.c.b16 %v1082, %v1078
  %v1355 = vpack.c.b16 %v1083, %v1079
  %v1356 = vpack.c.b16 %v1084, %v1080
  %v1357 = vpack.c.b16 %v1089, %v1085
  %v1358 = vpack.c.b16 %v1090, %v1086
  %v1359 = vpack.c.b16 %v1091, %v1087
  %v1360 = vpack.c.b16 %v1092, %v1088
  %v1361 = vpack.c.b16 %v1097, %v1093
  %v1362 = vpack.c.b16 %v1098, %v1094
  %v1363 = vpack.c.b16 %v1099, %v1095
  %v1364 = vpack.c.b16 %v1100, %v1096
  %v1365 = vpack.c.b16 %v1105, %v1101
  %v1366 = vpack.c.b16 %v1106, %v1102
  %v1367 = vpack.c.b16 %v1107, %v1103
  %v1368 = vpack.c.b16 %v1108, %v1104
  %v1369 = vpack.c.b16 %v1113, %v1109
  %v1370 = vpack.c.b16 %v1114, %v1110
  %v1371 = vpack.c.b16 %v1115, %v1111
  %v1372 = vpack.c.b16 %v1116, %v1112
  %1629 = vmatprep.subr.bf16.mxu0 %v1146
  %1630 = vmatpush1.bf16.msra.mxu0 %v1145
  %1631 = vmatprep.subr.bf16.mxu0 %v1142
  %1632 = vmatpush1.bf16.msra.mxu0 %v1141
  %1633 = vmatprep.subr.bf16.mxu0 %v1138
  %1634 = vmatpush1.bf16.msra.mxu0 %v1137
  %1635 = vmatprep.subr.bf16.mxu0 %v1134
  %1636 = vmatpush1.bf16.msra.mxu0 %v1133
  %1637 = vmatprep.subr.bf16.mxu0 %v1130
  %1638 = vmatpush1.bf16.msra.mxu0 %v1129
  %1639 = vmatprep.subr.bf16.mxu0 %v1126
  %1640 = vmatpush1.bf16.msra.mxu0 %v1125
  %1641 = vmatprep.subr.bf16.mxu0 %v1122
  %1642 = vmatpush1.bf16.msra.mxu0 %v1121
  %1643 = vmatprep.subr.bf16.mxu0 %v1118
  %1644 = vmatpush1.bf16.msra.mxu0 %v1117
  %1645 = vmatprep.subr.bf16.mxu0 %v1178
  %1646 = vmatpush2.bf16.msra.mxu0 %v1177
  %1647 = vmatprep.subr.bf16.mxu0 %v1174
  %1648 = vmatpush2.bf16.msra.mxu0 %v1173
  %1649 = vmatprep.subr.bf16.mxu0 %v1170
  %1650 = vmatpush2.bf16.msra.mxu0 %v1169
  %1651 = vmatprep.subr.bf16.mxu0 %v1166
  %1652 = vmatpush2.bf16.msra.mxu0 %v1165
  %1653 = vmatprep.subr.bf16.mxu0 %v1162
  %1654 = vmatpush2.bf16.msra.mxu0 %v1161
  %1655 = vmatprep.subr.bf16.mxu0 %v1158
  %1656 = vmatpush2.bf16.msra.mxu0 %v1157
  %1657 = vmatprep.subr.bf16.mxu0 %v1154
  %1658 = vmatpush2.bf16.msra.mxu0 %v1153
  %1659 = vmatprep.subr.bf16.mxu0 %v1150
  %1660 = vmatpush2.bf16.msra.mxu0 %v1149
  %1661 = vmatprep.mubr.bf16.mxu0 %v334
  %1662 = vmatmul.mubr.bf16.gmra.mxu0 %v333
  %v1663 = vpop.f32.mrf.mxu0
  %v1664 = vadd.f32 %v304, %v1663
  %v1665 = vpop.f32.mrf.mxu0
  %v1666 = vadd.f32 %v308, %v1665
  %v1667 = vpop.f32.mrf.mxu0
  %v1668 = vpop.f32.mrf.mxu0
  %1669 = vdwg.mxu0
  %1670 = vmatprep.subr.bf16.mxu0 %v1210
  %1671 = vmatpush1.bf16.msra.mxu0 %v1209
  %1672 = vmatprep.subr.bf16.mxu0 %v1206
  %1673 = vmatpush1.bf16.msra.mxu0 %v1205
  %1674 = vmatprep.subr.bf16.mxu0 %v1202
  %1675 = vmatpush1.bf16.msra.mxu0 %v1201
  %1676 = vmatprep.subr.bf16.mxu0 %v1198
  %1677 = vmatpush1.bf16.msra.mxu0 %v1197
  %1678 = vmatprep.subr.bf16.mxu0 %v1194
  %1679 = vmatpush1.bf16.msra.mxu0 %v1193
  %1680 = vmatprep.subr.bf16.mxu0 %v1190
  %1681 = vmatpush1.bf16.msra.mxu0 %v1189
  %1682 = vmatprep.subr.bf16.mxu0 %v1186
  %1683 = vmatpush1.bf16.msra.mxu0 %v1185
  %1684 = vmatprep.subr.bf16.mxu0 %v1182
  %1685 = vmatpush1.bf16.msra.mxu0 %v1181
  %1686 = vmatprep.subr.bf16.mxu0 %v1242
  %1687 = vmatpush2.bf16.msra.mxu0 %v1241
  %1688 = vmatprep.subr.bf16.mxu0 %v1238
  %1689 = vmatpush2.bf16.msra.mxu0 %v1237
  %1690 = vmatprep.subr.bf16.mxu0 %v1234
  %1691 = vmatpush2.bf16.msra.mxu0 %v1233
  %1692 = vmatprep.subr.bf16.mxu0 %v1230
  %1693 = vmatpush2.bf16.msra.mxu0 %v1229
  %1694 = vmatprep.subr.bf16.mxu0 %v1226
  %1695 = vmatpush2.bf16.msra.mxu0 %v1225
  %1696 = vmatprep.subr.bf16.mxu0 %v1222
  %1697 = vmatpush2.bf16.msra.mxu0 %v1221
  %1698 = vmatprep.subr.bf16.mxu0 %v1218
  %1699 = vmatpush2.bf16.msra.mxu0 %v1217
  %1700 = vmatprep.subr.bf16.mxu0 %v1214
  %1701 = vmatpush2.bf16.msra.mxu0 %v1213
  %1702 = vmatprep.mubr.bf16.mxu0 %v336
  %1703 = vmatmul.mubr.bf16.gmra.mxu0 %v335
  %v1704 = vpop.f32.mrf.mxu0
  %v1705 = vadd.f32 %v1664, %v1704
  %v1706 = vpop.f32.mrf.mxu0
  %v1707 = vadd.f32 %v1666, %v1706
  %v1708 = vpop.f32.mrf.mxu0
  %v1709 = vpop.f32.mrf.mxu0
  %1710 = vdwg.mxu0
  %1711 = vmatprep.subr.bf16.mxu0 %v1274
  %1712 = vmatpush1.bf16.msra.mxu0 %v1273
  %1713 = vmatprep.subr.bf16.mxu0 %v1270
  %1714 = vmatpush1.bf16.msra.mxu0 %v1269
  %1715 = vmatprep.subr.bf16.mxu0 %v1266
  %1716 = vmatpush1.bf16.msra.mxu0 %v1265
  %1717 = vmatprep.subr.bf16.mxu0 %v1262
  %1718 = vmatpush1.bf16.msra.mxu0 %v1261
  %1719 = vmatprep.subr.bf16.mxu0 %v1258
  %1720 = vmatpush1.bf16.msra.mxu0 %v1257
  %1721 = vmatprep.subr.bf16.mxu0 %v1254
  %1722 = vmatpush1.bf16.msra.mxu0 %v1253
  %1723 = vmatprep.subr.bf16.mxu0 %v1250
  %1724 = vmatpush1.bf16.msra.mxu0 %v1249
  %1725 = vmatprep.subr.bf16.mxu0 %v1246
  %1726 = vmatpush1.bf16.msra.mxu0 %v1245
  %1727 = vmatprep.subr.bf16.mxu0 %v1306
  %1728 = vmatpush2.bf16.msra.mxu0 %v1305
  %1729 = vmatprep.subr.bf16.mxu0 %v1302
  %1730 = vmatpush2.bf16.msra.mxu0 %v1301
  %1731 = vmatprep.subr.bf16.mxu0 %v1298
  %1732 = vmatpush2.bf16.msra.mxu0 %v1297
  %1733 = vmatprep.subr.bf16.mxu0 %v1294
  %1734 = vmatpush2.bf16.msra.mxu0 %v1293
  %1735 = vmatprep.subr.bf16.mxu0 %v1290
  %1736 = vmatpush2.bf16.msra.mxu0 %v1289
  %1737 = vmatprep.subr.bf16.mxu0 %v1286
  %1738 = vmatpush2.bf16.msra.mxu0 %v1285
  %1739 = vmatprep.subr.bf16.mxu0 %v1282
  %1740 = vmatpush2.bf16.msra.mxu0 %v1281
  %1741 = vmatprep.subr.bf16.mxu0 %v1278
  %1742 = vmatpush2.bf16.msra.mxu0 %v1277
  %1743 = vmatprep.mubr.bf16.mxu0 %v338
  %1744 = vmatmul.mubr.bf16.gmra.mxu0 %v337
  %v1745 = vpop.f32.mrf.mxu0
  %v1746 = vadd.f32 %v1705, %v1745
  %v1747 = vpop.f32.mrf.mxu0
  %v1748 = vadd.f32 %v1707, %v1747
  %v1749 = vpop.f32.mrf.mxu0
  %v1750 = vpop.f32.mrf.mxu0
  %1751 = vdwg.mxu0
  %1752 = vmatprep.subr.bf16.mxu0 %v1338
  %1753 = vmatpush1.bf16.msra.mxu0 %v1337
  %1754 = vmatprep.subr.bf16.mxu0 %v1334
  %1755 = vmatpush1.bf16.msra.mxu0 %v1333
  %1756 = vmatprep.subr.bf16.mxu0 %v1330
  %1757 = vmatpush1.bf16.msra.mxu0 %v1329
  %1758 = vmatprep.subr.bf16.mxu0 %v1326
  %1759 = vmatpush1.bf16.msra.mxu0 %v1325
  %1760 = vmatprep.subr.bf16.mxu0 %v1322
  %1761 = vmatpush1.bf16.msra.mxu0 %v1321
  %1762 = vmatprep.subr.bf16.mxu0 %v1318
  %1763 = vmatpush1.bf16.msra.mxu0 %v1317
  %1764 = vmatprep.subr.bf16.mxu0 %v1314
  %1765 = vmatpush1.bf16.msra.mxu0 %v1313
  %1766 = vmatprep.subr.bf16.mxu0 %v1310
  %1767 = vmatpush1.bf16.msra.mxu0 %v1309
  %1768 = vmatprep.subr.bf16.mxu0 %v1370
  %1769 = vmatpush2.bf16.msra.mxu0 %v1369
  %1770 = vmatprep.subr.bf16.mxu0 %v1366
  %1771 = vmatpush2.bf16.msra.mxu0 %v1365
  %1772 = vmatprep.subr.bf16.mxu0 %v1362
  %1773 = vmatpush2.bf16.msra.mxu0 %v1361
  %1774 = vmatprep.subr.bf16.mxu0 %v1358
  %1775 = vmatpush2.bf16.msra.mxu0 %v1357
  %1776 = vmatprep.subr.bf16.mxu0 %v1354
  %1777 = vmatpush2.bf16.msra.mxu0 %v1353
  %1778 = vmatprep.subr.bf16.mxu0 %v1350
  %1779 = vmatpush2.bf16.msra.mxu0 %v1349
  %1780 = vmatprep.subr.bf16.mxu0 %v1346
  %1781 = vmatpush2.bf16.msra.mxu0 %v1345
  %1782 = vmatprep.subr.bf16.mxu0 %v1342
  %1783 = vmatpush2.bf16.msra.mxu0 %v1341
  %1784 = vmatprep.mubr.bf16.mxu0 %v340
  %1785 = vmatmul.mubr.bf16.gmra.mxu0 %v339
  %v1786 = vpop.f32.mrf.mxu0
  %v1787 = vadd.f32 %v1746, %v1786
  %v1788 = vpop.f32.mrf.mxu0
  %v1789 = vadd.f32 %v1748, %v1788
  %v1790 = vpop.f32.mrf.mxu0
  %v1791 = vpop.f32.mrf.mxu0
  %1792 = vdwg.mxu0
  %1793 = vmatprep.subr.bf16.mxu0 %v1148
  %1794 = vmatpush1.bf16.msra.mxu0 %v1147
  %1795 = vmatprep.subr.bf16.mxu0 %v1144
  %1796 = vmatpush1.bf16.msra.mxu0 %v1143
  %1797 = vmatprep.subr.bf16.mxu0 %v1140
  %1798 = vmatpush1.bf16.msra.mxu0 %v1139
  %1799 = vmatprep.subr.bf16.mxu0 %v1136
  %1800 = vmatpush1.bf16.msra.mxu0 %v1135
  %1801 = vmatprep.subr.bf16.mxu0 %v1132
  %1802 = vmatpush1.bf16.msra.mxu0 %v1131
  %1803 = vmatprep.subr.bf16.mxu0 %v1128
  %1804 = vmatpush1.bf16.msra.mxu0 %v1127
  %1805 = vmatprep.subr.bf16.mxu0 %v1124
  %1806 = vmatpush1.bf16.msra.mxu0 %v1123
  %1807 = vmatprep.subr.bf16.mxu0 %v1120
  %1808 = vmatpush1.bf16.msra.mxu0 %v1119
  %1809 = vmatprep.subr.bf16.mxu0 %v1180
  %1810 = vmatpush2.bf16.msra.mxu0 %v1179
  %1811 = vmatprep.subr.bf16.mxu0 %v1176
  %1812 = vmatpush2.bf16.msra.mxu0 %v1175
  %1813 = vmatprep.subr.bf16.mxu0 %v1172
  %1814 = vmatpush2.bf16.msra.mxu0 %v1171
  %1815 = vmatprep.subr.bf16.mxu0 %v1168
  %1816 = vmatpush2.bf16.msra.mxu0 %v1167
  %1817 = vmatprep.subr.bf16.mxu0 %v1164
  %1818 = vmatpush2.bf16.msra.mxu0 %v1163
  %1819 = vmatprep.subr.bf16.mxu0 %v1160
  %1820 = vmatpush2.bf16.msra.mxu0 %v1159
  %1821 = vmatprep.subr.bf16.mxu0 %v1156
  %1822 = vmatpush2.bf16.msra.mxu0 %v1155
  %1823 = vmatprep.subr.bf16.mxu0 %v1152
  %1824 = vmatpush2.bf16.msra.mxu0 %v1151
  %1825 = vmatprep.mubr.bf16.mxu0 %v334
  %1826 = vmatmul.mubr.bf16.gmra.mxu0 %v333
  %v1827 = vpop.f32.mrf.mxu0
  %v1828 = vadd.f32 %v312, %v1827
  %v1829 = vpop.f32.mrf.mxu0
  %v1830 = vadd.f32 %v316, %v1829
  %v1831 = vpop.f32.mrf.mxu0
  %v1832 = vpop.f32.mrf.mxu0
  %1833 = vdwg.mxu0
  %1834 = vmatprep.subr.bf16.mxu0 %v1212
  %1835 = vmatpush1.bf16.msra.mxu0 %v1211
  %1836 = vmatprep.subr.bf16.mxu0 %v1208
  %1837 = vmatpush1.bf16.msra.mxu0 %v1207
  %1838 = vmatprep.subr.bf16.mxu0 %v1204
  %1839 = vmatpush1.bf16.msra.mxu0 %v1203
  %1840 = vmatprep.subr.bf16.mxu0 %v1200
  %1841 = vmatpush1.bf16.msra.mxu0 %v1199
  %1842 = vmatprep.subr.bf16.mxu0 %v1196
  %1843 = vmatpush1.bf16.msra.mxu0 %v1195
  %1844 = vmatprep.subr.bf16.mxu0 %v1192
  %1845 = vmatpush1.bf16.msra.mxu0 %v1191
  %1846 = vmatprep.subr.bf16.mxu0 %v1188
  %1847 = vmatpush1.bf16.msra.mxu0 %v1187
  %1848 = vmatprep.subr.bf16.mxu0 %v1184
  %1849 = vmatpush1.bf16.msra.mxu0 %v1183
  %1850 = vmatprep.subr.bf16.mxu0 %v1244
  %1851 = vmatpush2.bf16.msra.mxu0 %v1243
  %1852 = vmatprep.subr.bf16.mxu0 %v1240
  %1853 = vmatpush2.bf16.msra.mxu0 %v1239
  %1854 = vmatprep.subr.bf16.mxu0 %v1236
  %1855 = vmatpush2.bf16.msra.mxu0 %v1235
  %1856 = vmatprep.subr.bf16.mxu0 %v1232
  %1857 = vmatpush2.bf16.msra.mxu0 %v1231
  %1858 = vmatprep.subr.bf16.mxu0 %v1228
  %1859 = vmatpush2.bf16.msra.mxu0 %v1227
  %1860 = vmatprep.subr.bf16.mxu0 %v1224
  %1861 = vmatpush2.bf16.msra.mxu0 %v1223
  %1862 = vmatprep.subr.bf16.mxu0 %v1220
  %1863 = vmatpush2.bf16.msra.mxu0 %v1219
  %1864 = vmatprep.subr.bf16.mxu0 %v1216
  %1865 = vmatpush2.bf16.msra.mxu0 %v1215
  %1866 = vmatprep.mubr.bf16.mxu0 %v336
  %1867 = vmatmul.mubr.bf16.gmra.mxu0 %v335
  %v1868 = vpop.f32.mrf.mxu0
  %v1869 = vadd.f32 %v1828, %v1868
  %v1870 = vpop.f32.mrf.mxu0
  %v1871 = vadd.f32 %v1830, %v1870
  %v1872 = vpop.f32.mrf.mxu0
  %v1873 = vpop.f32.mrf.mxu0
  %1874 = vdwg.mxu0
  %1875 = vmatprep.subr.bf16.mxu0 %v1276
  %1876 = vmatpush1.bf16.msra.mxu0 %v1275
  %1877 = vmatprep.subr.bf16.mxu0 %v1272
  %1878 = vmatpush1.bf16.msra.mxu0 %v1271
  %1879 = vmatprep.subr.bf16.mxu0 %v1268
  %1880 = vmatpush1.bf16.msra.mxu0 %v1267
  %1881 = vmatprep.subr.bf16.mxu0 %v1264
  %1882 = vmatpush1.bf16.msra.mxu0 %v1263
  %1883 = vmatprep.subr.bf16.mxu0 %v1260
  %1884 = vmatpush1.bf16.msra.mxu0 %v1259
  %1885 = vmatprep.subr.bf16.mxu0 %v1256
  %1886 = vmatpush1.bf16.msra.mxu0 %v1255
  %1887 = vmatprep.subr.bf16.mxu0 %v1252
  %1888 = vmatpush1.bf16.msra.mxu0 %v1251
  %1889 = vmatprep.subr.bf16.mxu0 %v1248
  %1890 = vmatpush1.bf16.msra.mxu0 %v1247
  %1891 = vmatprep.subr.bf16.mxu0 %v1308
  %1892 = vmatpush2.bf16.msra.mxu0 %v1307
  %1893 = vmatprep.subr.bf16.mxu0 %v1304
  %1894 = vmatpush2.bf16.msra.mxu0 %v1303
  %1895 = vmatprep.subr.bf16.mxu0 %v1300
  %1896 = vmatpush2.bf16.msra.mxu0 %v1299
  %1897 = vmatprep.subr.bf16.mxu0 %v1296
  %1898 = vmatpush2.bf16.msra.mxu0 %v1295
  %1899 = vmatprep.subr.bf16.mxu0 %v1292
  %1900 = vmatpush2.bf16.msra.mxu0 %v1291
  %1901 = vmatprep.subr.bf16.mxu0 %v1288
  %1902 = vmatpush2.bf16.msra.mxu0 %v1287
  %1903 = vmatprep.subr.bf16.mxu0 %v1284
  %1904 = vmatpush2.bf16.msra.mxu0 %v1283
  %1905 = vmatprep.subr.bf16.mxu0 %v1280
  %1906 = vmatpush2.bf16.msra.mxu0 %v1279
  %1907 = vmatprep.mubr.bf16.mxu0 %v338
  %1908 = vmatmul.mubr.bf16.gmra.mxu0 %v337
  %v1909 = vpop.f32.mrf.mxu0
  %v1910 = vadd.f32 %v1869, %v1909
  %v1911 = vpop.f32.mrf.mxu0
  %v1912 = vadd.f32 %v1871, %v1911
  %v1913 = vpop.f32.mrf.mxu0
  %v1914 = vpop.f32.mrf.mxu0
  %1915 = vdwg.mxu0
  %1916 = vmatprep.subr.bf16.mxu0 %v1340
  %1917 = vmatpush1.bf16.msra.mxu0 %v1339
  %1918 = vmatprep.subr.bf16.mxu0 %v1336
  %1919 = vmatpush1.bf16.msra.mxu0 %v1335
  %1920 = vmatprep.subr.bf16.mxu0 %v1332
  %1921 = vmatpush1.bf16.msra.mxu0 %v1331
  %1922 = vmatprep.subr.bf16.mxu0 %v1328
  %1923 = vmatpush1.bf16.msra.mxu0 %v1327
  %1924 = vmatprep.subr.bf16.mxu0 %v1324
  %1925 = vmatpush1.bf16.msra.mxu0 %v1323
  %1926 = vmatprep.subr.bf16.mxu0 %v1320
  %1927 = vmatpush1.bf16.msra.mxu0 %v1319
  %1928 = vmatprep.subr.bf16.mxu0 %v1316
  %1929 = vmatpush1.bf16.msra.mxu0 %v1315
  %1930 = vmatprep.subr.bf16.mxu0 %v1312
  %1931 = vmatpush1.bf16.msra.mxu0 %v1311
  %1932 = vmatprep.subr.bf16.mxu0 %v1372
  %1933 = vmatpush2.bf16.msra.mxu0 %v1371
  %1934 = vmatprep.subr.bf16.mxu0 %v1368
  %1935 = vmatpush2.bf16.msra.mxu0 %v1367
  %1936 = vmatprep.subr.bf16.mxu0 %v1364
  %1937 = vmatpush2.bf16.msra.mxu0 %v1363
  %1938 = vmatprep.subr.bf16.mxu0 %v1360
  %1939 = vmatpush2.bf16.msra.mxu0 %v1359
  %1940 = vmatprep.subr.bf16.mxu0 %v1356
  %1941 = vmatpush2.bf16.msra.mxu0 %v1355
  %1942 = vmatprep.subr.bf16.mxu0 %v1352
  %1943 = vmatpush2.bf16.msra.mxu0 %v1351
  %1944 = vmatprep.subr.bf16.mxu0 %v1348
  %1945 = vmatpush2.bf16.msra.mxu0 %v1347
  %1946 = vmatprep.subr.bf16.mxu0 %v1344
  %1947 = vmatpush2.bf16.msra.mxu0 %v1343
  %1948 = vmatprep.mubr.bf16.mxu0 %v340
  %1949 = vmatmul.mubr.bf16.gmra.mxu0 %v339
  %v1950 = vpop.f32.mrf.mxu0
  %v1951 = vadd.f32 %v1910, %v1950
  %v1952 = vpop.f32.mrf.mxu0
  %v1953 = vadd.f32 %v1912, %v1952
  %v1954 = vpop.f32.mrf.mxu0
  %v1955 = vpop.f32.mrf.mxu0
  %1956 = vdwg.mxu0
  %v1957 = vld [vmem:[%s3] sm:$0xf]
  %v1959 = vlaneseq
  %v1960 = vshrl.u32 %v1959, 7
  %v1961 = vsub.s32 0, %v1960
  %v1962 = vrot.slane %v1957, %v1961
  %v1963 = vlaneseq
  %v1964 = vshrl.u32 %v1963, 7
  %v1965 = vsub.s32 1, %v1964
  %v1966 = vrot.slane %v1957, %v1965
  %v1967 = vlaneseq
  %v1968 = vshrl.u32 %v1967, 7
  %v1969 = vsub.s32 2, %v1968
  %v1970 = vrot.slane %v1957, %v1969
  %v1971 = vlaneseq
  %v1972 = vshrl.u32 %v1971, 7
  %v1973 = vsub.s32 3, %v1972
  %v1974 = vrot.slane %v1957, %v1973
  %v1979 = vmul.f32 %v1787, %v1962
  %v1980 = vmul.f32 %v1789, %v1966
  %v1981 = vmul.f32 %v1951, %v1970
  %v1982 = vmul.f32 %v1953, %v1974
  %v1983 = vld [vmem:[%s4] sm:$0xf]
  %v1985 = vlaneseq
  %v1986 = vshrl.u32 %v1985, 7
  %v1987 = vsub.s32 0, %v1986
  %v1988 = vrot.slane %v1983, %v1987
  %v1989 = vlaneseq
  %v1990 = vshrl.u32 %v1989, 7
  %v1991 = vsub.s32 1, %v1990
  %v1992 = vrot.slane %v1983, %v1991
  %v1993 = vlaneseq
  %v1994 = vshrl.u32 %v1993, 7
  %v1995 = vsub.s32 2, %v1994
  %v1996 = vrot.slane %v1983, %v1995
  %v1997 = vlaneseq
  %v1998 = vshrl.u32 %v1997, 7
  %v1999 = vsub.s32 3, %v1998
  %v2000 = vrot.slane %v1983, %v1999
  %v2005 = vadd.f32 %v1979, %v1988
  %v2006 = vadd.f32 %v1980, %v1992
  %v2007 = vadd.f32 %v1981, %v1996
  %v2008 = vadd.f32 %v1982, %v2000
  %v2009 = vmax.f32 %v2005, 0.0
  %v2010 = vmax.f32 %v2006, 0.0
  %v2011 = vmax.f32 %v2007, 0.0
  %v2012 = vmax.f32 %v2008, 0.0
  %v2013 = vpack.c.bf16 %v2009, %v2009
  %v2014 = vpack.c.bf16 %v2010, %v2010
  %v2015 = vpack.c.bf16 %v2011, %v2011
  %v2016 = vpack.c.bf16 %v2012, %v2012
  %v2017 = vld [vmem:[%s5] sm:$0xff]
  %v2018 = vld [vmem:[%s5 + $0x8] sm:$0xff]
  %v2019 = vld [vmem:[%s5 + $0x10] sm:$0xff]
  %v2020 = vld [vmem:[%s5 + $0x18] sm:$0xff]
  %v2021 = vld [vmem:[%s5 + $0x20] sm:$0xff]
  %v2022 = vld [vmem:[%s5 + $0x28] sm:$0xff]
  %v2023 = vld [vmem:[%s5 + $0x30] sm:$0xff]
  %v2024 = vld [vmem:[%s5 + $0x38] sm:$0xff]
  %v2025 = vld [vmem:[%s5 + $0x40] sm:$0xff]
  %v2026 = vld [vmem:[%s5 + $0x48] sm:$0xff]
  %v2027 = vld [vmem:[%s5 + $0x50] sm:$0xff]
  %v2028 = vld [vmem:[%s5 + $0x58] sm:$0xff]
  %v2029 = vld [vmem:[%s5 + $0x60] sm:$0xff]
  %v2030 = vld [vmem:[%s5 + $0x68] sm:$0xff]
  %v2031 = vld [vmem:[%s5 + $0x70] sm:$0xff]
  %v2032 = vld [vmem:[%s5 + $0x78] sm:$0xff]
  %v2033 = vld [vmem:[%s5 + $0x80] sm:$0xff]
  %v2034 = vld [vmem:[%s5 + $0x88] sm:$0xff]
  %v2035 = vld [vmem:[%s5 + $0x90] sm:$0xff]
  %v2036 = vld [vmem:[%s5 + $0x98] sm:$0xff]
  %v2037 = vld [vmem:[%s5 + $0xa0] sm:$0xff]
  %v2038 = vld [vmem:[%s5 + $0xa8] sm:$0xff]
  %v2039 = vld [vmem:[%s5 + $0xb0] sm:$0xff]
  %v2040 = vld [vmem:[%s5 + $0xb8] sm:$0xff]
  %v2041 = vld [vmem:[%s5 + $0xc0] sm:$0xff]
  %v2042 = vld [vmem:[%s5 + $0xc8] sm:$0xff]
  %v2043 = vld [vmem:[%s5 + $0xd0] sm:$0xff]
  %v2044 = vld [vmem:[%s5 + $0xd8] sm:$0xff]
  %v2045 = vld [vmem:[%s5 + $0xe0] sm:$0xff]
  %v2046 = vld [vmem:[%s5 + $0xe8] sm:$0xff]
  %v2047 = vld [vmem:[%s5 + $0xf0] sm:$0xff]
  %v2048 = vld [vmem:[%s5 + $0xf8] sm:$0xff]
  %v2049 = vld [vmem:[%s5 + $0x100] sm:$0xff]
  %v2050 = vld [vmem:[%s5 + $0x108] sm:$0xff]
  %v2051 = vld [vmem:[%s5 + $0x110] sm:$0xff]
  %v2052 = vld [vmem:[%s5 + $0x118] sm:$0xff]
  %v2053 = vld [vmem:[%s5 + $0x120] sm:$0xff]
  %v2054 = vld [vmem:[%s5 + $0x128] sm:$0xff]
  %v2055 = vld [vmem:[%s5 + $0x130] sm:$0xff]
  %v2056 = vld [vmem:[%s5 + $0x138] sm:$0xff]
  %v2057 = vld [vmem:[%s5 + $0x140] sm:$0xff]
  %v2058 = vld [vmem:[%s5 + $0x148] sm:$0xff]
  %v2059 = vld [vmem:[%s5 + $0x150] sm:$0xff]
  %v2060 = vld [vmem:[%s5 + $0x158] sm:$0xff]
  %v2061 = vld [vmem:[%s5 + $0x160] sm:$0xff]
  %v2062 = vld [vmem:[%s5 + $0x168] sm:$0xff]
  %v2063 = vld [vmem:[%s5 + $0x170] sm:$0xff]
  %v2064 = vld [vmem:[%s5 + $0x178] sm:$0xff]
  %v2065 = vld [vmem:[%s5 + $0x180] sm:$0xff]
  %v2066 = vld [vmem:[%s5 + $0x188] sm:$0xff]
  %v2067 = vld [vmem:[%s5 + $0x190] sm:$0xff]
  %v2068 = vld [vmem:[%s5 + $0x198] sm:$0xff]
  %v2069 = vld [vmem:[%s5 + $0x1a0] sm:$0xff]
  %v2070 = vld [vmem:[%s5 + $0x1a8] sm:$0xff]
  %v2071 = vld [vmem:[%s5 + $0x1b0] sm:$0xff]
  %v2072 = vld [vmem:[%s5 + $0x1b8] sm:$0xff]
  %v2073 = vld [vmem:[%s5 + $0x1c0] sm:$0xff]
  %v2074 = vld [vmem:[%s5 + $0x1c8] sm:$0xff]
  %v2075 = vld [vmem:[%s5 + $0x1d0] sm:$0xff]
  %v2076 = vld [vmem:[%s5 + $0x1d8] sm:$0xff]
  %v2077 = vld [vmem:[%s5 + $0x1e0] sm:$0xff]
  %v2078 = vld [vmem:[%s5 + $0x1e8] sm:$0xff]
  %v2079 = vld [vmem:[%s5 + $0x1f0] sm:$0xff]
  %v2080 = vld [vmem:[%s5 + $0x1f8] sm:$0xff]
  %v2081 = vld [vmem:[%s6] sm:$0x3]
  %v2083 = vlaneseq
  %v2084 = vshrl.u32 %v2083, 7
  %v2085 = vsub.s32 0, %v2084
  %v2086 = vrot.slane %v2081, %v2085
  %v2087 = vlaneseq
  %v2088 = vshrl.u32 %v2087, 7
  %v2089 = vsub.s32 1, %v2088
  %v2090 = vrot.slane %v2081, %v2089
  %v2157 = vunpack.c.l.b16 %v2017
  %v2158 = vunpack.c.h.b16 %v2017
  %v2159 = vunpack.c.l.b16 %v2018
  %v2160 = vunpack.c.h.b16 %v2018
  %v2161 = vunpack.c.l.b16 %v2019
  %v2162 = vunpack.c.h.b16 %v2019
  %v2163 = vunpack.c.l.b16 %v2020
  %v2164 = vunpack.c.h.b16 %v2020
  %v2165 = vunpack.c.l.b16 %v2021
  %v2166 = vunpack.c.h.b16 %v2021
  %v2167 = vunpack.c.l.b16 %v2022
  %v2168 = vunpack.c.h.b16 %v2022
  %v2169 = vunpack.c.l.b16 %v2023
  %v2170 = vunpack.c.h.b16 %v2023
  %v2171 = vunpack.c.l.b16 %v2024
  %v2172 = vunpack.c.h.b16 %v2024
  %v2173 = vunpack.c.l.b16 %v2025
  %v2174 = vunpack.c.h.b16 %v2025
  %v2175 = vunpack.c.l.b16 %v2026
  %v2176 = vunpack.c.h.b16 %v2026
  %v2177 = vunpack.c.l.b16 %v2027
  %v2178 = vunpack.c.h.b16 %v2027
  %v2179 = vunpack.c.l.b16 %v2028
  %v2180 = vunpack.c.h.b16 %v2028
  %v2181 = vunpack.c.l.b16 %v2029
  %v2182 = vunpack.c.h.b16 %v2029
  %v2183 = vunpack.c.l.b16 %v2030
  %v2184 = vunpack.c.h.b16 %v2030
  %v2185 = vunpack.c.l.b16 %v2031
  %v2186 = vunpack.c.h.b16 %v2031
  %v2187 = vunpack.c.l.b16 %v2032
  %v2188 = vunpack.c.h.b16 %v2032
  %v2189 = vunpack.c.l.b16 %v2033
  %v2190 = vunpack.c.h.b16 %v2033
  %v2191 = vunpack.c.l.b16 %v2034
  %v2192 = vunpack.c.h.b16 %v2034
  %v2193 = vunpack.c.l.b16 %v2035
  %v2194 = vunpack.c.h.b16 %v2035
  %v2195 = vunpack.c.l.b16 %v2036
  %v2196 = vunpack.c.h.b16 %v2036
  %v2197 = vunpack.c.l.b16 %v2037
  %v2198 = vunpack.c.h.b16 %v2037
  %v2199 = vunpack.c.l.b16 %v2038
  %v2200 = vunpack.c.h.b16 %v2038
  %v2201 = vunpack.c.l.b16 %v2039
  %v2202 = vunpack.c.h.b16 %v2039
  %v2203 = vunpack.c.l.b16 %v2040
  %v2204 = vunpack.c.h.b16 %v2040
  %v2205 = vunpack.c.l.b16 %v2041
  %v2206 = vunpack.c.h.b16 %v2041
  %v2207 = vunpack.c.l.b16 %v2042
  %v2208 = vunpack.c.h.b16 %v2042
  %v2209 = vunpack.c.l.b16 %v2043
  %v2210 = vunpack.c.h.b16 %v2043
  %v2211 = vunpack.c.l.b16 %v2044
  %v2212 = vunpack.c.h.b16 %v2044
  %v2213 = vunpack.c.l.b16 %v2045
  %v2214 = vunpack.c.h.b16 %v2045
  %v2215 = vunpack.c.l.b16 %v2046
  %v2216 = vunpack.c.h.b16 %v2046
  %v2217 = vunpack.c.l.b16 %v2047
  %v2218 = vunpack.c.h.b16 %v2047
  %v2219 = vunpack.c.l.b16 %v2048
  %v2220 = vunpack.c.h.b16 %v2048
  %v2221 = vunpack.c.l.b16 %v2049
  %v2222 = vunpack.c.h.b16 %v2049
  %v2223 = vunpack.c.l.b16 %v2050
  %v2224 = vunpack.c.h.b16 %v2050
  %v2225 = vunpack.c.l.b16 %v2051
  %v2226 = vunpack.c.h.b16 %v2051
  %v2227 = vunpack.c.l.b16 %v2052
  %v2228 = vunpack.c.h.b16 %v2052
  %v2229 = vunpack.c.l.b16 %v2053
  %v2230 = vunpack.c.h.b16 %v2053
  %v2231 = vunpack.c.l.b16 %v2054
  %v2232 = vunpack.c.h.b16 %v2054
  %v2233 = vunpack.c.l.b16 %v2055
  %v2234 = vunpack.c.h.b16 %v2055
  %v2235 = vunpack.c.l.b16 %v2056
  %v2236 = vunpack.c.h.b16 %v2056
  %v2237 = vunpack.c.l.b16 %v2057
  %v2238 = vunpack.c.h.b16 %v2057
  %v2239 = vunpack.c.l.b16 %v2058
  %v2240 = vunpack.c.h.b16 %v2058
  %v2241 = vunpack.c.l.b16 %v2059
  %v2242 = vunpack.c.h.b16 %v2059
  %v2243 = vunpack.c.l.b16 %v2060
  %v2244 = vunpack.c.h.b16 %v2060
  %v2245 = vunpack.c.l.b16 %v2061
  %v2246 = vunpack.c.h.b16 %v2061
  %v2247 = vunpack.c.l.b16 %v2062
  %v2248 = vunpack.c.h.b16 %v2062
  %v2249 = vunpack.c.l.b16 %v2063
  %v2250 = vunpack.c.h.b16 %v2063
  %v2251 = vunpack.c.l.b16 %v2064
  %v2252 = vunpack.c.h.b16 %v2064
  %v2253 = vunpack.c.l.b16 %v2065
  %v2254 = vunpack.c.h.b16 %v2065
  %v2255 = vunpack.c.l.b16 %v2066
  %v2256 = vunpack.c.h.b16 %v2066
  %v2257 = vunpack.c.l.b16 %v2067
  %v2258 = vunpack.c.h.b16 %v2067
  %v2259 = vunpack.c.l.b16 %v2068
  %v2260 = vunpack.c.h.b16 %v2068
  %v2261 = vunpack.c.l.b16 %v2069
  %v2262 = vunpack.c.h.b16 %v2069
  %v2263 = vunpack.c.l.b16 %v2070
  %v2264 = vunpack.c.h.b16 %v2070
  %v2265 = vunpack.c.l.b16 %v2071
  %v2266 = vunpack.c.h.b16 %v2071
  %v2267 = vunpack.c.l.b16 %v2072
  %v2268 = vunpack.c.h.b16 %v2072
  %v2269 = vunpack.c.l.b16 %v2073
  %v2270 = vunpack.c.h.b16 %v2073
  %v2271 = vunpack.c.l.b16 %v2074
  %v2272 = vunpack.c.h.b16 %v2074
  %v2273 = vunpack.c.l.b16 %v2075
  %v2274 = vunpack.c.h.b16 %v2075
  %v2275 = vunpack.c.l.b16 %v2076
  %v2276 = vunpack.c.h.b16 %v2076
  %v2277 = vunpack.c.l.b16 %v2077
  %v2278 = vunpack.c.h.b16 %v2077
  %v2279 = vunpack.c.l.b16 %v2078
  %v2280 = vunpack.c.h.b16 %v2078
  %v2281 = vunpack.c.l.b16 %v2079
  %v2282 = vunpack.c.h.b16 %v2079
  %v2283 = vunpack.c.l.b16 %v2080
  %v2284 = vunpack.c.h.b16 %v2080
  %v2285 = vpack.c.b16 %v2159, %v2157
  %v2286 = vpack.c.b16 %v2160, %v2158
  %v2287 = vpack.c.b16 %v2163, %v2161
  %v2288 = vpack.c.b16 %v2164, %v2162
  %v2289 = vpack.c.b16 %v2167, %v2165
  %v2290 = vpack.c.b16 %v2168, %v2166
  %v2291 = vpack.c.b16 %v2171, %v2169
  %v2292 = vpack.c.b16 %v2172, %v2170
  %v2293 = vpack.c.b16 %v2175, %v2173
  %v2294 = vpack.c.b16 %v2176, %v2174
  %v2295 = vpack.c.b16 %v2179, %v2177
  %v2296 = vpack.c.b16 %v2180, %v2178
  %v2297 = vpack.c.b16 %v2183, %v2181
  %v2298 = vpack.c.b16 %v2184, %v2182
  %v2299 = vpack.c.b16 %v2187, %v2185
  %v2300 = vpack.c.b16 %v2188, %v2186
  %v2301 = vpack.c.b16 %v2191, %v2189
  %v2302 = vpack.c.b16 %v2192, %v2190
  %v2303 = vpack.c.b16 %v2195, %v2193
  %v2304 = vpack.c.b16 %v2196, %v2194
  %v2305 = vpack.c.b16 %v2199, %v2197
  %v2306 = vpack.c.b16 %v2200, %v2198
  %v2307 = vpack.c.b16 %v2203, %v2201
  %v2308 = vpack.c.b16 %v2204, %v2202
  %v2309 = vpack.c.b16 %v2207, %v2205
  %v2310 = vpack.c.b16 %v2208, %v2206
  %v2311 = vpack.c.b16 %v2211, %v2209
  %v2312 = vpack.c.b16 %v2212, %v2210
  %v2313 = vpack.c.b16 %v2215, %v2213
  %v2314 = vpack.c.b16 %v2216, %v2214
  %v2315 = vpack.c.b16 %v2219, %v2217
  %v2316 = vpack.c.b16 %v2220, %v2218
  %v2317 = vpack.c.b16 %v2223, %v2221
  %v2318 = vpack.c.b16 %v2224, %v2222
  %v2319 = vpack.c.b16 %v2227, %v2225
  %v2320 = vpack.c.b16 %v2228, %v2226
  %v2321 = vpack.c.b16 %v2231, %v2229
  %v2322 = vpack.c.b16 %v2232, %v2230
  %v2323 = vpack.c.b16 %v2235, %v2233
  %v2324 = vpack.c.b16 %v2236, %v2234
  %v2325 = vpack.c.b16 %v2239, %v2237
  %v2326 = vpack.c.b16 %v2240, %v2238
  %v2327 = vpack.c.b16 %v2243, %v2241
  %v2328 = vpack.c.b16 %v2244, %v2242
  %v2329 = vpack.c.b16 %v2247, %v2245
  %v2330 = vpack.c.b16 %v2248, %v2246
  %v2331 = vpack.c.b16 %v2251, %v2249
  %v2332 = vpack.c.b16 %v2252, %v2250
  %v2333 = vpack.c.b16 %v2255, %v2253
  %v2334 = vpack.c.b16 %v2256, %v2254
  %v2335 = vpack.c.b16 %v2259, %v2257
  %v2336 = vpack.c.b16 %v2260, %v2258
  %v2337 = vpack.c.b16 %v2263, %v2261
  %v2338 = vpack.c.b16 %v2264, %v2262
  %v2339 = vpack.c.b16 %v2267, %v2265
  %v2340 = vpack.c.b16 %v2268, %v2266
  %v2341 = vpack.c.b16 %v2271, %v2269
  %v2342 = vpack.c.b16 %v2272, %v2270
  %v2343 = vpack.c.b16 %v2275, %v2273
  %v2344 = vpack.c.b16 %v2276, %v2274
  %v2345 = vpack.c.b16 %v2279, %v2277
  %v2346 = vpack.c.b16 %v2280, %v2278
  %v2347 = vpack.c.b16 %v2283, %v2281
  %v2348 = vpack.c.b16 %v2284, %v2282
  %2413 = vmatprep.subr.bf16.mxu0 %v2300
  %2414 = vmatpush1.bf16.msra.mxu0 %v2299
  %2415 = vmatprep.subr.bf16.mxu0 %v2298
  %2416 = vmatpush1.bf16.msra.mxu0 %v2297
  %2417 = vmatprep.subr.bf16.mxu0 %v2296
  %2418 = vmatpush1.bf16.msra.mxu0 %v2295
  %2419 = vmatprep.subr.bf16.mxu0 %v2294
  %2420 = vmatpush1.bf16.msra.mxu0 %v2293
  %2421 = vmatprep.subr.bf16.mxu0 %v2292
  %2422 = vmatpush1.bf16.msra.mxu0 %v2291
  %2423 = vmatprep.subr.bf16.mxu0 %v2290
  %2424 = vmatpush1.bf16.msra.mxu0 %v2289
  %2425 = vmatprep.subr.bf16.mxu0 %v2288
  %2426 = vmatpush1.bf16.msra.mxu0 %v2287
  %2427 = vmatprep.subr.bf16.mxu0 %v2286
  %2428 = vmatpush1.bf16.msra.mxu0 %v2285
  %2429 = vmatprep.subr.bf16.mxu0 %v2316
  %2430 = vmatpush2.bf16.msra.mxu0 %v2315
  %2431 = vmatprep.subr.bf16.mxu0 %v2314
  %2432 = vmatpush2.bf16.msra.mxu0 %v2313
  %2433 = vmatprep.subr.bf16.mxu0 %v2312
  %2434 = vmatpush2.bf16.msra.mxu0 %v2311
  %2435 = vmatprep.subr.bf16.mxu0 %v2310
  %2436 = vmatpush2.bf16.msra.mxu0 %v2309
  %2437 = vmatprep.subr.bf16.mxu0 %v2308
  %2438 = vmatpush2.bf16.msra.mxu0 %v2307
  %2439 = vmatprep.subr.bf16.mxu0 %v2306
  %2440 = vmatpush2.bf16.msra.mxu0 %v2305
  %2441 = vmatprep.subr.bf16.mxu0 %v2304
  %2442 = vmatpush2.bf16.msra.mxu0 %v2303
  %2443 = vmatprep.subr.bf16.mxu0 %v2302
  %2444 = vmatpush2.bf16.msra.mxu0 %v2301
  %2445 = vmatprep.mubr.bf16.mxu0 %v2014
  %2446 = vmatmul.mubr.bf16.gmra.mxu0 %v2013
  %v2447 = vpop.f32.mrf.mxu0
  %v2448 = vadd.f32 %v2086, %v2447
  %v2449 = vpop.f32.mrf.mxu0
  %v2450 = vadd.f32 %v2090, %v2449
  %v2451 = vpop.f32.mrf.mxu0
  %v2452 = vpop.f32.mrf.mxu0
  %2453 = vdwg.mxu0
  %2454 = vmatprep.subr.bf16.mxu0 %v2332
  %2455 = vmatpush1.bf16.msra.mxu0 %v2331
  %2456 = vmatprep.subr.bf16.mxu0 %v2330
  %2457 = vmatpush1.bf16.msra.mxu0 %v2329
  %2458 = vmatprep.subr.bf16.mxu0 %v2328
  %2459 = vmatpush1.bf16.msra.mxu0 %v2327
  %2460 = vmatprep.subr.bf16.mxu0 %v2326
  %2461 = vmatpush1.bf16.msra.mxu0 %v2325
  %2462 = vmatprep.subr.bf16.mxu0 %v2324
  %2463 = vmatpush1.bf16.msra.mxu0 %v2323
  %2464 = vmatprep.subr.bf16.mxu0 %v2322
  %2465 = vmatpush1.bf16.msra.mxu0 %v2321
  %2466 = vmatprep.subr.bf16.mxu0 %v2320
  %2467 = vmatpush1.bf16.msra.mxu0 %v2319
  %2468 = vmatprep.subr.bf16.mxu0 %v2318
  %2469 = vmatpush1.bf16.msra.mxu0 %v2317
  %2470 = vmatprep.subr.bf16.mxu0 %v2348
  %2471 = vmatpush2.bf16.msra.mxu0 %v2347
  %2472 = vmatprep.subr.bf16.mxu0 %v2346
  %2473 = vmatpush2.bf16.msra.mxu0 %v2345
  %2474 = vmatprep.subr.bf16.mxu0 %v2344
  %2475 = vmatpush2.bf16.msra.mxu0 %v2343
  %2476 = vmatprep.subr.bf16.mxu0 %v2342
  %2477 = vmatpush2.bf16.msra.mxu0 %v2341
  %2478 = vmatprep.subr.bf16.mxu0 %v2340
  %2479 = vmatpush2.bf16.msra.mxu0 %v2339
  %2480 = vmatprep.subr.bf16.mxu0 %v2338
  %2481 = vmatpush2.bf16.msra.mxu0 %v2337
  %2482 = vmatprep.subr.bf16.mxu0 %v2336
  %2483 = vmatpush2.bf16.msra.mxu0 %v2335
  %2484 = vmatprep.subr.bf16.mxu0 %v2334
  %2485 = vmatpush2.bf16.msra.mxu0 %v2333
  %2486 = vmatprep.mubr.bf16.mxu0 %v2016
  %2487 = vmatmul.mubr.bf16.gmra.mxu0 %v2015
  %v2488 = vpop.f32.mrf.mxu0
  %v2489 = vadd.f32 %v2448, %v2488
  %v2490 = vpop.f32.mrf.mxu0
  %v2491 = vadd.f32 %v2450, %v2490
  %v2492 = vpop.f32.mrf.mxu0
  %v2493 = vpop.f32.mrf.mxu0
  %2494 = vdwg.mxu0
  %v2495 = vld [vmem:[%s7] sm:$0x3]
  %v2497 = vlaneseq
  %v2498 = vshrl.u32 %v2497, 7
  %v2499 = vsub.s32 0, %v2498
  %v2500 = vrot.slane %v2495, %v2499
  %v2501 = vlaneseq
  %v2502 = vshrl.u32 %v2501, 7
  %v2503 = vsub.s32 1, %v2502
  %v2504 = vrot.slane %v2495, %v2503
  %v2507 = vmul.f32 %v2489, %v2500
  %v2508 = vmul.f32 %v2491, %v2504
  %v2509 = vld [vmem:[%s8] sm:$0x3]
  %v2511 = vlaneseq
  %v2512 = vshrl.u32 %v2511, 7
  %v2513 = vsub.s32 0, %v2512
  %v2514 = vrot.slane %v2509, %v2513
  %v2515 = vlaneseq
  %v2516 = vshrl.u32 %v2515, 7
  %v2517 = vsub.s32 1, %v2516
  %v2518 = vrot.slane %v2509, %v2517
  %v2521 = vadd.f32 %v2507, %v2514
  %v2522 = vadd.f32 %v2508, %v2518
  %v2523 = vmax.f32 %v2521, 0.0
  %v2524 = vmax.f32 %v2522, 0.0
  %v2525 = vpack.c.bf16 %v2523, %v2523
  %v2526 = vpack.c.bf16 %v2524, %v2524
  %v2527 = vld [vmem:[%s9] sm:$0xf]
  %v2528 = vld [vmem:[%s9 + $0x4] sm:$0xf]
  %v2529 = vld [vmem:[%s9 + $0x8] sm:$0xf]
  %v2530 = vld [vmem:[%s9 + $0xc] sm:$0xf]
  %v2531 = vld [vmem:[%s9 + $0x10] sm:$0xf]
  %v2532 = vld [vmem:[%s9 + $0x14] sm:$0xf]
  %v2533 = vld [vmem:[%s9 + $0x18] sm:$0xf]
  %v2534 = vld [vmem:[%s9 + $0x1c] sm:$0xf]
  %v2535 = vld [vmem:[%s9 + $0x20] sm:$0xf]
  %v2536 = vld [vmem:[%s9 + $0x24] sm:$0xf]
  %v2537 = vld [vmem:[%s9 + $0x28] sm:$0xf]
  %v2538 = vld [vmem:[%s9 + $0x2c] sm:$0xf]
  %v2539 = vld [vmem:[%s9 + $0x30] sm:$0xf]
  %v2540 = vld [vmem:[%s9 + $0x34] sm:$0xf]
  %v2541 = vld [vmem:[%s9 + $0x38] sm:$0xf]
  %v2542 = vld [vmem:[%s9 + $0x3c] sm:$0xf]
  %v2543 = vld [vmem:[%s9 + $0x40] sm:$0xf]
  %v2544 = vld [vmem:[%s9 + $0x44] sm:$0xf]
  %v2545 = vld [vmem:[%s9 + $0x48] sm:$0xf]
  %v2546 = vld [vmem:[%s9 + $0x4c] sm:$0xf]
  %v2547 = vld [vmem:[%s9 + $0x50] sm:$0xf]
  %v2548 = vld [vmem:[%s9 + $0x54] sm:$0xf]
  %v2549 = vld [vmem:[%s9 + $0x58] sm:$0xf]
  %v2550 = vld [vmem:[%s9 + $0x5c] sm:$0xf]
  %v2551 = vld [vmem:[%s9 + $0x60] sm:$0xf]
  %v2552 = vld [vmem:[%s9 + $0x64] sm:$0xf]
  %v2553 = vld [vmem:[%s9 + $0x68] sm:$0xf]
  %v2554 = vld [vmem:[%s9 + $0x6c] sm:$0xf]
  %v2555 = vld [vmem:[%s9 + $0x70] sm:$0xf]
  %v2556 = vld [vmem:[%s9 + $0x74] sm:$0xf]
  %v2557 = vld [vmem:[%s9 + $0x78] sm:$0xf]
  %v2558 = vld [vmem:[%s9 + $0x7c] sm:$0xf]
  %v2559 = vld [vmem:[%s10] sm:$0x1]
  %v2561 = vlaneseq
  %v2562 = vshrl.u32 %v2561, 7
  %v2563 = vsub.s32 0, %v2562
  %v2564 = vrot.slane %v2559, %v2563
  %v2598 = vunpack.c.l.b16 %v2527
  %v2599 = vunpack.c.l.b16 %v2528
  %v2600 = vunpack.c.l.b16 %v2529
  %v2601 = vunpack.c.l.b16 %v2530
  %v2602 = vunpack.c.l.b16 %v2531
  %v2603 = vunpack.c.l.b16 %v2532
  %v2604 = vunpack.c.l.b16 %v2533
  %v2605 = vunpack.c.l.b16 %v2534
  %v2606 = vunpack.c.l.b16 %v2535
  %v2607 = vunpack.c.l.b16 %v2536
  %v2608 = vunpack.c.l.b16 %v2537
  %v2609 = vunpack.c.l.b16 %v2538
  %v2610 = vunpack.c.l.b16 %v2539
  %v2611 = vunpack.c.l.b16 %v2540
  %v2612 = vunpack.c.l.b16 %v2541
  %v2613 = vunpack.c.l.b16 %v2542
  %v2614 = vunpack.c.l.b16 %v2543
  %v2615 = vunpack.c.l.b16 %v2544
  %v2616 = vunpack.c.l.b16 %v2545
  %v2617 = vunpack.c.l.b16 %v2546
  %v2618 = vunpack.c.l.b16 %v2547
  %v2619 = vunpack.c.l.b16 %v2548
  %v2620 = vunpack.c.l.b16 %v2549
  %v2621 = vunpack.c.l.b16 %v2550
  %v2622 = vunpack.c.l.b16 %v2551
  %v2623 = vunpack.c.l.b16 %v2552
  %v2624 = vunpack.c.l.b16 %v2553
  %v2625 = vunpack.c.l.b16 %v2554
  %v2626 = vunpack.c.l.b16 %v2555
  %v2627 = vunpack.c.l.b16 %v2556
  %v2628 = vunpack.c.l.b16 %v2557
  %v2629 = vunpack.c.l.b16 %v2558
  %v2630 = vpack.c.b16 %v2599, %v2598
  %v2631 = vpack.c.b16 %v2601, %v2600
  %v2632 = vpack.c.b16 %v2603, %v2602
  %v2633 = vpack.c.b16 %v2605, %v2604
  %v2634 = vpack.c.b16 %v2607, %v2606
  %v2635 = vpack.c.b16 %v2609, %v2608
  %v2636 = vpack.c.b16 %v2611, %v2610
  %v2637 = vpack.c.b16 %v2613, %v2612
  %v2638 = vpack.c.b16 %v2615, %v2614
  %v2639 = vpack.c.b16 %v2617, %v2616
  %v2640 = vpack.c.b16 %v2619, %v2618
  %v2641 = vpack.c.b16 %v2621, %v2620
  %v2642 = vpack.c.b16 %v2623, %v2622
  %v2643 = vpack.c.b16 %v2625, %v2624
  %v2644 = vpack.c.b16 %v2627, %v2626
  %v2645 = vpack.c.b16 %v2629, %v2628
  %2662 = vmatprep.subr.bf16.mxu0 0
  %2663 = vmatpush1.bf16.msra.mxu0 %v2637
  %2664 = vmatprep.subr.bf16.mxu0 0
  %2665 = vmatpush1.bf16.msra.mxu0 %v2636
  %2666 = vmatprep.subr.bf16.mxu0 0
  %2667 = vmatpush1.bf16.msra.mxu0 %v2635
  %2668 = vmatprep.subr.bf16.mxu0 0
  %2669 = vmatpush1.bf16.msra.mxu0 %v2634
  %2670 = vmatprep.subr.bf16.mxu0 0
  %2671 = vmatpush1.bf16.msra.mxu0 %v2633
  %2672 = vmatprep.subr.bf16.mxu0 0
  %2673 = vmatpush1.bf16.msra.mxu0 %v2632
  %2674 = vmatprep.subr.bf16.mxu0 0
  %2675 = vmatpush1.bf16.msra.mxu0 %v2631
  %2676 = vmatprep.subr.bf16.mxu0 0
  %2677 = vmatpush1.bf16.msra.mxu0 %v2630
  %2678 = vmatprep.subr.bf16.mxu0 0
  %2679 = vmatpush2.bf16.msra.mxu0 %v2645
  %2680 = vmatprep.subr.bf16.mxu0 0
  %2681 = vmatpush2.bf16.msra.mxu0 %v2644
  %2682 = vmatprep.subr.bf16.mxu0 0
  %2683 = vmatpush2.bf16.msra.mxu0 %v2643
  %2684 = vmatprep.subr.bf16.mxu0 0
  %2685 = vmatpush2.bf16.msra.mxu0 %v2642
  %2686 = vmatprep.subr.bf16.mxu0 0
  %2687 = vmatpush2.bf16.msra.mxu0 %v2641
  %2688 = vmatprep.subr.bf16.mxu0 0
  %2689 = vmatpush2.bf16.msra.mxu0 %v2640
  %2690 = vmatprep.subr.bf16.mxu0 0
  %2691 = vmatpush2.bf16.msra.mxu0 %v2639
  %2692 = vmatprep.subr.bf16.mxu0 0
  %2693 = vmatpush2.bf16.msra.mxu0 %v2638
  %2694 = vmatprep.mubr.bf16.mxu0 %v2526
  %2695 = vmatmul.mubr.bf16.gmra.mxu0 %v2525
  %v2696 = vpop.f32.mrf.mxu0
  %v2697 = vadd.f32 %v2564, %v2696
  %v2698 = vpop.f32.mrf.mxu0
  %v2699 = vpop.f32.mrf.mxu0
  %v2700 = vpop.f32.mrf.mxu0
  %2701 = vdwg.mxu0
  %2702 = vmax.xlane.f32.xlu0 %v2697
  %v2703 = vpop.xlane.xlu0 %2702
  %v2704 = vsub.f32 %v2697, %v2703
  %v2705 = vmul.f32 %v2704, 1.442695
  %v2706 = vpow.pop %v2705
  %2707 = vadd.xlane.f32.xlu0 %v2706
  %v2708 = vpop.xlane.xlu0 %2707
  %v2709 = vlog2.pop %v2708
  %v2710 = vmul.f32 %v2709, 0.6931472
  %v2711 = vadd.f32 %v2710, %v2703
  %v2712 = vsub.f32 %v2697, %v2711
  %2713 = vst [vmem:[%s11] sm:$0xff] %v2712
  // Predicated region
  $region46: #{get_model_forward.7} parent=0 // pred_check
    _
  $region47: #{get_model_forward.7} parent=0 // pred_check_branch
    %2715 = sbr.rel (0) target = $region49
  $region48: #{get_model_forward.7} parent=0 // pred_region
    _
  $region49: #{get_model_forward.7} parent=0 // pred_fallthru
    _
  // Predicated region
  $region50: #{get_model_forward.7} parent=0 // pred_check
    _
  $region51: #{get_model_forward.7} parent=0 // pred_check_branch
    %2717 = sbr.rel (0) target = $region53
  $region52: #{get_model_forward.7} parent=0 // pred_region
    _
  $region53: #{get_model_forward.7} parent=0 // pred_fallthru
    _

</llo_original>
